<compile_context>
chip_gen: v5e
topology: v5e:2x2
jax: 0.10.0
libtpu: 0.0.40
codegen_flags: <defaults>
</compile_context>

<pallas_src>
import functools

import jax
import jax.numpy as jnp
from jax.experimental import pallas as pl
from jax.experimental.pallas import tpu as pltpu


def _round_up(x, m):
    return (x + m - 1) // m * m


def _cdiv(a, b):
    return -(-a // b)


# ---------------------------------------------------------------------------
# Kernel body: one edge tile through the whole MLP (concat-free layer 1).
# ---------------------------------------------------------------------------
def _edge_mlp_kernel(src_ref, dst_ref, edge_ref,
                     w1s_ref, w1d_ref, w1e_ref, b1_ref,
                     *rest, n_mid):
    """rest = (wmid_ref, bmid_ref, wout_ref, bout_ref, out_ref) if n_mid > 0
              (wout_ref, bout_ref, out_ref)                     otherwise"""
    if n_mid > 0:
        wmid_ref, bmid_ref, wout_ref, bout_ref, out_ref = rest
    else:
        wout_ref, bout_ref, out_ref = rest
        wmid_ref = bmid_ref = None

    f32 = jnp.float32
    cdt = w1s_ref.dtype  # compute dtype for MXU operands (e.g. bf16)

    # ---- Layer 1: split-weight matmuls (no concat), f32 accumulation on the MXU.
    acc = jnp.dot(src_ref[...], w1s_ref[...], preferred_element_type=f32)
    acc = acc + jnp.dot(dst_ref[...], w1d_ref[...], preferred_element_type=f32)
    acc = acc + jnp.dot(edge_ref[...], w1e_ref[...], preferred_element_type=f32)
    acc = acc + b1_ref[...].astype(f32)
    h = jnp.maximum(acc, 0.0).astype(cdt)  # ReLU on VPU; single narrow cast

    # ---- Hidden Linear + ReLU layers (statically unrolled; n_mid = mlp_layers - 2).
    for i in range(n_mid):
        acc = jnp.dot(h, wmid_ref[i], preferred_element_type=f32)
        acc = acc + bmid_ref[i].astype(f32)
        h = jnp.maximum(acc, 0.0).astype(cdt)

    # ---- Output Linear (no activation); single cast in the epilogue.
    out = jnp.dot(h, wout_ref[...], preferred_element_type=f32)
    out = out + bout_ref[...].astype(f32)
    out_ref[...] = out.astype(out_ref.dtype)


# ---------------------------------------------------------------------------
# One-time weight packing (hoisted out of the per-call path).
# ---------------------------------------------------------------------------
def pack_edge_model_params(params, *, dtype=None):
    """Split W1 row-wise, zero-pad output-feature dims to multiples of 128
    (lane-dense MXU/stores) and cast to the compute dtype.  Call once."""
    w1, b1 = params["w1"], params["b1"]              # (3H, Hh), (Hh,)
    w_mid, b_mid = params["w_mid"], params["b_mid"]  # (n_mid, Hh, Hh), (n_mid, Hh)
    w_out, b_out = params["w_out"], params["b_out"]  # (Hh, Ho), (Ho,)

    three_h, Hh = w1.shape
    assert three_h % 3 == 0
    H = three_h // 3
    n_mid = int(w_mid.shape[0])
    Ho = int(w_out.shape[1])
    if dtype is None:
        dtype = w1.dtype

    Hhp = _round_up(Hh, 128)
    Hop = _round_up(Ho, 128)

    def padc(a, cols):  # pad trailing (output-feature) columns with zeros
        return jnp.pad(a, ((0, 0), (0, cols - a.shape[1])))

    packed = dict(
        w1s=padc(w1[0 * H:1 * H], Hhp).astype(dtype),
        w1d=padc(w1[1 * H:2 * H], Hhp).astype(dtype),
        w1e=padc(w1[2 * H:3 * H], Hhp).astype(dtype),
        b1=jnp.pad(b1, (0, Hhp - Hh)).reshape(1, Hhp).astype(dtype),
        w_out=jnp.pad(w_out, ((0, Hhp - Hh), (0, Hop - Ho))).astype(dtype),
        b_out=jnp.pad(b_out, (0, Hop - Ho)).reshape(1, Hop).astype(dtype),
    )
    if n_mid > 0:
        packed["w_mid"] = jnp.pad(
            w_mid, ((0, 0), (0, Hhp - Hh), (0, Hhp - Hh))).astype(dtype)
        packed["b_mid"] = jnp.pad(
            b_mid, ((0, 0), (0, Hhp - Hh))).reshape(n_mid, 1, Hhp).astype(dtype)

    meta = dict(H=H, Hh=Hh, Ho=Ho, Hhp=Hhp, Hop=Hop, n_mid=n_mid)
    return packed, meta


def _choose_tile_e(E, max_tile_e):
    """Edge tile: multiple of 8, near-zero padding, and >=2 grid steps when
    possible so v7x megacore shards the 'parallel' edge axis across both TCs."""
    max_tile_e = max(8, _round_up(min(max_tile_e, E), 8))
    n_steps = max(_cdiv(E, max_tile_e), 2 if E > 8 else 1)
    return min(_round_up(_cdiv(E, n_steps), 8), max_tile_e)


# ---------------------------------------------------------------------------
# Forward pass.
# ---------------------------------------------------------------------------
def edge_model_forward(src, dst, edge_attr, u, batch, packed, meta, *,
                       max_tile_e=512):
    """Pallas forward for EdgeModel. u / batch are unused (API parity with PyTorch).
    `packed, meta` come from pack_edge_model_params (call that once, not per step)."""
    del u, batch  # EdgeModel.forward ignores them.

    E, H = src.shape
    assert dst.shape == (E, H) and edge_attr.shape == (E, H)
    assert H == meta["H"]

    Hhp, Hop, Ho, n_mid = meta["Hhp"], meta["Hop"], meta["Ho"], meta["n_mid"]
    dtype = src.dtype

    tile_e = _choose_tile_e(E, max_tile_e)
    grid = (_cdiv(E, tile_e),)  # ragged last tile: no jnp.pad of the edge streams

    edge_map = lambda i: (i, 0)   # walks the edge tiles
    fix2 = lambda i: (0, 0)       # weights/biases stay resident in VMEM
    fix3 = lambda i: (0, 0, 0)

    w_arrays = [packed["w1s"], packed["w1d"], packed["w1e"], packed["b1"]]
    w_shapes = [(H, Hhp), (H, Hhp), (H, Hhp), (1, Hhp)]
    w_maps = [fix2, fix2, fix2, fix2]
    if n_mid > 0:
        w_arrays += [packed["w_mid"], packed["b_mid"]]
        w_shapes += [(n_mid, Hhp, Hhp), (n_mid, 1, Hhp)]
        w_maps += [fix3, fix3]
    w_arrays += [packed["w_out"], packed["b_out"]]
    w_shapes += [(Hhp, Hop), (1, Hop)]
    w_maps += [fix2, fix2]

    # VMEM budget sized from the buffers; capped at 64 MiB (v7x physical VMEM).
    isz = jnp.dtype(dtype).itemsize
    w_bytes = sum(int(a.size) * a.dtype.itemsize for a in w_arrays)

    def _vmem_limit(weight_bufs):
        need = (2 * 3 * tile_e * H * isz            # double-buffered edge inputs
                + 2 * tile_e * Hop * isz            # double-buffered output tile
                + weight_bufs * w_bytes             # resident weights/biases
                + 3 * tile_e * max(Hhp, Hop) * 4)   # f32 intermediates headroom
        return int(min(max(1.5 * need, 32 * 2**20), 64 * 2**20))

    def run(single_buffer_weights):
        if single_buffer_weights:
            # Grid-invariant blocks: single-buffer them (halves resident weight VMEM).
            w_specs = [pl.BlockSpec(s, m, pipeline_mode=pl.Buffered(1))
                       for s, m in zip(w_shapes, w_maps)]
            wbufs = 1
        else:
            w_specs = [pl.BlockSpec(s, m) for s, m in zip(w_shapes, w_maps)]
            wbufs = 2
        in_specs = [pl.BlockSpec((tile_e, H), edge_map)] * 3 + w_specs
        return pl.pallas_call(
            functools.partial(_edge_mlp_kernel, n_mid=n_mid),
            out_shape=jax.ShapeDtypeStruct((E, Hop), dtype),
            grid=grid,
            in_specs=in_specs,
            out_specs=pl.BlockSpec((tile_e, Hop), edge_map),
            compiler_params=pltpu.CompilerParams(
                dimension_semantics=("parallel",),
                vmem_limit_bytes=_vmem_limit(wbufs)),
        )(src, dst, edge_attr, *w_arrays)

    try:
        out_p = run(True)
    except Exception:
        # Fallback if single-buffered (Buffered(1)) constant blocks are unsupported.
        out_p = run(False)

    return out_p if Hop == Ho else out_p[:, :Ho]


# ---------------------------------------------------------------------------
# Pure-JAX f32 reference matching EdgeModel.forward.
# ---------------------------------------------------------------------------
def _reference(src, dst, edge_attr, params):
    x = jnp.concatenate([src, dst, edge_attr], axis=1).astype(jnp.float32)
    h = jnp.maximum(x @ params["w1"].astype(jnp.float32)
                    + params["b1"].astype(jnp.float32), 0.0)
    for i in range(params["w_mid"].shape[0]):
        h = jnp.maximum(h @ params["w_mid"][i].astype(jnp.float32)
                        + params["b_mid"][i].astype(jnp.float32), 0.0)
    return h @ params["w_out"].astype(jnp.float32) + params["b_out"].astype(jnp.float32)


if __name__ == "__main__":
    key = jax.random.PRNGKey(0)
    E, H = 300, 128            # hidden_channels = 128
    mlp_layers = 3             # Linear(3H,H)->ReLU->Linear(H,H)->ReLU->Linear(H,H)
    n_mid = mlp_layers - 2
    num_graphs = 2
    dt = jnp.bfloat16

    ks = jax.random.split(key, 16)
    src = jax.random.normal(ks[0], (E, H), dtype=jnp.float32).astype(dt)
    dst = jax.random.normal(ks[1], (E, H), dtype=jnp.float32).astype(dt)
    edge_attr = jax.random.normal(ks[2], (E, H), dtype=jnp.float32).astype(dt)
    u = jax.random.normal(ks[3], (num_graphs, H), dtype=jnp.float32).astype(dt)  # unused
    batch = jnp.zeros((E,), dtype=jnp.int32)                                     # unused

    def init_lin(k, fan_in, fan_out):
        kw, kb = jax.random.split(k)
        lim = 1.0 / (fan_in ** 0.5)
        w = jax.random.uniform(kw, (fan_in, fan_out), minval=-lim, maxval=lim,
                               dtype=jnp.float32)
        b = jax.random.uniform(kb, (fan_out,), minval=-lim, maxval=lim,
                               dtype=jnp.float32)
        return w.astype(dt), b.astype(dt)

    w1, b1 = init_lin(ks[4], 3 * H, H)
    wm_list, bm_list = [], []
    for i in range(n_mid):
        w, b = init_lin(ks[5 + i], H, H)
        wm_list.append(w)
        bm_list.append(b)
    w_mid = jnp.stack(wm_list) if n_mid > 0 else jnp.zeros((0, H, H), dt)
    b_mid = jnp.stack(bm_list) if n_mid > 0 else jnp.zeros((0, H), dt)
    w_out, b_out = init_lin(ks[10], H, H)
    params = dict(w1=w1, b1=b1, w_mid=w_mid, b_mid=b_mid, w_out=w_out, b_out=b_out)

    # One-time weight packing (kept off the per-call path).
    packed, meta = pack_edge_model_params(params, dtype=dt)

    out = edge_model_forward(src, dst, edge_attr, u, batch, packed, meta)
    out = jax.block_until_ready(out)

    ref = _reference(src, dst, edge_attr, params)
    assert out.shape == (E, H), out.shape
    max_err = float(jnp.max(jnp.abs(out.astype(jnp.float32) - ref)))
    assert max_err < 0.1, f"max abs error too large: {max_err}"
    print("KERNEL_OK")
</pallas_src>

<mosaic_0001>
module attributes {stable_mosaic.version = 11 : i64} {
  func.func @_edge_mlp_kernel(%arg0: i32, %arg1: memref<152x128xbf16, #tpu.memory_space<vmem>>, %arg2: memref<152x128xbf16, #tpu.memory_space<vmem>>, %arg3: memref<152x128xbf16, #tpu.memory_space<vmem>>, %arg4: memref<128x128xbf16, #tpu.memory_space<vmem>>, %arg5: memref<128x128xbf16, #tpu.memory_space<vmem>>, %arg6: memref<128x128xbf16, #tpu.memory_space<vmem>>, %arg7: memref<1x128xbf16, #tpu.memory_space<vmem>>, %arg8: memref<1x128x128xbf16, #tpu.memory_space<vmem>>, %arg9: memref<1x1x128xbf16, #tpu.memory_space<vmem>>, %arg10: memref<128x128xbf16, #tpu.memory_space<vmem>>, %arg11: memref<1x128xbf16, #tpu.memory_space<vmem>>, %arg12: memref<152x128xbf16, #tpu.memory_space<vmem>>) attributes {dimension_semantics = [#tpu.dimension_semantics<parallel>], iteration_bounds = array<i64: 2>, scalar_prefetch = 0 : i64, scratch_operands = 0 : i64, tpu.core_type = #tpu.core_type<tc>, window_params = [{transform_indices = @transform_0, window_bounds = array<i64: 152, 128>}, {transform_indices = @transform_1, window_bounds = array<i64: 152, 128>}, {transform_indices = @transform_2, window_bounds = array<i64: 152, 128>}, {pipeline_mode = #tpu.pipeline_mode<synchronous>, transform_indices = @transform_3, window_bounds = array<i64: 128, 128>}, {pipeline_mode = #tpu.pipeline_mode<synchronous>, transform_indices = @transform_4, window_bounds = array<i64: 128, 128>}, {pipeline_mode = #tpu.pipeline_mode<synchronous>, transform_indices = @transform_5, window_bounds = array<i64: 128, 128>}, {pipeline_mode = #tpu.pipeline_mode<synchronous>, transform_indices = @transform_6, window_bounds = array<i64: 1, 128>}, {pipeline_mode = #tpu.pipeline_mode<synchronous>, transform_indices = @transform_7, window_bounds = array<i64: 1, 128, 128>}, {pipeline_mode = #tpu.pipeline_mode<synchronous>, transform_indices = @transform_8, window_bounds = array<i64: 1, 1, 128>}, {pipeline_mode = #tpu.pipeline_mode<synchronous>, transform_indices = @transform_9, window_bounds = array<i64: 128, 128>}, {pipeline_mode = #tpu.pipeline_mode<synchronous>, transform_indices = @transform_10, window_bounds = array<i64: 1, 128>}, {transform_indices = @transform_11, window_bounds = array<i64: 152, 128>}]} {
    %c0 = arith.constant 0 : index
    %c0_0 = arith.constant 0 : index
    %0 = vector.load %arg1[%c0, %c0_0] : memref<152x128xbf16, #tpu.memory_space<vmem>>, vector<152x128xbf16>
    %c0_1 = arith.constant 0 : index
    %c0_2 = arith.constant 0 : index
    %1 = vector.load %arg4[%c0_1, %c0_2] : memref<128x128xbf16, #tpu.memory_space<vmem>>, vector<128x128xbf16>
    %cst = arith.constant dense<0.000000e+00> : vector<152x128xf32>
    %2 = tpu.matmul %0, %1, %cst {dimension_numbers = #tpu.dot_dimension_numbers<[1], [0], [0], [1], [0, 0, 1, 1], [], []>} : vector<152x128xbf16>, vector<128x128xbf16>, vector<152x128xf32> -> vector<152x128xf32>
    %c0_3 = arith.constant 0 : index
    %c0_4 = arith.constant 0 : index
    %3 = vector.load %arg2[%c0_3, %c0_4] : memref<152x128xbf16, #tpu.memory_space<vmem>>, vector<152x128xbf16>
    %c0_5 = arith.constant 0 : index
    %c0_6 = arith.constant 0 : index
    %4 = vector.load %arg5[%c0_5, %c0_6] : memref<128x128xbf16, #tpu.memory_space<vmem>>, vector<128x128xbf16>
    %cst_7 = arith.constant dense<0.000000e+00> : vector<152x128xf32>
    %5 = tpu.matmul %3, %4, %cst_7 {dimension_numbers = #tpu.dot_dimension_numbers<[1], [0], [0], [1], [0, 0, 1, 1], [], []>} : vector<152x128xbf16>, vector<128x128xbf16>, vector<152x128xf32> -> vector<152x128xf32>
    %6 = arith.addf %2, %5 : vector<152x128xf32>
    %c0_8 = arith.constant 0 : index
    %c0_9 = arith.constant 0 : index
    %7 = vector.load %arg3[%c0_8, %c0_9] : memref<152x128xbf16, #tpu.memory_space<vmem>>, vector<152x128xbf16>
    %c0_10 = arith.constant 0 : index
    %c0_11 = arith.constant 0 : index
    %8 = vector.load %arg6[%c0_10, %c0_11] : memref<128x128xbf16, #tpu.memory_space<vmem>>, vector<128x128xbf16>
    %cst_12 = arith.constant dense<0.000000e+00> : vector<152x128xf32>
    %9 = tpu.matmul %7, %8, %cst_12 {dimension_numbers = #tpu.dot_dimension_numbers<[1], [0], [0], [1], [0, 0, 1, 1], [], []>} : vector<152x128xbf16>, vector<128x128xbf16>, vector<152x128xf32> -> vector<152x128xf32>
    %10 = arith.addf %6, %9 : vector<152x128xf32>
    %c0_13 = arith.constant 0 : index
    %c0_14 = arith.constant 0 : index
    %11 = vector.load %arg7[%c0_13, %c0_14] : memref<1x128xbf16, #tpu.memory_space<vmem>>, vector<1x128xbf16>
    %12 = arith.extf %11 : vector<1x128xbf16> to vector<1x128xf32>
    %13 = vector.broadcast %12 : vector<1x128xf32> to vector<152x128xf32>
    %14 = arith.addf %10, %13 : vector<152x128xf32>
    %cst_15 = arith.constant 0.000000e+00 : f32
    %15 = vector.broadcast %cst_15 : f32 to vector<152x128xf32>
    %16 = arith.maximumf %14, %15 : vector<152x128xf32>
    %17 = arith.truncf %16 : vector<152x128xf32> to vector<152x128xbf16>
    %c0_16 = arith.constant 0 : index
    %c0_17 = arith.constant 0 : index
    %c0_18 = arith.constant 0 : index
    %18 = vector.load %arg8[%c0_16, %c0_17, %c0_18] : memref<1x128x128xbf16, #tpu.memory_space<vmem>>, vector<1x128x128xbf16>
    %19 = vector.shape_cast %18 : vector<1x128x128xbf16> to vector<128x128xbf16>
    %cst_19 = arith.constant dense<0.000000e+00> : vector<152x128xf32>
    %20 = tpu.matmul %17, %19, %cst_19 {dimension_numbers = #tpu.dot_dimension_numbers<[1], [0], [0], [1], [0, 0, 1, 1], [], []>} : vector<152x128xbf16>, vector<128x128xbf16>, vector<152x128xf32> -> vector<152x128xf32>
    %c0_20 = arith.constant 0 : index
    %c0_21 = arith.constant 0 : index
    %c0_22 = arith.constant 0 : index
    %21 = vector.load %arg9[%c0_20, %c0_21, %c0_22] : memref<1x1x128xbf16, #tpu.memory_space<vmem>>, vector<1x1x128xbf16>
    %22 = vector.shape_cast %21 : vector<1x1x128xbf16> to vector<1x128xbf16>
    %23 = arith.extf %22 : vector<1x128xbf16> to vector<1x128xf32>
    %24 = vector.broadcast %23 : vector<1x128xf32> to vector<152x128xf32>
    %25 = arith.addf %20, %24 : vector<152x128xf32>
    %cst_23 = arith.constant 0.000000e+00 : f32
    %26 = vector.broadcast %cst_23 : f32 to vector<152x128xf32>
    %27 = arith.maximumf %25, %26 : vector<152x128xf32>
    %28 = arith.truncf %27 : vector<152x128xf32> to vector<152x128xbf16>
    %c0_24 = arith.constant 0 : index
    %c0_25 = arith.constant 0 : index
    %29 = vector.load %arg10[%c0_24, %c0_25] : memref<128x128xbf16, #tpu.memory_space<vmem>>, vector<128x128xbf16>
    %cst_26 = arith.constant dense<0.000000e+00> : vector<152x128xf32>
    %30 = tpu.matmul %28, %29, %cst_26 {dimension_numbers = #tpu.dot_dimension_numbers<[1], [0], [0], [1], [0, 0, 1, 1], [], []>} : vector<152x128xbf16>, vector<128x128xbf16>, vector<152x128xf32> -> vector<152x128xf32>
    %c0_27 = arith.constant 0 : index
    %c0_28 = arith.constant 0 : index
    %31 = vector.load %arg11[%c0_27, %c0_28] : memref<1x128xbf16, #tpu.memory_space<vmem>>, vector<1x128xbf16>
    %32 = arith.extf %31 : vector<1x128xbf16> to vector<1x128xf32>
    %33 = vector.broadcast %32 : vector<1x128xf32> to vector<152x128xf32>
    %34 = arith.addf %30, %33 : vector<152x128xf32>
    %35 = arith.truncf %34 : vector<152x128xf32> to vector<152x128xbf16>
    %c0_29 = arith.constant 0 : index
    %c0_30 = arith.constant 0 : index
    %36 = vector.load %arg12[%c0_29, %c0_30] : memref<152x128xbf16, #tpu.memory_space<vmem>>, vector<152x128xbf16>
    tpu.vector_store %arg12[%c0_29, %c0_30], %35 {strides = array<i32>} : memref<152x128xbf16, #tpu.memory_space<vmem>>, vector<152x128xbf16>,
    return
  }
  func.func @transform_0(%arg0: i32) -> (i32, i32) {
    %c0_i32 = arith.constant 0 : i32
    %c0_i32_0 = arith.constant 0 : i32
    return %arg0, %c0_i32 : i32, i32
  }
  func.func @transform_1(%arg0: i32) -> (i32, i32) {
    %c0_i32 = arith.constant 0 : i32
    %c0_i32_0 = arith.constant 0 : i32
    return %arg0, %c0_i32 : i32, i32
  }
  func.func @transform_2(%arg0: i32) -> (i32, i32) {
    %c0_i32 = arith.constant 0 : i32
    %c0_i32_0 = arith.constant 0 : i32
    return %arg0, %c0_i32 : i32, i32
  }
  func.func @transform_3(%arg0: i32) -> (i32, i32) {
    %c0_i32 = arith.constant 0 : i32
    %c0_i32_0 = arith.constant 0 : i32
    %c0_i32_1 = arith.constant 0 : i32
    return %c0_i32, %c0_i32_0 : i32, i32
  }
  func.func @transform_4(%arg0: i32) -> (i32, i32) {
    %c0_i32 = arith.constant 0 : i32
    %c0_i32_0 = arith.constant 0 : i32
    %c0_i32_1 = arith.constant 0 : i32
    return %c0_i32, %c0_i32_0 : i32, i32
  }
  func.func @transform_5(%arg0: i32) -> (i32, i32) {
    %c0_i32 = arith.constant 0 : i32
    %c0_i32_0 = arith.constant 0 : i32
    %c0_i32_1 = arith.constant 0 : i32
    return %c0_i32, %c0_i32_0 : i32, i32
  }
  func.func @transform_6(%arg0: i32) -> (i32, i32) {
    %c0_i32 = arith.constant 0 : i32
    %c0_i32_0 = arith.constant 0 : i32
    %c0_i32_1 = arith.constant 0 : i32
    return %c0_i32, %c0_i32_0 : i32, i32
  }
  func.func @transform_7(%arg0: i32) -> (i32, i32, i32) {
    %c0_i32 = arith.constant 0 : i32
    %c0_i32_0 = arith.constant 0 : i32
    %c0_i32_1 = arith.constant 0 : i32
    %c0_i32_2 = arith.constant 0 : i32
    return %c0_i32, %c0_i32_0, %c0_i32_1 : i32, i32, i32
  }
  func.func @transform_8(%arg0: i32) -> (i32, i32, i32) {
    %c0_i32 = arith.constant 0 : i32
    %c0_i32_0 = arith.constant 0 : i32
    %c0_i32_1 = arith.constant 0 : i32
    %c0_i32_2 = arith.constant 0 : i32
    return %c0_i32, %c0_i32_0, %c0_i32_1 : i32, i32, i32
  }
  func.func @transform_9(%arg0: i32) -> (i32, i32) {
    %c0_i32 = arith.constant 0 : i32
    %c0_i32_0 = arith.constant 0 : i32
    %c0_i32_1 = arith.constant 0 : i32
    return %c0_i32, %c0_i32_0 : i32, i32
  }
  func.func @transform_10(%arg0: i32) -> (i32, i32) {
    %c0_i32 = arith.constant 0 : i32
    %c0_i32_0 = arith.constant 0 : i32
    %c0_i32_1 = arith.constant 0 : i32
    return %c0_i32, %c0_i32_0 : i32, i32
  }
  func.func @transform_11(%arg0: i32) -> (i32, i32) {
    %c0_i32 = arith.constant 0 : i32
    %c0_i32_0 = arith.constant 0 : i32
    return %arg0, %c0_i32 : i32, i32
  }
}

module attributes {stable_mosaic.version = 11 : i64} {
  func.func @_edge_mlp_kernel(%arg0: i32, %arg1: memref<152x128xbf16, #tpu.memory_space<vmem>>, %arg2: memref<152x128xbf16, #tpu.memory_space<vmem>>, %arg3: memref<152x128xbf16, #tpu.memory_space<vmem>>, %arg4: memref<128x128xbf16, #tpu.memory_space<vmem>>, %arg5: memref<128x128xbf16, #tpu.memory_space<vmem>>, %arg6: memref<128x128xbf16, #tpu.memory_space<vmem>>, %arg7: memref<1x128xbf16, #tpu.memory_space<vmem>>, %arg8: memref<1x128x128xbf16, #tpu.memory_space<vmem>>, %arg9: memref<1x1x128xbf16, #tpu.memory_space<vmem>>, %arg10: memref<128x128xbf16, #tpu.memory_space<vmem>>, %arg11: memref<1x128xbf16, #tpu.memory_space<vmem>>, %arg12: memref<152x128xbf16, #tpu.memory_space<vmem>>) attributes {dimension_semantics = [#tpu.dimension_semantics<parallel>], iteration_bounds = array<i64: 2>, scalar_prefetch = 0 : i64, scratch_operands = 0 : i64, tpu.core_type = #tpu.core_type<tc>, window_params = [{transform_indices = @transform_0, window_bounds = array<i64: 152, 128>}, {transform_indices = @transform_1, window_bounds = array<i64: 152, 128>}, {transform_indices = @transform_2, window_bounds = array<i64: 152, 128>}, {pipeline_mode = #tpu.pipeline_mode<synchronous>, transform_indices = @transform_3, window_bounds = array<i64: 128, 128>}, {pipeline_mode = #tpu.pipeline_mode<synchronous>, transform_indices = @transform_4, window_bounds = array<i64: 128, 128>}, {pipeline_mode = #tpu.pipeline_mode<synchronous>, transform_indices = @transform_5, window_bounds = array<i64: 128, 128>}, {pipeline_mode = #tpu.pipeline_mode<synchronous>, transform_indices = @transform_6, window_bounds = array<i64: 1, 128>}, {pipeline_mode = #tpu.pipeline_mode<synchronous>, transform_indices = @transform_7, window_bounds = array<i64: 1, 128, 128>}, {pipeline_mode = #tpu.pipeline_mode<synchronous>, transform_indices = @transform_8, window_bounds = array<i64: 1, 1, 128>}, {pipeline_mode = #tpu.pipeline_mode<synchronous>, transform_indices = @transform_9, window_bounds = array<i64: 128, 128>}, {pipeline_mode = #tpu.pipeline_mode<synchronous>, transform_indices = @transform_10, window_bounds = array<i64: 1, 128>}, {transform_indices = @transform_11, window_bounds = array<i64: 152, 128>}]} {
    %c0 = arith.constant 0 : index
    %c0_0 = arith.constant 0 : index
    %0 = vector.load %arg1[%c0, %c0_0] : memref<152x128xbf16, #tpu.memory_space<vmem>>, vector<152x128xbf16>
    %c0_1 = arith.constant 0 : index
    %c0_2 = arith.constant 0 : index
    %1 = vector.load %arg4[%c0_1, %c0_2] : memref<128x128xbf16, #tpu.memory_space<vmem>>, vector<128x128xbf16>
    %cst = arith.constant dense<0.000000e+00> : vector<152x128xf32>
    %2 = tpu.matmul %0, %1, %cst {dimension_numbers = #tpu.dot_dimension_numbers<[1], [0], [0], [1], [0, 0, 1, 1], [], []>} : vector<152x128xbf16>, vector<128x128xbf16>, vector<152x128xf32> -> vector<152x128xf32>
    %c0_3 = arith.constant 0 : index
    %c0_4 = arith.constant 0 : index
    %3 = vector.load %arg2[%c0_3, %c0_4] : memref<152x128xbf16, #tpu.memory_space<vmem>>, vector<152x128xbf16>
    %c0_5 = arith.constant 0 : index
    %c0_6 = arith.constant 0 : index
    %4 = vector.load %arg5[%c0_5, %c0_6] : memref<128x128xbf16, #tpu.memory_space<vmem>>, vector<128x128xbf16>
    %cst_7 = arith.constant dense<0.000000e+00> : vector<152x128xf32>
    %5 = tpu.matmul %3, %4, %cst_7 {dimension_numbers = #tpu.dot_dimension_numbers<[1], [0], [0], [1], [0, 0, 1, 1], [], []>} : vector<152x128xbf16>, vector<128x128xbf16>, vector<152x128xf32> -> vector<152x128xf32>
    %6 = arith.addf %2, %5 : vector<152x128xf32>
    %c0_8 = arith.constant 0 : index
    %c0_9 = arith.constant 0 : index
    %7 = vector.load %arg3[%c0_8, %c0_9] : memref<152x128xbf16, #tpu.memory_space<vmem>>, vector<152x128xbf16>
    %c0_10 = arith.constant 0 : index
    %c0_11 = arith.constant 0 : index
    %8 = vector.load %arg6[%c0_10, %c0_11] : memref<128x128xbf16, #tpu.memory_space<vmem>>, vector<128x128xbf16>
    %cst_12 = arith.constant dense<0.000000e+00> : vector<152x128xf32>
    %9 = tpu.matmul %7, %8, %cst_12 {dimension_numbers = #tpu.dot_dimension_numbers<[1], [0], [0], [1], [0, 0, 1, 1], [], []>} : vector<152x128xbf16>, vector<128x128xbf16>, vector<152x128xf32> -> vector<152x128xf32>
    %10 = arith.addf %6, %9 : vector<152x128xf32>
    %c0_13 = arith.constant 0 : index
    %c0_14 = arith.constant 0 : index
    %11 = vector.load %arg7[%c0_13, %c0_14] : memref<1x128xbf16, #tpu.memory_space<vmem>>, vector<1x128xbf16>
    %12 = arith.extf %11 : vector<1x128xbf16> to vector<1x128xf32>
    %13 = vector.broadcast %12 : vector<1x128xf32> to vector<152x128xf32>
    %14 = arith.addf %10, %13 : vector<152x128xf32>
    %cst_15 = arith.constant 0.000000e+00 : f32
    %15 = vector.broadcast %cst_15 : f32 to vector<152x128xf32>
    %16 = arith.maximumf %14, %15 : vector<152x128xf32>
    %17 = arith.truncf %16 : vector<152x128xf32> to vector<152x128xbf16>
    %c0_16 = arith.constant 0 : index
    %c0_17 = arith.constant 0 : index
    %c0_18 = arith.constant 0 : index
    %18 = vector.load %arg8[%c0_16, %c0_17, %c0_18] : memref<1x128x128xbf16, #tpu.memory_space<vmem>>, vector<1x128x128xbf16>
    %19 = vector.shape_cast %18 : vector<1x128x128xbf16> to vector<128x128xbf16>
    %cst_19 = arith.constant dense<0.000000e+00> : vector<152x128xf32>
    %20 = tpu.matmul %17, %19, %cst_19 {dimension_numbers = #tpu.dot_dimension_numbers<[1], [0], [0], [1], [0, 0, 1, 1], [], []>} : vector<152x128xbf16>, vector<128x128xbf16>, vector<152x128xf32> -> vector<152x128xf32>
    %c0_20 = arith.constant 0 : index
    %c0_21 = arith.constant 0 : index
    %c0_22 = arith.constant 0 : index
    %21 = vector.load %arg9[%c0_20, %c0_21, %c0_22] : memref<1x1x128xbf16, #tpu.memory_space<vmem>>, vector<1x1x128xbf16>
    %22 = vector.shape_cast %21 : vector<1x1x128xbf16> to vector<1x128xbf16>
    %23 = arith.extf %22 : vector<1x128xbf16> to vector<1x128xf32>
    %24 = vector.broadcast %23 : vector<1x128xf32> to vector<152x128xf32>
    %25 = arith.addf %20, %24 : vector<152x128xf32>
    %cst_23 = arith.constant 0.000000e+00 : f32
    %26 = vector.broadcast %cst_23 : f32 to vector<152x128xf32>
    %27 = arith.maximumf %25, %26 : vector<152x128xf32>
    %28 = arith.truncf %27 : vector<152x128xf32> to vector<152x128xbf16>
    %c0_24 = arith.constant 0 : index
    %c0_25 = arith.constant 0 : index
    %29 = vector.load %arg10[%c0_24, %c0_25] : memref<128x128xbf16, #tpu.memory_space<vmem>>, vector<128x128xbf16>
    %cst_26 = arith.constant dense<0.000000e+00> : vector<152x128xf32>
    %30 = tpu.matmul %28, %29, %cst_26 {dimension_numbers = #tpu.dot_dimension_numbers<[1], [0], [0], [1], [0, 0, 1, 1], [], []>} : vector<152x128xbf16>, vector<128x128xbf16>, vector<152x128xf32> -> vector<152x128xf32>
    %c0_27 = arith.constant 0 : index
    %c0_28 = arith.constant 0 : index
    %31 = vector.load %arg11[%c0_27, %c0_28] : memref<1x128xbf16, #tpu.memory_space<vmem>>, vector<1x128xbf16>
    %32 = arith.extf %31 : vector<1x128xbf16> to vector<1x128xf32>
    %33 = vector.broadcast %32 : vector<1x128xf32> to vector<152x128xf32>
    %34 = arith.addf %30, %33 : vector<152x128xf32>
    %35 = arith.truncf %34 : vector<152x128xf32> to vector<152x128xbf16>
    %c0_29 = arith.constant 0 : index
    %c0_30 = arith.constant 0 : index
    %36 = vector.load %arg12[%c0_29, %c0_30] : memref<152x128xbf16, #tpu.memory_space<vmem>>, vector<152x128xbf16>
    tpu.vector_store %arg12[%c0_29, %c0_30], %35 {strides = array<i32>} : memref<152x128xbf16, #tpu.memory_space<vmem>>, vector<152x128xbf16>,
    return
  }
  func.func @transform_0(%arg0: i32) -> (i32, i32) {
    %c0_i32 = arith.constant 0 : i32
    %c0_i32_0 = arith.constant 0 : i32
    return %arg0, %c0_i32 : i32, i32
  }
  func.func @transform_1(%arg0: i32) -> (i32, i32) {
    %c0_i32 = arith.constant 0 : i32
    %c0_i32_0 = arith.constant 0 : i32
    return %arg0, %c0_i32 : i32, i32
  }
  func.func @transform_2(%arg0: i32) -> (i32, i32) {
    %c0_i32 = arith.constant 0 : i32
    %c0_i32_0 = arith.constant 0 : i32
    return %arg0, %c0_i32 : i32, i32
  }
  func.func @transform_3(%arg0: i32) -> (i32, i32) {
    %c0_i32 = arith.constant 0 : i32
    %c0_i32_0 = arith.constant 0 : i32
    %c0_i32_1 = arith.constant 0 : i32
    return %c0_i32, %c0_i32_0 : i32, i32
  }
  func.func @transform_4(%arg0: i32) -> (i32, i32) {
    %c0_i32 = arith.constant 0 : i32
    %c0_i32_0 = arith.constant 0 : i32
    %c0_i32_1 = arith.constant 0 : i32
    return %c0_i32, %c0_i32_0 : i32, i32
  }
  func.func @transform_5(%arg0: i32) -> (i32, i32) {
    %c0_i32 = arith.constant 0 : i32
    %c0_i32_0 = arith.constant 0 : i32
    %c0_i32_1 = arith.constant 0 : i32
    return %c0_i32, %c0_i32_0 : i32, i32
  }
  func.func @transform_6(%arg0: i32) -> (i32, i32) {
    %c0_i32 = arith.constant 0 : i32
    %c0_i32_0 = arith.constant 0 : i32
    %c0_i32_1 = arith.constant 0 : i32
    return %c0_i32, %c0_i32_0 : i32, i32
  }
  func.func @transform_7(%arg0: i32) -> (i32, i32, i32) {
    %c0_i32 = arith.constant 0 : i32
    %c0_i32_0 = arith.constant 0 : i32
    %c0_i32_1 = arith.constant 0 : i32
    %c0_i32_2 = arith.constant 0 : i32
    return %c0_i32, %c0_i32_0, %c0_i32_1 : i32, i32, i32
  }
  func.func @transform_8(%arg0: i32) -> (i32, i32, i32) {
    %c0_i32 = arith.constant 0 : i32
    %c0_i32_0 = arith.constant 0 : i32
    %c0_i32_1 = arith.constant 0 : i32
    %c0_i32_2 = arith.constant 0 : i32
    return %c0_i32, %c0_i32_0, %c0_i32_1 : i32, i32, i32
  }
  func.func @transform_9(%arg0: i32) -> (i32, i32) {
    %c0_i32 = arith.constant 0 : i32
    %c0_i32_0 = arith.constant 0 : i32
    %c0_i32_1 = arith.constant 0 : i32
    return %c0_i32, %c0_i32_0 : i32, i32
  }
  func.func @transform_10(%arg0: i32) -> (i32, i32) {
    %c0_i32 = arith.constant 0 : i32
    %c0_i32_0 = arith.constant 0 : i32
    %c0_i32_1 = arith.constant 0 : i32
    return %c0_i32, %c0_i32_0 : i32, i32
  }
  func.func @transform_11(%arg0: i32) -> (i32, i32) {
    %c0_i32 = arith.constant 0 : i32
    %c0_i32_0 = arith.constant 0 : i32
    return %arg0, %c0_i32 : i32, i32
  }
}

</mosaic_0001>

<llo_original>
// kernel: tpu_custom_call.1
$region0: #{tpu_custom_call.1}
  #allocation0 [shape = 'u32[]', space=smem, size = 0x4, offset = 0x4, fixed_abs, tag = 'smem constant byte address 0x4 - core index']
  #allocation1 [shape = 'u32[72,128]{1,0:T(1,128)}', space=vmem, size = 0x9000, scoped, tag = 'internal scratch']
  %s0 = inlined_call_operand.hbm [shape: bf16[300,128], index: 0, kind: input, shape index: {}]
  %s1 = inlined_call_operand.hbm [shape: bf16[300,128], index: 1, kind: input, shape index: {}]
  %s2 = inlined_call_operand.hbm [shape: bf16[300,128], index: 2, kind: input, shape index: {}]
  %s3 = inlined_call_operand.hbm [shape: bf16[128,128], index: 3, kind: input, shape index: {}]
  %s4 = inlined_call_operand.hbm [shape: bf16[128,128], index: 4, kind: input, shape index: {}]
  %s5 = inlined_call_operand.hbm [shape: bf16[128,128], index: 5, kind: input, shape index: {}]
  %s6 = inlined_call_operand.vmem [shape: bf16[1,128], index: 6, kind: input, shape index: {}]
  %s7 = inlined_call_operand.hbm [shape: bf16[1,128,128], index: 7, kind: input, shape index: {}]
  %s8 = inlined_call_operand.vmem [shape: bf16[1,1,128], index: 8, kind: input, shape index: {}]
  %s9 = inlined_call_operand.hbm [shape: bf16[128,128], index: 9, kind: input, shape index: {}]
  %s10 = inlined_call_operand.vmem [shape: bf16[1,128], index: 10, kind: input, shape index: {}]
  %s11 = inlined_call_operand.hbm [shape: bf16[300,128], index: 11, kind: output, shape index: {}]
  %s12 = sld [smem:[#allocation0]]
  $region109: #{tpu_custom_call.1} parent=0
    _
  %s14 = ssub.s32 1, %s12
  %s15 = scalar_select 0, %s14, %s12
  $region1: #{tpu_custom_call.1} parent=0
    #allocation2 [shape = 'u8[77824]{0}', space=vmem, size = 0x13000, scoped, tag = 'input window, operand 0']
    #allocation3 [shape = 's32[2]{0}', space=sflag, size = 0x8, scoped, tag = 'scoped memory for tpu_custom_call.1']
    #allocation4 [shape = 's32[2]{0}', space=sflag, size = 0x8, scoped, tag = 'scoped memory for tpu_custom_call.1']
    #allocation5 [shape = 'u8[77824]{0}', space=vmem, size = 0x13000, scoped, tag = 'input window, operand 1']
    #allocation6 [shape = 's32[2]{0}', space=sflag, size = 0x8, scoped, tag = 'scoped memory for tpu_custom_call.1']
    #allocation7 [shape = 'u8[77824]{0}', space=vmem, size = 0x13000, scoped, tag = 'input window, operand 2']
    #allocation8 [shape = 'u8[32768]{0}', space=vmem, size = 0x8000, scoped, tag = 'input window, operand 3, single buffered']
    #allocation9 [shape = 's32[1]{0}', space=sflag, size = 0x4, scoped, tag = 'scoped memory for tpu_custom_call.1']
    #allocation10 [shape = 'u8[32768]{0}', space=vmem, size = 0x8000, scoped, tag = 'input window, operand 4, single buffered']
    #allocation11 [shape = 'u8[32768]{0}', space=vmem, size = 0x8000, scoped, tag = 'input window, operand 5, single buffered']
    #allocation12 [shape = 's32[1]{0}', space=sflag, size = 0x4, scoped, tag = 'scoped memory for tpu_custom_call.1']
    #allocation13 [shape = 'u8[32768]{0}', space=vmem, size = 0x8000, scoped, tag = 'input window, operand 7, single buffered']
    #allocation14 [shape = 'u8[32768]{0}', space=vmem, size = 0x8000, scoped, tag = 'input window, operand 9, single buffered']
    #allocation15 [shape = 's32[1]{0}', space=sflag, size = 0x4, scoped, tag = 'scoped memory for tpu_custom_call.1']
    #allocation16 [shape = 'u8[77824]{0}', space=vmem, size = 0x13000, scoped, tag = 'output window, operand 0']
    %16 = vsyncpa [#allocation3], 0
    %s17 = scalar_lea.sflag [#allocation3], 1
    %18 = vsyncpa %s17, 0
    %19 = vsyncpa [#allocation6], 0
    %s20 = scalar_lea.sflag [#allocation6], 1
    %21 = vsyncpa %s20, 0
    %22 = vsyncpa [#allocation9], 0
    %23 = vsyncpa [#allocation12], 0
    %24 = vsyncpa [#allocation15], 0
    %25 = vsyncpa [#allocation4], 0
    %s26 = scalar_lea.sflag [#allocation4], 1
    %27 = vsyncpa %s26, 0
    loop: start=0, step=1, limit=4
    $region2: #{tpu_custom_call.1} parent=1 // loop_pre_header
      _
    $region3: #{tpu_custom_call.1} parent=1 // loop_header
      %s29 = sphi 0, %s33
      %p30 = scmp.ge.s32.totalorder %s29, 4
      %s39 = sphi 0, %s41
      %s42 = sphi 0, %s39
      %s43 = sphi 0, %s42
      %s59 = sphi 0, %s43
      %s65 = sphi 0, %s67
      %s68 = sphi 0, %s65
      %s69 = sphi 0, %s68
      %s85 = sphi 0, %s69
      %s91 = sphi 0, %s93
      %s94 = sphi 0, %s91
      %s95 = sphi 0, %s94
      %s111 = sphi 0, %s95
      %s115 = sphi 0, %s115
      %s117 = sphi 0, %s115
      %s118 = sphi 0, %s117
      %s132 = sphi 0, %s118
      %s136 = sphi 0, %s136
      %s138 = sphi 0, %s136
      %s139 = sphi 0, %s138
      %s153 = sphi 0, %s139
      %s157 = sphi 0, %s157
      %s159 = sphi 0, %s157
      %s160 = sphi 0, %s159
      %s174 = sphi 0, %s160
      %s178 = sphi 0, %s178
      %s180 = sphi 0, %s178
      %s181 = sphi 0, %s180
      %s195 = sphi 0, %s181
      %s199 = sphi 0, %s199
      %s201 = sphi 0, %s199
      %s202 = sphi 0, %s201
      %s216 = sphi 0, %s202
      %s220 = sphi 0, %s220
      %s222 = sphi 0, %s220
      %s223 = sphi 0, %s222
      %s237 = sphi 0, %s223
      %s241 = sphi 0, %s241
      %s243 = sphi 0, %s241
      %s244 = sphi 0, %s243
      %s258 = sphi 0, %s244
      %s262 = sphi 0, %s262
      %s264 = sphi 0, %s262
      %s265 = sphi 0, %s264
      %s279 = sphi 0, %s265
      %s285 = sphi 0, %s287
      %s288 = sphi 0, %s285
      %s289 = sphi 0, %s288
      %s305 = sphi 0, %s289
    $region4: #{tpu_custom_call.1} parent=1 // loop_header_branch
      %32 = sbr.rel (%p30) target = $region8
    $region5: #{tpu_custom_call.1} parent=1 // loop_body
      %s34 = ssub.s32 %s29, 1
      %s35 = ssub.s32 %s29, 2
      %s36 = sadd.s32 %s29, 1
      %s37 = ssub.s32 %s29, %s36
      %p38 = scmp.eq.s32.totalorder %s37, 0
      %s40 = sadd.s32 %s39, 1
      %s41 = scalar_select %p38, %s39, %s40
      %p44 = pneg %p38
      %p45 = scmp.eq.s32.totalorder %s29, 1
      %p46 = por %p44, %p45
      %p47 = scmp.ne.s32.totalorder %s39, %s42
      %p48 = scmp.eq.s32.totalorder %s29, 0
      %p49 = por %p47, %p48
      %p50 = scmp.ne.s32.totalorder %s39, %s42
      %p51 = scmp.eq.s32.totalorder %s34, 1
      %p52 = por %p50, %p51
      %p53 = scmp.ne.s32.totalorder %s42, %s43
      %p54 = scmp.eq.s32.totalorder %s34, 0
      %p55 = por %p53, %p54
      %p56 = scmp.ne.s32.totalorder %s42, %s43
      %p57 = scmp.eq.s32.totalorder %s35, 1
      %p58 = por %p56, %p57
      %p60 = scmp.ne.s32.totalorder %s43, %s59
      %p61 = scmp.eq.s32.totalorder %s35, 0
      %p62 = por %p60, %p61
      %s63 = ssub.s32 %s29, %s36
      %p64 = scmp.eq.s32.totalorder %s63, 0
      %s66 = sadd.s32 %s65, 1
      %s67 = scalar_select %p64, %s65, %s66
      %p70 = pneg %p64
      %p71 = scmp.eq.s32.totalorder %s29, 1
      %p72 = por %p70, %p71
      %p73 = scmp.ne.s32.totalorder %s65, %s68
      %p74 = scmp.eq.s32.totalorder %s29, 0
      %p75 = por %p73, %p74
      %p76 = scmp.ne.s32.totalorder %s65, %s68
      %p77 = scmp.eq.s32.totalorder %s34, 1
      %p78 = por %p76, %p77
      %p79 = scmp.ne.s32.totalorder %s68, %s69
      %p80 = scmp.eq.s32.totalorder %s34, 0
      %p81 = por %p79, %p80
      %p82 = scmp.ne.s32.totalorder %s68, %s69
      %p83 = scmp.eq.s32.totalorder %s35, 1
      %p84 = por %p82, %p83
      %p86 = scmp.ne.s32.totalorder %s69, %s85
      %p87 = scmp.eq.s32.totalorder %s35, 0
      %p88 = por %p86, %p87
      %s89 = ssub.s32 %s29, %s36
      %p90 = scmp.eq.s32.totalorder %s89, 0
      %s92 = sadd.s32 %s91, 1
      %s93 = scalar_select %p90, %s91, %s92
      %p96 = pneg %p90
      %p97 = scmp.eq.s32.totalorder %s29, 1
      %p98 = por %p96, %p97
      %p99 = scmp.ne.s32.totalorder %s91, %s94
      %p100 = scmp.eq.s32.totalorder %s29, 0
      %p101 = por %p99, %p100
      %p102 = scmp.ne.s32.totalorder %s91, %s94
      %p103 = scmp.eq.s32.totalorder %s34, 1
      %p104 = por %p102, %p103
      %p105 = scmp.ne.s32.totalorder %s94, %s95
      %p106 = scmp.eq.s32.totalorder %s34, 0
      %p107 = por %p105, %p106
      %p108 = scmp.ne.s32.totalorder %s94, %s95
      %p109 = scmp.eq.s32.totalorder %s35, 1
      %p110 = por %p108, %p109
      %p112 = scmp.ne.s32.totalorder %s95, %s111
      %p113 = scmp.eq.s32.totalorder %s35, 0
      %p114 = por %p112, %p113
      %s116 = sadd.s32 %s115, 1
      %p119 = scmp.eq.s32.totalorder %s29, 1
      %p120 = scmp.ne.s32.totalorder %s115, %s117
      %p121 = scmp.eq.s32.totalorder %s29, 0
      %p122 = por %p120, %p121
      %p123 = scmp.ne.s32.totalorder %s115, %s117
      %p124 = scmp.eq.s32.totalorder %s34, 1
      %p125 = por %p123, %p124
      %p126 = scmp.ne.s32.totalorder %s117, %s118
      %p127 = scmp.eq.s32.totalorder %s34, 0
      %p128 = por %p126, %p127
      %p129 = scmp.ne.s32.totalorder %s117, %s118
      %p130 = scmp.eq.s32.totalorder %s35, 1
      %p131 = por %p129, %p130
      %p133 = scmp.ne.s32.totalorder %s118, %s132
      %p134 = scmp.eq.s32.totalorder %s35, 0
      %p135 = por %p133, %p134
      %s137 = sadd.s32 %s136, 1
      %p140 = scmp.eq.s32.totalorder %s29, 1
      %p141 = scmp.ne.s32.totalorder %s136, %s138
      %p142 = scmp.eq.s32.totalorder %s29, 0
      %p143 = por %p141, %p142
      %p144 = scmp.ne.s32.totalorder %s136, %s138
      %p145 = scmp.eq.s32.totalorder %s34, 1
      %p146 = por %p144, %p145
      %p147 = scmp.ne.s32.totalorder %s138, %s139
      %p148 = scmp.eq.s32.totalorder %s34, 0
      %p149 = por %p147, %p148
      %p150 = scmp.ne.s32.totalorder %s138, %s139
      %p151 = scmp.eq.s32.totalorder %s35, 1
      %p152 = por %p150, %p151
      %p154 = scmp.ne.s32.totalorder %s139, %s153
      %p155 = scmp.eq.s32.totalorder %s35, 0
      %p156 = por %p154, %p155
      %s158 = sadd.s32 %s157, 1
      %p161 = scmp.eq.s32.totalorder %s29, 1
      %p162 = scmp.ne.s32.totalorder %s157, %s159
      %p163 = scmp.eq.s32.totalorder %s29, 0
      %p164 = por %p162, %p163
      %p165 = scmp.ne.s32.totalorder %s157, %s159
      %p166 = scmp.eq.s32.totalorder %s34, 1
      %p167 = por %p165, %p166
      %p168 = scmp.ne.s32.totalorder %s159, %s160
      %p169 = scmp.eq.s32.totalorder %s34, 0
      %p170 = por %p168, %p169
      %p171 = scmp.ne.s32.totalorder %s159, %s160
      %p172 = scmp.eq.s32.totalorder %s35, 1
      %p173 = por %p171, %p172
      %p175 = scmp.ne.s32.totalorder %s160, %s174
      %p176 = scmp.eq.s32.totalorder %s35, 0
      %p177 = por %p175, %p176
      %s179 = sadd.s32 %s178, 1
      %p182 = scmp.eq.s32.totalorder %s29, 1
      %p183 = scmp.ne.s32.totalorder %s178, %s180
      %p184 = scmp.eq.s32.totalorder %s29, 0
      %p185 = por %p183, %p184
      %p186 = scmp.ne.s32.totalorder %s178, %s180
      %p187 = scmp.eq.s32.totalorder %s34, 1
      %p188 = por %p186, %p187
      %p189 = scmp.ne.s32.totalorder %s180, %s181
      %p190 = scmp.eq.s32.totalorder %s34, 0
      %p191 = por %p189, %p190
      %p192 = scmp.ne.s32.totalorder %s180, %s181
      %p193 = scmp.eq.s32.totalorder %s35, 1
      %p194 = por %p192, %p193
      %p196 = scmp.ne.s32.totalorder %s181, %s195
      %p197 = scmp.eq.s32.totalorder %s35, 0
      %p198 = por %p196, %p197
      %s200 = sadd.s32 %s199, 1
      %p203 = scmp.eq.s32.totalorder %s29, 1
      %p204 = scmp.ne.s32.totalorder %s199, %s201
      %p205 = scmp.eq.s32.totalorder %s29, 0
      %p206 = por %p204, %p205
      %p207 = scmp.ne.s32.totalorder %s199, %s201
      %p208 = scmp.eq.s32.totalorder %s34, 1
      %p209 = por %p207, %p208
      %p210 = scmp.ne.s32.totalorder %s201, %s202
      %p211 = scmp.eq.s32.totalorder %s34, 0
      %p212 = por %p210, %p211
      %p213 = scmp.ne.s32.totalorder %s201, %s202
      %p214 = scmp.eq.s32.totalorder %s35, 1
      %p215 = por %p213, %p214
      %p217 = scmp.ne.s32.totalorder %s202, %s216
      %p218 = scmp.eq.s32.totalorder %s35, 0
      %p219 = por %p217, %p218
      %s221 = sadd.s32 %s220, 1
      %p224 = scmp.eq.s32.totalorder %s29, 1
      %p225 = scmp.ne.s32.totalorder %s220, %s222
      %p226 = scmp.eq.s32.totalorder %s29, 0
      %p227 = por %p225, %p226
      %p228 = scmp.ne.s32.totalorder %s220, %s222
      %p229 = scmp.eq.s32.totalorder %s34, 1
      %p230 = por %p228, %p229
      %p231 = scmp.ne.s32.totalorder %s222, %s223
      %p232 = scmp.eq.s32.totalorder %s34, 0
      %p233 = por %p231, %p232
      %p234 = scmp.ne.s32.totalorder %s222, %s223
      %p235 = scmp.eq.s32.totalorder %s35, 1
      %p236 = por %p234, %p235
      %p238 = scmp.ne.s32.totalorder %s223, %s237
      %p239 = scmp.eq.s32.totalorder %s35, 0
      %p240 = por %p238, %p239
      %s242 = sadd.s32 %s241, 1
      %p245 = scmp.eq.s32.totalorder %s29, 1
      %p246 = scmp.ne.s32.totalorder %s241, %s243
      %p247 = scmp.eq.s32.totalorder %s29, 0
      %p248 = por %p246, %p247
      %p249 = scmp.ne.s32.totalorder %s241, %s243
      %p250 = scmp.eq.s32.totalorder %s34, 1
      %p251 = por %p249, %p250
      %p252 = scmp.ne.s32.totalorder %s243, %s244
      %p253 = scmp.eq.s32.totalorder %s34, 0
      %p254 = por %p252, %p253
      %p255 = scmp.ne.s32.totalorder %s243, %s244
      %p256 = scmp.eq.s32.totalorder %s35, 1
      %p257 = por %p255, %p256
      %p259 = scmp.ne.s32.totalorder %s244, %s258
      %p260 = scmp.eq.s32.totalorder %s35, 0
      %p261 = por %p259, %p260
      %s263 = sadd.s32 %s262, 1
      %p266 = scmp.eq.s32.totalorder %s29, 1
      %p267 = scmp.ne.s32.totalorder %s262, %s264
      %p268 = scmp.eq.s32.totalorder %s29, 0
      %p269 = por %p267, %p268
      %p270 = scmp.ne.s32.totalorder %s262, %s264
      %p271 = scmp.eq.s32.totalorder %s34, 1
      %p272 = por %p270, %p271
      %p273 = scmp.ne.s32.totalorder %s264, %s265
      %p274 = scmp.eq.s32.totalorder %s34, 0
      %p275 = por %p273, %p274
      %p276 = scmp.ne.s32.totalorder %s264, %s265
      %p277 = scmp.eq.s32.totalorder %s35, 1
      %p278 = por %p276, %p277
      %p280 = scmp.ne.s32.totalorder %s265, %s279
      %p281 = scmp.eq.s32.totalorder %s35, 0
      %p282 = por %p280, %p281
      %s283 = ssub.s32 %s29, %s36
      %p284 = scmp.eq.s32.totalorder %s283, 0
      %s286 = sadd.s32 %s285, 1
      %s287 = scalar_select %p284, %s285, %s286
      %p290 = pneg %p284
      %p291 = scmp.eq.s32.totalorder %s29, 1
      %p292 = por %p290, %p291
      %p293 = scmp.ne.s32.totalorder %s285, %s288
      %p294 = scmp.eq.s32.totalorder %s29, 0
      %p295 = por %p293, %p294
      %p296 = scmp.ne.s32.totalorder %s285, %s288
      %p297 = scmp.eq.s32.totalorder %s34, 1
      %p298 = por %p296, %p297
      %p299 = scmp.ne.s32.totalorder %s288, %s289
      %p300 = scmp.eq.s32.totalorder %s34, 0
      %p301 = por %p299, %p300
      %p302 = scmp.ne.s32.totalorder %s288, %s289
      %p303 = scmp.eq.s32.totalorder %s35, 1
      %p304 = por %p302, %p303
      %p306 = scmp.ne.s32.totalorder %s289, %s305
      %p307 = scmp.eq.s32.totalorder %s35, 0
      %p308 = por %p306, %p307
      %p309 = scmp.le.s32.totalorder 1, %s29
      %p310 = scmp.lt.s32.totalorder %s29, 3
      %p311 = pnand %p309, %p310
      %p312 = pneg %p311
      // Predicated region
      $region9: #{tpu_custom_call.1} parent=5 // pred_check
        _
      $region10: #{tpu_custom_call.1} parent=5 // pred_check_branch
        %314 = sbr.rel (%p311) target = $region12
      $region11: #{tpu_custom_call.1} parent=5 // pred_region
        %s315 = ssub.s32 %s29, 1
        // Predicated region
        $region13: #{tpu_custom_call.1} parent=11 // pred_check
          %p316 = pneg %p128
        $region14: #{tpu_custom_call.1} parent=11 // pred_check_branch
          %318 = sbr.rel (%p316) target = $region16
        $region15: #{tpu_custom_call.1} parent=11 // pred_region
          %320 = vsyncadd [#allocation9], 0
          %s321 = sshll.u32 %s3, 4
          %s322 = int_to_ptr.hbm [resolvable:$true] %s321
          %s323 = sshll.u32 [#allocation8], 4
          %s324 = int_to_ptr.vmem [resolvable:$true] %s323
          %329 = dma.hbm_to_vmem [thread:$0]  %s322, 1024, %s324, [#allocation9], 64, 64, 4
        $region16: #{tpu_custom_call.1} parent=11 // pred_fallthru
          _
        // Predicated region
        $region17: #{tpu_custom_call.1} parent=11 // pred_check
          %p330 = pneg %p149
        $region18: #{tpu_custom_call.1} parent=11 // pred_check_branch
          %332 = sbr.rel (%p330) target = $region20
        $region19: #{tpu_custom_call.1} parent=11 // pred_region
          %334 = vsyncadd [#allocation9], 0
          %s335 = sshll.u32 %s4, 4
          %s336 = int_to_ptr.hbm [resolvable:$true] %s335
          %s337 = sshll.u32 [#allocation10], 4
          %s338 = int_to_ptr.vmem [resolvable:$true] %s337
          %343 = dma.hbm_to_vmem [thread:$0]  %s336, 1024, %s338, [#allocation9], 64, 64, 4
        $region20: #{tpu_custom_call.1} parent=11 // pred_fallthru
          _
        // Predicated region
        $region21: #{tpu_custom_call.1} parent=11 // pred_check
          %p344 = pneg %p170
        $region22: #{tpu_custom_call.1} parent=11 // pred_check_branch
          %346 = sbr.rel (%p344) target = $region24
        $region23: #{tpu_custom_call.1} parent=11 // pred_region
          %348 = vsyncadd [#allocation12], 0
          %s349 = sshll.u32 %s5, 4
          %s350 = int_to_ptr.hbm [resolvable:$true] %s349
          %s351 = sshll.u32 [#allocation11], 4
          %s352 = int_to_ptr.vmem [resolvable:$true] %s351
          %357 = dma.hbm_to_vmem [thread:$0]  %s350, 1024, %s352, [#allocation12], 64, 64, 4
        $region24: #{tpu_custom_call.1} parent=11 // pred_fallthru
          _
        // Predicated region
        $region25: #{tpu_custom_call.1} parent=11 // pred_check
          %p358 = pneg %p191
        $region26: #{tpu_custom_call.1} parent=11 // pred_check_branch
          %360 = sbr.rel (%p358) target = $region28
        $region27: #{tpu_custom_call.1} parent=11 // pred_region
          _
        $region28: #{tpu_custom_call.1} parent=11 // pred_fallthru
          _
        // Predicated region
        $region29: #{tpu_custom_call.1} parent=11 // pred_check
          %p361 = pneg %p212
        $region30: #{tpu_custom_call.1} parent=11 // pred_check_branch
          %363 = sbr.rel (%p361) target = $region32
        $region31: #{tpu_custom_call.1} parent=11 // pred_region
          %365 = vsyncadd [#allocation12], 0
          %s366 = sshll.u32 %s7, 4
          %s367 = int_to_ptr.hbm [resolvable:$true] %s366
          %s368 = sshll.u32 [#allocation13], 4
          %s369 = int_to_ptr.vmem [resolvable:$true] %s368
          %374 = dma.hbm_to_vmem [thread:$0]  %s367, 1024, %s369, [#allocation12], 64, 64, 4
        $region32: #{tpu_custom_call.1} parent=11 // pred_fallthru
          _
        // Predicated region
        $region33: #{tpu_custom_call.1} parent=11 // pred_check
          %p375 = pneg %p233
        $region34: #{tpu_custom_call.1} parent=11 // pred_check_branch
          %377 = sbr.rel (%p375) target = $region36
        $region35: #{tpu_custom_call.1} parent=11 // pred_region
          _
        $region36: #{tpu_custom_call.1} parent=11 // pred_fallthru
          _
        // Predicated region
        $region37: #{tpu_custom_call.1} parent=11 // pred_check
          %p378 = pneg %p254
        $region38: #{tpu_custom_call.1} parent=11 // pred_check_branch
          %380 = sbr.rel (%p378) target = $region40
        $region39: #{tpu_custom_call.1} parent=11 // pred_region
          %382 = vsyncadd [#allocation15], 0
          %s383 = sshll.u32 %s9, 4
          %s384 = int_to_ptr.hbm [resolvable:$true] %s383
          %s385 = sshll.u32 [#allocation14], 4
          %s386 = int_to_ptr.vmem [resolvable:$true] %s385
          %391 = dma.hbm_to_vmem [thread:$0]  %s384, 1024, %s386, [#allocation15], 64, 64, 4
        $region40: #{tpu_custom_call.1} parent=11 // pred_fallthru
          _
        // Predicated region
        $region41: #{tpu_custom_call.1} parent=11 // pred_check
          %p392 = pneg %p275
        $region42: #{tpu_custom_call.1} parent=11 // pred_check_branch
          %394 = sbr.rel (%p392) target = $region44
        $region43: #{tpu_custom_call.1} parent=11 // pred_region
          _
        $region44: #{tpu_custom_call.1} parent=11 // pred_fallthru
          _
      $region12: #{tpu_custom_call.1} parent=5 // pred_fallthru
        _
      %p395 = scmp.lt.s32.totalorder %s29, 2
      // Predicated region
      $region45: #{tpu_custom_call.1} parent=5 // pred_check
        %p396 = pneg %p395
      $region46: #{tpu_custom_call.1} parent=5 // pred_check_branch
        %398 = sbr.rel (%p396) target = $region48
      $region47: #{tpu_custom_call.1} parent=5 // pred_region
        // Predicated region
        $region49: #{tpu_custom_call.1} parent=47 // pred_check
          %p399 = pneg %p49
        $region50: #{tpu_custom_call.1} parent=47 // pred_check_branch
          %401 = sbr.rel (%p399) target = $region52
        $region51: #{tpu_custom_call.1} parent=47 // pred_region
          %s402 = sand.u32 %s39, 1
          %s403 = scalar_lea.sflag [#allocation3], %s402
          %s404 = sand.u32 %s39, 1
          %s405 = smul.addr %s404, 76
          %s406 = scalar_lea.vmem [#allocation2], %s405
          %s407 = smul.u32 19, %s29
          %409 = vsyncadd %s403, 0
          %s410 = smul.addr %s407, 4
          %s411 = scalar_lea.hbm %s0, %s410
          %s412 = sshll.u32 %s411, 4
          %s413 = int_to_ptr.hbm [resolvable:$true] %s412
          %s414 = sshll.u32 %s406, 4
          %s415 = int_to_ptr.vmem [resolvable:$true] %s414
          %420 = dma.hbm_to_vmem [thread:$0]  %s413, 1216, %s415, %s403, 64, 64, 4
        $region52: #{tpu_custom_call.1} parent=47 // pred_fallthru
          _
        // Predicated region
        $region53: #{tpu_custom_call.1} parent=47 // pred_check
          %p421 = pneg %p75
        $region54: #{tpu_custom_call.1} parent=47 // pred_check_branch
          %423 = sbr.rel (%p421) target = $region56
        $region55: #{tpu_custom_call.1} parent=47 // pred_region
          %s424 = sand.u32 %s29, 1
          %s425 = scalar_lea.sflag [#allocation6], %s424
          %s426 = sand.u32 %s65, 1
          %s427 = smul.addr %s426, 76
          %s428 = scalar_lea.vmem [#allocation5], %s427
          %s429 = smul.u32 19, %s29
          %431 = vsyncadd %s425, 0
          %s432 = smul.addr %s429, 4
          %s433 = scalar_lea.hbm %s1, %s432
          %s434 = sshll.u32 %s433, 4
          %s435 = int_to_ptr.hbm [resolvable:$true] %s434
          %s436 = sshll.u32 %s428, 4
          %s437 = int_to_ptr.vmem [resolvable:$true] %s436
          %442 = dma.hbm_to_vmem [thread:$0]  %s435, 1216, %s437, %s425, 64, 64, 4
        $region56: #{tpu_custom_call.1} parent=47 // pred_fallthru
          _
        // Predicated region
        $region57: #{tpu_custom_call.1} parent=47 // pred_check
          %p443 = pneg %p101
        $region58: #{tpu_custom_call.1} parent=47 // pred_check_branch
          %445 = sbr.rel (%p443) target = $region60
        $region59: #{tpu_custom_call.1} parent=47 // pred_region
          %s446 = sand.u32 %s29, 1
          %s447 = scalar_lea.sflag [#allocation6], %s446
          %s448 = sand.u32 %s91, 1
          %s449 = smul.addr %s448, 76
          %s450 = scalar_lea.vmem [#allocation7], %s449
          %s451 = smul.u32 19, %s29
          %453 = vsyncadd %s447, 0
          %s454 = smul.addr %s451, 4
          %s455 = scalar_lea.hbm %s2, %s454
          %s456 = sshll.u32 %s455, 4
          %s457 = int_to_ptr.hbm [resolvable:$true] %s456
          %s458 = sshll.u32 %s450, 4
          %s459 = int_to_ptr.vmem [resolvable:$true] %s458
          %464 = dma.hbm_to_vmem [thread:$0]  %s457, 1216, %s459, %s447, 64, 64, 4
        $region60: #{tpu_custom_call.1} parent=47 // pred_fallthru
          _
      $region48: #{tpu_custom_call.1} parent=5 // pred_fallthru
        _
      %p465 = scmp.le.s32.totalorder 1, %s29
      %p466 = scmp.lt.s32.totalorder %s29, 3
      %p467 = pnand %p465, %p466
      %p468 = pneg %p467
      // Predicated region
      $region61: #{tpu_custom_call.1} parent=5 // pred_check
        _
      $region62: #{tpu_custom_call.1} parent=5 // pred_check_branch
        %470 = sbr.rel (%p467) target = $region64
      $region63: #{tpu_custom_call.1} parent=5 // pred_region
        %s471 = ssub.s32 %s29, 1
        %s472 = sand.u32 %s42, 1
        %s473 = scalar_lea.sflag [#allocation3], %s472
        %s474 = sand.u32 %s42, 1
        %s475 = smul.addr %s474, 76
        %s476 = scalar_lea.vmem [#allocation2], %s475
        // Predicated region
        $region65: #{tpu_custom_call.1} parent=63 // pred_check
          %p477 = pneg %p55
        $region66: #{tpu_custom_call.1} parent=63 // pred_check_branch
          %479 = sbr.rel (%p477) target = $region68
        $region67: #{tpu_custom_call.1} parent=63 // pred_region
          %481 = dma.done %s473, 1216
        $region68: #{tpu_custom_call.1} parent=63 // pred_fallthru
          _
        %s482 = sand.u32 %s34, 1
        %s483 = scalar_lea.sflag [#allocation6], %s482
        %s484 = sand.u32 %s68, 1
        %s485 = smul.addr %s484, 76
        %s486 = scalar_lea.vmem [#allocation5], %s485
        // Predicated region
        $region69: #{tpu_custom_call.1} parent=63 // pred_check
          %p487 = pneg %p81
        $region70: #{tpu_custom_call.1} parent=63 // pred_check_branch
          %489 = sbr.rel (%p487) target = $region72
        $region71: #{tpu_custom_call.1} parent=63 // pred_region
          %491 = dma.done %s483, 1216
        $region72: #{tpu_custom_call.1} parent=63 // pred_fallthru
          _
        %s492 = sand.u32 %s34, 1
        %s493 = scalar_lea.sflag [#allocation6], %s492
        %s494 = sand.u32 %s94, 1
        %s495 = smul.addr %s494, 76
        %s496 = scalar_lea.vmem [#allocation7], %s495
        // Predicated region
        $region73: #{tpu_custom_call.1} parent=63 // pred_check
          %p497 = pneg %p107
        $region74: #{tpu_custom_call.1} parent=63 // pred_check_branch
          %499 = sbr.rel (%p497) target = $region76
        $region75: #{tpu_custom_call.1} parent=63 // pred_region
          %501 = dma.done %s493, 1216
        $region76: #{tpu_custom_call.1} parent=63 // pred_fallthru
          _
        // Predicated region
        $region77: #{tpu_custom_call.1} parent=63 // pred_check
          %p502 = pneg %p128
        $region78: #{tpu_custom_call.1} parent=63 // pred_check_branch
          %504 = sbr.rel (%p502) target = $region80
        $region79: #{tpu_custom_call.1} parent=63 // pred_region
          %506 = dma.done [#allocation9], 1024
        $region80: #{tpu_custom_call.1} parent=63 // pred_fallthru
          _
        // Predicated region
        $region81: #{tpu_custom_call.1} parent=63 // pred_check
          %p507 = pneg %p149
        $region82: #{tpu_custom_call.1} parent=63 // pred_check_branch
          %509 = sbr.rel (%p507) target = $region84
        $region83: #{tpu_custom_call.1} parent=63 // pred_region
          %511 = dma.done [#allocation9], 1024
        $region84: #{tpu_custom_call.1} parent=63 // pred_fallthru
          _
        // Predicated region
        $region85: #{tpu_custom_call.1} parent=63 // pred_check
          %p512 = pneg %p170
        $region86: #{tpu_custom_call.1} parent=63 // pred_check_branch
          %514 = sbr.rel (%p512) target = $region88
        $region87: #{tpu_custom_call.1} parent=63 // pred_region
          %516 = dma.done [#allocation12], 1024
        $region88: #{tpu_custom_call.1} parent=63 // pred_fallthru
          _
        // Predicated region
        $region89: #{tpu_custom_call.1} parent=63 // pred_check
          %p517 = pneg %p212
        $region90: #{tpu_custom_call.1} parent=63 // pred_check_branch
          %519 = sbr.rel (%p517) target = $region92
        $region91: #{tpu_custom_call.1} parent=63 // pred_region
          %521 = dma.done [#allocation12], 1024
        $region92: #{tpu_custom_call.1} parent=63 // pred_fallthru
          _
        // Predicated region
        $region93: #{tpu_custom_call.1} parent=63 // pred_check
          %p522 = pneg %p254
        $region94: #{tpu_custom_call.1} parent=63 // pred_check_branch
          %524 = sbr.rel (%p522) target = $region96
        $region95: #{tpu_custom_call.1} parent=63 // pred_region
          %526 = dma.done [#allocation15], 1024
        $region96: #{tpu_custom_call.1} parent=63 // pred_fallthru
          _
        %s527 = sand.u32 %s42, 1
        %s528 = scalar_lea.sflag [#allocation3], %s527
        %s529 = sand.u32 %s42, 1
        %s530 = smul.addr %s529, 76
        %s531 = scalar_lea.vmem [#allocation2], %s530
        %p532 = pneg %p55
        %p533 = pneg %p52
        %s534 = sand.u32 %s34, 1
        %s535 = scalar_lea.sflag [#allocation6], %s534
        %s536 = sand.u32 %s68, 1
        %s537 = smul.addr %s536, 76
        %s538 = scalar_lea.vmem [#allocation5], %s537
        %p539 = pneg %p81
        %p540 = pneg %p78
        %s541 = sand.u32 %s34, 1
        %s542 = scalar_lea.sflag [#allocation6], %s541
        %s543 = sand.u32 %s94, 1
        %s544 = smul.addr %s543, 76
        %s545 = scalar_lea.vmem [#allocation7], %s544
        %p546 = pneg %p107
        %p547 = pneg %p104
        %p548 = pneg %p128
        %p549 = pneg %p125
        %p550 = pneg %p149
        %p551 = pneg %p146
        %p552 = pneg %p170
        %p553 = pneg %p167
        %p554 = pneg %p191
        %p555 = pneg %p188
        %p556 = pneg %p212
        %p557 = pneg %p209
        %p558 = pneg %p233
        %p559 = pneg %p230
        %p560 = pneg %p254
        %p561 = pneg %p251
        %p562 = pneg %p275
        %p563 = pneg %p272
        %p564 = pneg %p301
        %p565 = pneg %p298
        %s566 = sand.u32 %s288, 1
        %s567 = scalar_lea.sflag [#allocation4], %s566
        %s568 = sand.u32 %s288, 1
        %s569 = smul.addr %s568, 76
        %s570 = scalar_lea.vmem [#allocation16], %s569
        %s571 = smul.u32 19, %s34
        %s572 = smul.u32 19, %s34
        %s573 = smul.u32 19, %s34
        %s574 = smul.u32 19, %s34
        %v575 = vld [vmem:[%s476] sm:$0xf]
        %v576 = vld [vmem:[%s476 + $0x4] sm:$0xf]
        %v577 = vld [vmem:[%s476 + $0x8] sm:$0xf]
        %v578 = vld [vmem:[%s476 + $0xc] sm:$0xf]
        %v579 = vld [vmem:[%s476 + $0x10] sm:$0xf]
        %v580 = vld [vmem:[%s476 + $0x14] sm:$0xf]
        %v581 = vld [vmem:[%s476 + $0x18] sm:$0xf]
        %v582 = vld [vmem:[%s476 + $0x1c] sm:$0xf]
        %v583 = vld [vmem:[%s476 + $0x20] sm:$0xf]
        %v584 = vld [vmem:[%s476 + $0x24] sm:$0xf]
        %v585 = vld [vmem:[%s476 + $0x28] sm:$0xf]
        %v586 = vld [vmem:[%s476 + $0x2c] sm:$0xf]
        %v587 = vld [vmem:[%s476 + $0x30] sm:$0xf]
        %v588 = vld [vmem:[%s476 + $0x34] sm:$0xf]
        %v589 = vld [vmem:[%s476 + $0x38] sm:$0xf]
        %v590 = vld [vmem:[%s476 + $0x3c] sm:$0xf]
        %v591 = vld [vmem:[%s476 + $0x40] sm:$0xf]
        %v592 = vld [vmem:[%s476 + $0x44] sm:$0xf]
        %v593 = vld [vmem:[%s476 + $0x48] sm:$0xf]
        %v594 = vld [vmem:[#allocation8] sm:$0xf]
        %v595 = vld [vmem:[#allocation8 + $0x4] sm:$0xf]
        %v596 = vld [vmem:[#allocation8 + $0x8] sm:$0xf]
        %v597 = vld [vmem:[#allocation8 + $0xc] sm:$0xf]
        %v598 = vld [vmem:[#allocation8 + $0x10] sm:$0xf]
        %v599 = vld [vmem:[#allocation8 + $0x14] sm:$0xf]
        %v600 = vld [vmem:[#allocation8 + $0x18] sm:$0xf]
        %v601 = vld [vmem:[#allocation8 + $0x1c] sm:$0xf]
        %v602 = vld [vmem:[#allocation8 + $0x20] sm:$0xf]
        %v603 = vld [vmem:[#allocation8 + $0x24] sm:$0xf]
        %v604 = vld [vmem:[#allocation8 + $0x28] sm:$0xf]
        %v605 = vld [vmem:[#allocation8 + $0x2c] sm:$0xf]
        %v606 = vld [vmem:[#allocation8 + $0x30] sm:$0xf]
        %v607 = vld [vmem:[#allocation8 + $0x34] sm:$0xf]
        %v608 = vld [vmem:[#allocation8 + $0x38] sm:$0xf]
        %v609 = vld [vmem:[#allocation8 + $0x3c] sm:$0xf]
        %v610 = vld [vmem:[%s486] sm:$0xf]
        %v611 = vld [vmem:[%s486 + $0x4] sm:$0xf]
        %v612 = vld [vmem:[%s486 + $0x8] sm:$0xf]
        %v613 = vld [vmem:[%s486 + $0xc] sm:$0xf]
        %v614 = vld [vmem:[%s486 + $0x10] sm:$0xf]
        %v615 = vld [vmem:[%s486 + $0x14] sm:$0xf]
        %v616 = vld [vmem:[%s486 + $0x18] sm:$0xf]
        %v617 = vld [vmem:[%s486 + $0x1c] sm:$0xf]
        %v618 = vld [vmem:[%s486 + $0x20] sm:$0xf]
        %v619 = vld [vmem:[%s486 + $0x24] sm:$0xf]
        %v620 = vld [vmem:[%s486 + $0x28] sm:$0xf]
        %v621 = vld [vmem:[%s486 + $0x2c] sm:$0xf]
        %v622 = vld [vmem:[%s486 + $0x30] sm:$0xf]
        %v623 = vld [vmem:[%s486 + $0x34] sm:$0xf]
        %v624 = vld [vmem:[%s486 + $0x38] sm:$0xf]
        %v625 = vld [vmem:[%s486 + $0x3c] sm:$0xf]
        %v626 = vld [vmem:[%s486 + $0x40] sm:$0xf]
        %v627 = vld [vmem:[%s486 + $0x44] sm:$0xf]
        %v628 = vld [vmem:[%s486 + $0x48] sm:$0xf]
        %v629 = vld [vmem:[#allocation10] sm:$0xf]
        %v630 = vld [vmem:[#allocation10 + $0x4] sm:$0xf]
        %v631 = vld [vmem:[#allocation10 + $0x8] sm:$0xf]
        %v632 = vld [vmem:[#allocation10 + $0xc] sm:$0xf]
        %v633 = vld [vmem:[#allocation10 + $0x10] sm:$0xf]
        %v634 = vld [vmem:[#allocation10 + $0x14] sm:$0xf]
        %v635 = vld [vmem:[#allocation10 + $0x18] sm:$0xf]
        %v636 = vld [vmem:[#allocation10 + $0x1c] sm:$0xf]
        %v637 = vld [vmem:[#allocation10 + $0x20] sm:$0xf]
        %v638 = vld [vmem:[#allocation10 + $0x24] sm:$0xf]
        %v639 = vld [vmem:[#allocation10 + $0x28] sm:$0xf]
        %v640 = vld [vmem:[#allocation10 + $0x2c] sm:$0xf]
        %v641 = vld [vmem:[#allocation10 + $0x30] sm:$0xf]
        %v642 = vld [vmem:[#allocation10 + $0x34] sm:$0xf]
        %v643 = vld [vmem:[#allocation10 + $0x38] sm:$0xf]
        %v644 = vld [vmem:[#allocation10 + $0x3c] sm:$0xf]
        %v664 = vunpack.c.l.b16 %v610
        %v665 = vunpack.c.l.b16 %v611
        %v666 = vunpack.c.l.b16 %v612
        %v667 = vunpack.c.l.b16 %v613
        %v668 = vunpack.c.l.b16 %v614
        %v669 = vunpack.c.l.b16 %v615
        %v670 = vunpack.c.l.b16 %v616
        %v671 = vunpack.c.l.b16 %v617
        %v672 = vunpack.c.l.b16 %v618
        %v673 = vunpack.c.l.b16 %v619
        %v674 = vunpack.c.l.b16 %v620
        %v675 = vunpack.c.l.b16 %v621
        %v676 = vunpack.c.l.b16 %v622
        %v677 = vunpack.c.l.b16 %v623
        %v678 = vunpack.c.l.b16 %v624
        %v679 = vunpack.c.l.b16 %v625
        %v680 = vunpack.c.l.b16 %v626
        %v681 = vunpack.c.l.b16 %v627
        %v682 = vunpack.c.l.b16 %v628
        %v683 = vpack.c.b16 %v665, %v664
        %v684 = vpack.c.b16 %v667, %v666
        %v685 = vpack.c.b16 %v669, %v668
        %v686 = vpack.c.b16 %v671, %v670
        %v687 = vpack.c.b16 %v673, %v672
        %v688 = vpack.c.b16 %v675, %v674
        %v689 = vpack.c.b16 %v677, %v676
        %v690 = vpack.c.b16 %v679, %v678
        %v691 = vpack.c.b16 %v681, %v680
        %v692 = vpack.c.b16 %v682, %v682
        %v719 = vunpack.c.l.b16 %v629
        %v720 = vunpack.c.l.b16 %v630
        %v721 = vunpack.c.l.b16 %v631
        %v722 = vunpack.c.l.b16 %v632
        %v723 = vunpack.c.l.b16 %v633
        %v724 = vunpack.c.l.b16 %v634
        %v725 = vunpack.c.l.b16 %v635
        %v726 = vunpack.c.l.b16 %v636
        %v727 = vunpack.c.l.b16 %v637
        %v728 = vunpack.c.l.b16 %v638
        %v729 = vunpack.c.l.b16 %v639
        %v730 = vunpack.c.l.b16 %v640
        %v731 = vunpack.c.l.b16 %v641
        %v732 = vunpack.c.l.b16 %v642
        %v733 = vunpack.c.l.b16 %v643
        %v734 = vunpack.c.l.b16 %v644
        %v735 = vpack.c.b16 %v720, %v719
        %v736 = vpack.c.b16 %v722, %v721
        %v737 = vpack.c.b16 %v724, %v723
        %v738 = vpack.c.b16 %v726, %v725
        %v739 = vpack.c.b16 %v728, %v727
        %v740 = vpack.c.b16 %v730, %v729
        %v741 = vpack.c.b16 %v732, %v731
        %v742 = vpack.c.b16 %v734, %v733
        %751 = vmatpush.bf16.msra.mxu0 %v742
        %752 = vmatpush.bf16.msra.mxu0 %v741
        %753 = vmatpush.bf16.msra.mxu0 %v740
        %754 = vmatpush.bf16.msra.mxu0 %v739
        %755 = vmatpush.bf16.msra.mxu0 %v738
        %756 = vmatpush.bf16.msra.mxu0 %v737
        %757 = vmatpush.bf16.msra.mxu0 %v736
        %758 = vmatpush.bf16.msra.mxu0 %v735
        %759 = vmatmul.bf16.gmra.mxu0 %v683
        %v760 = vpop.f32.mrf.mxu0
        %v761 = vadd.f32 0.0, %v760
        %v762 = vpop.f32.mrf.mxu0
        %v763 = vadd.f32 0.0, %v762
        %764 = vmatmul.bf16.gmra.mxu0 %v684
        %v765 = vpop.f32.mrf.mxu0
        %v766 = vadd.f32 0.0, %v765
        %v767 = vpop.f32.mrf.mxu0
        %v768 = vadd.f32 0.0, %v767
        %769 = vmatmul.bf16.gmra.mxu0 %v685
        %v770 = vpop.f32.mrf.mxu0
        %v771 = vadd.f32 0.0, %v770
        %v772 = vpop.f32.mrf.mxu0
        %v773 = vadd.f32 0.0, %v772
        %774 = vmatmul.bf16.gmra.mxu0 %v686
        %v775 = vpop.f32.mrf.mxu0
        %v776 = vadd.f32 0.0, %v775
        %v777 = vpop.f32.mrf.mxu0
        %v778 = vadd.f32 0.0, %v777
        %779 = vmatmul.bf16.gmra.mxu0 %v687
        %v780 = vpop.f32.mrf.mxu0
        %v781 = vadd.f32 0.0, %v780
        %v782 = vpop.f32.mrf.mxu0
        %v783 = vadd.f32 0.0, %v782
        %784 = vmatmul.bf16.gmra.mxu0 %v688
        %v785 = vpop.f32.mrf.mxu0
        %v786 = vadd.f32 0.0, %v785
        %v787 = vpop.f32.mrf.mxu0
        %v788 = vadd.f32 0.0, %v787
        %789 = vmatmul.bf16.gmra.mxu0 %v689
        %v790 = vpop.f32.mrf.mxu0
        %v791 = vadd.f32 0.0, %v790
        %v792 = vpop.f32.mrf.mxu0
        %v793 = vadd.f32 0.0, %v792
        %794 = vmatmul.bf16.gmra.mxu0 %v690
        %v795 = vpop.f32.mrf.mxu0
        %v796 = vadd.f32 0.0, %v795
        %v797 = vpop.f32.mrf.mxu0
        %v798 = vadd.f32 0.0, %v797
        %799 = vmatmul.bf16.gmra.mxu0 %v691
        %v800 = vpop.f32.mrf.mxu0
        %v801 = vadd.f32 0.0, %v800
        %v802 = vpop.f32.mrf.mxu0
        %v803 = vadd.f32 0.0, %v802
        %804 = vmatmul.bf16.gmra.mxu0 %v692
        %v805 = vpop.f32.mrf.mxu0
        %v806 = vadd.f32 0.0, %v805
        %v807 = vpop.f32.mrf.mxu0
        %808 = vdwg.mxu0
        %v828 = vunpack.c.l.b16 %v575
        %v829 = vunpack.c.l.b16 %v576
        %v830 = vunpack.c.l.b16 %v577
        %v831 = vunpack.c.l.b16 %v578
        %v832 = vunpack.c.l.b16 %v579
        %v833 = vunpack.c.l.b16 %v580
        %v834 = vunpack.c.l.b16 %v581
        %v835 = vunpack.c.l.b16 %v582
        %v836 = vunpack.c.l.b16 %v583
        %v837 = vunpack.c.l.b16 %v584
        %v838 = vunpack.c.l.b16 %v585
        %v839 = vunpack.c.l.b16 %v586
        %v840 = vunpack.c.l.b16 %v587
        %v841 = vunpack.c.l.b16 %v588
        %v842 = vunpack.c.l.b16 %v589
        %v843 = vunpack.c.l.b16 %v590
        %v844 = vunpack.c.l.b16 %v591
        %v845 = vunpack.c.l.b16 %v592
        %v846 = vunpack.c.l.b16 %v593
        %v847 = vpack.c.b16 %v829, %v828
        %v848 = vpack.c.b16 %v831, %v830
        %v849 = vpack.c.b16 %v833, %v832
        %v850 = vpack.c.b16 %v835, %v834
        %v851 = vpack.c.b16 %v837, %v836
        %v852 = vpack.c.b16 %v839, %v838
        %v853 = vpack.c.b16 %v841, %v840
        %v854 = vpack.c.b16 %v843, %v842
        %v855 = vpack.c.b16 %v845, %v844
        %v856 = vpack.c.b16 %v846, %v846
        %v883 = vunpack.c.l.b16 %v594
        %v884 = vunpack.c.l.b16 %v595
        %v885 = vunpack.c.l.b16 %v596
        %v886 = vunpack.c.l.b16 %v597
        %v887 = vunpack.c.l.b16 %v598
        %v888 = vunpack.c.l.b16 %v599
        %v889 = vunpack.c.l.b16 %v600
        %v890 = vunpack.c.l.b16 %v601
        %v891 = vunpack.c.l.b16 %v602
        %v892 = vunpack.c.l.b16 %v603
        %v893 = vunpack.c.l.b16 %v604
        %v894 = vunpack.c.l.b16 %v605
        %v895 = vunpack.c.l.b16 %v606
        %v896 = vunpack.c.l.b16 %v607
        %v897 = vunpack.c.l.b16 %v608
        %v898 = vunpack.c.l.b16 %v609
        %v899 = vpack.c.b16 %v884, %v883
        %v900 = vpack.c.b16 %v886, %v885
        %v901 = vpack.c.b16 %v888, %v887
        %v902 = vpack.c.b16 %v890, %v889
        %v903 = vpack.c.b16 %v892, %v891
        %v904 = vpack.c.b16 %v894, %v893
        %v905 = vpack.c.b16 %v896, %v895
        %v906 = vpack.c.b16 %v898, %v897
        %915 = vmatpush.bf16.msra.mxu0 %v906
        %916 = vmatpush.bf16.msra.mxu0 %v905
        %917 = vmatpush.bf16.msra.mxu0 %v904
        %918 = vmatpush.bf16.msra.mxu0 %v903
        %919 = vmatpush.bf16.msra.mxu0 %v902
        %920 = vmatpush.bf16.msra.mxu0 %v901
        %921 = vmatpush.bf16.msra.mxu0 %v900
        %922 = vmatpush.bf16.msra.mxu0 %v899
        %923 = vmatmul.bf16.gmra.mxu0 %v847
        %v924 = vpop.f32.mrf.mxu0
        %v925 = vadd.f32 %v761, %v924
        %v926 = vpop.f32.mrf.mxu0
        %v927 = vadd.f32 %v763, %v926
        %928 = vmatmul.bf16.gmra.mxu0 %v848
        %v929 = vpop.f32.mrf.mxu0
        %v930 = vadd.f32 %v766, %v929
        %v931 = vpop.f32.mrf.mxu0
        %v932 = vadd.f32 %v768, %v931
        %933 = vmatmul.bf16.gmra.mxu0 %v849
        %v934 = vpop.f32.mrf.mxu0
        %v935 = vadd.f32 %v771, %v934
        %v936 = vpop.f32.mrf.mxu0
        %v937 = vadd.f32 %v773, %v936
        %938 = vmatmul.bf16.gmra.mxu0 %v850
        %v939 = vpop.f32.mrf.mxu0
        %v940 = vadd.f32 %v776, %v939
        %v941 = vpop.f32.mrf.mxu0
        %v942 = vadd.f32 %v778, %v941
        %943 = vmatmul.bf16.gmra.mxu0 %v851
        %v944 = vpop.f32.mrf.mxu0
        %v945 = vadd.f32 %v781, %v944
        %v946 = vpop.f32.mrf.mxu0
        %v947 = vadd.f32 %v783, %v946
        %948 = vmatmul.bf16.gmra.mxu0 %v852
        %v949 = vpop.f32.mrf.mxu0
        %v950 = vadd.f32 %v786, %v949
        %v951 = vpop.f32.mrf.mxu0
        %v952 = vadd.f32 %v788, %v951
        %953 = vmatmul.bf16.gmra.mxu0 %v853
        %v954 = vpop.f32.mrf.mxu0
        %v955 = vadd.f32 %v791, %v954
        %v956 = vpop.f32.mrf.mxu0
        %v957 = vadd.f32 %v793, %v956
        %958 = vmatmul.bf16.gmra.mxu0 %v854
        %v959 = vpop.f32.mrf.mxu0
        %v960 = vadd.f32 %v796, %v959
        %v961 = vpop.f32.mrf.mxu0
        %v962 = vadd.f32 %v798, %v961
        %963 = vmatmul.bf16.gmra.mxu0 %v855
        %v964 = vpop.f32.mrf.mxu0
        %v965 = vadd.f32 %v801, %v964
        %v966 = vpop.f32.mrf.mxu0
        %v967 = vadd.f32 %v803, %v966
        %968 = vmatmul.bf16.gmra.mxu0 %v856
        %v969 = vpop.f32.mrf.mxu0
        %v970 = vadd.f32 %v806, %v969
        %v971 = vpop.f32.mrf.mxu0
        %972 = vdwg.mxu0
        %v973 = vld [vmem:[%s496] sm:$0xf]
        %v974 = vld [vmem:[%s496 + $0x4] sm:$0xf]
        %v975 = vld [vmem:[%s496 + $0x8] sm:$0xf]
        %v976 = vld [vmem:[%s496 + $0xc] sm:$0xf]
        %v977 = vld [vmem:[%s496 + $0x10] sm:$0xf]
        %v978 = vld [vmem:[%s496 + $0x14] sm:$0xf]
        %v979 = vld [vmem:[%s496 + $0x18] sm:$0xf]
        %v980 = vld [vmem:[%s496 + $0x1c] sm:$0xf]
        %v981 = vld [vmem:[%s496 + $0x20] sm:$0xf]
        %v982 = vld [vmem:[%s496 + $0x24] sm:$0xf]
        %v983 = vld [vmem:[%s496 + $0x28] sm:$0xf]
        %v984 = vld [vmem:[%s496 + $0x2c] sm:$0xf]
        %v985 = vld [vmem:[%s496 + $0x30] sm:$0xf]
        %v986 = vld [vmem:[%s496 + $0x34] sm:$0xf]
        %v987 = vld [vmem:[%s496 + $0x38] sm:$0xf]
        %v988 = vld [vmem:[%s496 + $0x3c] sm:$0xf]
        %v989 = vld [vmem:[%s496 + $0x40] sm:$0xf]
        %v990 = vld [vmem:[%s496 + $0x44] sm:$0xf]
        %v991 = vld [vmem:[%s496 + $0x48] sm:$0xf]
        %v992 = vld [vmem:[#allocation11] sm:$0xf]
        %v993 = vld [vmem:[#allocation11 + $0x4] sm:$0xf]
        %v994 = vld [vmem:[#allocation11 + $0x8] sm:$0xf]
        %v995 = vld [vmem:[#allocation11 + $0xc] sm:$0xf]
        %v996 = vld [vmem:[#allocation11 + $0x10] sm:$0xf]
        %v997 = vld [vmem:[#allocation11 + $0x14] sm:$0xf]
        %v998 = vld [vmem:[#allocation11 + $0x18] sm:$0xf]
        %v999 = vld [vmem:[#allocation11 + $0x1c] sm:$0xf]
        %v1000 = vld [vmem:[#allocation11 + $0x20] sm:$0xf]
        %v1001 = vld [vmem:[#allocation11 + $0x24] sm:$0xf]
        %v1002 = vld [vmem:[#allocation11 + $0x28] sm:$0xf]
        %v1003 = vld [vmem:[#allocation11 + $0x2c] sm:$0xf]
        %v1004 = vld [vmem:[#allocation11 + $0x30] sm:$0xf]
        %v1005 = vld [vmem:[#allocation11 + $0x34] sm:$0xf]
        %v1006 = vld [vmem:[#allocation11 + $0x38] sm:$0xf]
        %v1007 = vld [vmem:[#allocation11 + $0x3c] sm:$0xf]
        %v1027 = vunpack.c.l.b16 %v973
        %v1028 = vunpack.c.l.b16 %v974
        %v1029 = vunpack.c.l.b16 %v975
        %v1030 = vunpack.c.l.b16 %v976
        %v1031 = vunpack.c.l.b16 %v977
        %v1032 = vunpack.c.l.b16 %v978
        %v1033 = vunpack.c.l.b16 %v979
        %v1034 = vunpack.c.l.b16 %v980
        %v1035 = vunpack.c.l.b16 %v981
        %v1036 = vunpack.c.l.b16 %v982
        %v1037 = vunpack.c.l.b16 %v983
        %v1038 = vunpack.c.l.b16 %v984
        %v1039 = vunpack.c.l.b16 %v985
        %v1040 = vunpack.c.l.b16 %v986
        %v1041 = vunpack.c.l.b16 %v987
        %v1042 = vunpack.c.l.b16 %v988
        %v1043 = vunpack.c.l.b16 %v989
        %v1044 = vunpack.c.l.b16 %v990
        %v1045 = vunpack.c.l.b16 %v991
        %v1046 = vpack.c.b16 %v1028, %v1027
        %v1047 = vpack.c.b16 %v1030, %v1029
        %v1048 = vpack.c.b16 %v1032, %v1031
        %v1049 = vpack.c.b16 %v1034, %v1033
        %v1050 = vpack.c.b16 %v1036, %v1035
        %v1051 = vpack.c.b16 %v1038, %v1037
        %v1052 = vpack.c.b16 %v1040, %v1039
        %v1053 = vpack.c.b16 %v1042, %v1041
        %v1054 = vpack.c.b16 %v1044, %v1043
        %v1055 = vpack.c.b16 %v1045, %v1045
        %v1082 = vunpack.c.l.b16 %v992
        %v1083 = vunpack.c.l.b16 %v993
        %v1084 = vunpack.c.l.b16 %v994
        %v1085 = vunpack.c.l.b16 %v995
        %v1086 = vunpack.c.l.b16 %v996
        %v1087 = vunpack.c.l.b16 %v997
        %v1088 = vunpack.c.l.b16 %v998
        %v1089 = vunpack.c.l.b16 %v999
        %v1090 = vunpack.c.l.b16 %v1000
        %v1091 = vunpack.c.l.b16 %v1001
        %v1092 = vunpack.c.l.b16 %v1002
        %v1093 = vunpack.c.l.b16 %v1003
        %v1094 = vunpack.c.l.b16 %v1004
        %v1095 = vunpack.c.l.b16 %v1005
        %v1096 = vunpack.c.l.b16 %v1006
        %v1097 = vunpack.c.l.b16 %v1007
        %v1098 = vpack.c.b16 %v1083, %v1082
        %v1099 = vpack.c.b16 %v1085, %v1084
        %v1100 = vpack.c.b16 %v1087, %v1086
        %v1101 = vpack.c.b16 %v1089, %v1088
        %v1102 = vpack.c.b16 %v1091, %v1090
        %v1103 = vpack.c.b16 %v1093, %v1092
        %v1104 = vpack.c.b16 %v1095, %v1094
        %v1105 = vpack.c.b16 %v1097, %v1096
        %1114 = vmatpush.bf16.msra.mxu0 %v1105
        %1115 = vmatpush.bf16.msra.mxu0 %v1104
        %1116 = vmatpush.bf16.msra.mxu0 %v1103
        %1117 = vmatpush.bf16.msra.mxu0 %v1102
        %1118 = vmatpush.bf16.msra.mxu0 %v1101
        %1119 = vmatpush.bf16.msra.mxu0 %v1100
        %1120 = vmatpush.bf16.msra.mxu0 %v1099
        %1121 = vmatpush.bf16.msra.mxu0 %v1098
        %1122 = vmatmul.bf16.gmra.mxu0 %v1046
        %v1123 = vpop.f32.mrf.mxu0
        %v1124 = vadd.f32 0.0, %v1123
        %v1125 = vpop.f32.mrf.mxu0
        %v1126 = vadd.f32 0.0, %v1125
        %1127 = vmatmul.bf16.gmra.mxu0 %v1047
        %v1128 = vpop.f32.mrf.mxu0
        %v1129 = vadd.f32 0.0, %v1128
        %v1130 = vpop.f32.mrf.mxu0
        %v1131 = vadd.f32 0.0, %v1130
        %1132 = vmatmul.bf16.gmra.mxu0 %v1048
        %v1133 = vpop.f32.mrf.mxu0
        %v1134 = vadd.f32 0.0, %v1133
        %v1135 = vpop.f32.mrf.mxu0
        %v1136 = vadd.f32 0.0, %v1135
        %1137 = vmatmul.bf16.gmra.mxu0 %v1049
        %v1138 = vpop.f32.mrf.mxu0
        %v1139 = vadd.f32 0.0, %v1138
        %v1140 = vpop.f32.mrf.mxu0
        %v1141 = vadd.f32 0.0, %v1140
        %1142 = vmatmul.bf16.gmra.mxu0 %v1050
        %v1143 = vpop.f32.mrf.mxu0
        %v1144 = vadd.f32 0.0, %v1143
        %v1145 = vpop.f32.mrf.mxu0
        %v1146 = vadd.f32 0.0, %v1145
        %1147 = vmatmul.bf16.gmra.mxu0 %v1051
        %v1148 = vpop.f32.mrf.mxu0
        %v1149 = vadd.f32 0.0, %v1148
        %v1150 = vpop.f32.mrf.mxu0
        %v1151 = vadd.f32 0.0, %v1150
        %1152 = vmatmul.bf16.gmra.mxu0 %v1052
        %v1153 = vpop.f32.mrf.mxu0
        %v1154 = vadd.f32 0.0, %v1153
        %v1155 = vpop.f32.mrf.mxu0
        %v1156 = vadd.f32 0.0, %v1155
        %1157 = vmatmul.bf16.gmra.mxu0 %v1053
        %v1158 = vpop.f32.mrf.mxu0
        %v1159 = vadd.f32 0.0, %v1158
        %v1160 = vpop.f32.mrf.mxu0
        %v1161 = vadd.f32 0.0, %v1160
        %1162 = vmatmul.bf16.gmra.mxu0 %v1054
        %v1163 = vpop.f32.mrf.mxu0
        %v1164 = vadd.f32 0.0, %v1163
        %v1165 = vpop.f32.mrf.mxu0
        %v1166 = vadd.f32 0.0, %v1165
        %1167 = vmatmul.bf16.gmra.mxu0 %v1055
        %v1168 = vpop.f32.mrf.mxu0
        %v1169 = vadd.f32 0.0, %v1168
        %v1170 = vpop.f32.mrf.mxu0
        %1171 = vdwg.mxu0
        %v1172 = vadd.f32 %v925, %v1124
        %v1173 = vadd.f32 %v927, %v1126
        %v1174 = vadd.f32 %v930, %v1129
        %v1175 = vadd.f32 %v932, %v1131
        %v1176 = vadd.f32 %v935, %v1134
        %v1177 = vadd.f32 %v937, %v1136
        %v1178 = vadd.f32 %v940, %v1139
        %v1179 = vadd.f32 %v942, %v1141
        %v1180 = vadd.f32 %v945, %v1144
        %v1181 = vadd.f32 %v947, %v1146
        %v1182 = vadd.f32 %v950, %v1149
        %v1183 = vadd.f32 %v952, %v1151
        %v1184 = vadd.f32 %v955, %v1154
        %v1185 = vadd.f32 %v957, %v1156
        %v1186 = vadd.f32 %v960, %v1159
        %v1187 = vadd.f32 %v962, %v1161
        %v1188 = vadd.f32 %v965, %v1164
        %v1189 = vadd.f32 %v967, %v1166
        %v1190 = vadd.f32 %v970, %v1169
        %v1191 = vld [vmem:[%s6] sm:$0x1]
        %v1192 = vunpack.c.l.bf16 %v1191
        %v1193 = vperm.slane %v1192, 0
        %v1194 = vadd.f32 %v1172, %v1193
        %v1195 = vadd.f32 %v1173, %v1193
        %v1196 = vadd.f32 %v1174, %v1193
        %v1197 = vadd.f32 %v1175, %v1193
        %v1198 = vadd.f32 %v1176, %v1193
        %v1199 = vadd.f32 %v1177, %v1193
        %v1200 = vadd.f32 %v1178, %v1193
        %v1201 = vadd.f32 %v1179, %v1193
        %v1202 = vadd.f32 %v1180, %v1193
        %v1203 = vadd.f32 %v1181, %v1193
        %v1204 = vadd.f32 %v1182, %v1193
        %v1205 = vadd.f32 %v1183, %v1193
        %v1206 = vadd.f32 %v1184, %v1193
        %v1207 = vadd.f32 %v1185, %v1193
        %v1208 = vadd.f32 %v1186, %v1193
        %v1209 = vadd.f32 %v1187, %v1193
        %v1210 = vadd.f32 %v1188, %v1193
        %v1211 = vadd.f32 %v1189, %v1193
        %v1212 = vadd.f32 %v1190, %v1193
        %v1213 = vmax.f32 %v1194, 0.0
        %v1214 = vmax.f32 %v1195, 0.0
        %v1215 = vmax.f32 %v1196, 0.0
        %v1216 = vmax.f32 %v1197, 0.0
        %v1217 = vmax.f32 %v1198, 0.0
        %v1218 = vmax.f32 %v1199, 0.0
        %v1219 = vmax.f32 %v1200, 0.0
        %v1220 = vmax.f32 %v1201, 0.0
        %v1221 = vmax.f32 %v1202, 0.0
        %v1222 = vmax.f32 %v1203, 0.0
        %v1223 = vmax.f32 %v1204, 0.0
        %v1224 = vmax.f32 %v1205, 0.0
        %v1225 = vmax.f32 %v1206, 0.0
        %v1226 = vmax.f32 %v1207, 0.0
        %v1227 = vmax.f32 %v1208, 0.0
        %v1228 = vmax.f32 %v1209, 0.0
        %v1229 = vmax.f32 %v1210, 0.0
        %v1230 = vmax.f32 %v1211, 0.0
        %v1231 = vmax.f32 %v1212, 0.0
        %v1232 = vpack.c.bf16 %v1214, %v1213
        %v1233 = vpack.c.bf16 %v1216, %v1215
        %v1234 = vpack.c.bf16 %v1218, %v1217
        %v1235 = vpack.c.bf16 %v1220, %v1219
        %v1236 = vpack.c.bf16 %v1222, %v1221
        %v1237 = vpack.c.bf16 %v1224, %v1223
        %v1238 = vpack.c.bf16 %v1226, %v1225
        %v1239 = vpack.c.bf16 %v1228, %v1227
        %v1240 = vpack.c.bf16 %v1230, %v1229
        %v1241 = vpack.c.bf16 %v1231, %v1231
        %v1242 = vld [vmem:[#allocation13] sm:$0xf]
        %v1243 = vld [vmem:[#allocation13 + $0x4] sm:$0xf]
        %v1244 = vld [vmem:[#allocation13 + $0x8] sm:$0xf]
        %v1245 = vld [vmem:[#allocation13 + $0xc] sm:$0xf]
        %v1246 = vld [vmem:[#allocation13 + $0x10] sm:$0xf]
        %v1247 = vld [vmem:[#allocation13 + $0x14] sm:$0xf]
        %v1248 = vld [vmem:[#allocation13 + $0x18] sm:$0xf]
        %v1249 = vld [vmem:[#allocation13 + $0x1c] sm:$0xf]
        %v1250 = vld [vmem:[#allocation13 + $0x20] sm:$0xf]
        %v1251 = vld [vmem:[#allocation13 + $0x24] sm:$0xf]
        %v1252 = vld [vmem:[#allocation13 + $0x28] sm:$0xf]
        %v1253 = vld [vmem:[#allocation13 + $0x2c] sm:$0xf]
        %v1254 = vld [vmem:[#allocation13 + $0x30] sm:$0xf]
        %v1255 = vld [vmem:[#allocation13 + $0x34] sm:$0xf]
        %v1256 = vld [vmem:[#allocation13 + $0x38] sm:$0xf]
        %v1257 = vld [vmem:[#allocation13 + $0x3c] sm:$0xf]
        %v1258 = vld [vmem:[%s8] sm:$0x1]
        %v1259 = vunpack.c.l.bf16 %v1258
        %v1260 = vperm.slane %v1259, 0
        %v1277 = vunpack.c.l.b16 %v1242
        %v1278 = vunpack.c.l.b16 %v1243
        %v1279 = vunpack.c.l.b16 %v1244
        %v1280 = vunpack.c.l.b16 %v1245
        %v1281 = vunpack.c.l.b16 %v1246
        %v1282 = vunpack.c.l.b16 %v1247
        %v1283 = vunpack.c.l.b16 %v1248
        %v1284 = vunpack.c.l.b16 %v1249
        %v1285 = vunpack.c.l.b16 %v1250
        %v1286 = vunpack.c.l.b16 %v1251
        %v1287 = vunpack.c.l.b16 %v1252
        %v1288 = vunpack.c.l.b16 %v1253
        %v1289 = vunpack.c.l.b16 %v1254
        %v1290 = vunpack.c.l.b16 %v1255
        %v1291 = vunpack.c.l.b16 %v1256
        %v1292 = vunpack.c.l.b16 %v1257
        %v1293 = vpack.c.b16 %v1278, %v1277
        %v1294 = vpack.c.b16 %v1280, %v1279
        %v1295 = vpack.c.b16 %v1282, %v1281
        %v1296 = vpack.c.b16 %v1284, %v1283
        %v1297 = vpack.c.b16 %v1286, %v1285
        %v1298 = vpack.c.b16 %v1288, %v1287
        %v1299 = vpack.c.b16 %v1290, %v1289
        %v1300 = vpack.c.b16 %v1292, %v1291
        %1309 = vmatpush.bf16.msra.mxu0 %v1300
        %1310 = vmatpush.bf16.msra.mxu0 %v1299
        %1311 = vmatpush.bf16.msra.mxu0 %v1298
        %1312 = vmatpush.bf16.msra.mxu0 %v1297
        %1313 = vmatpush.bf16.msra.mxu0 %v1296
        %1314 = vmatpush.bf16.msra.mxu0 %v1295
        %1315 = vmatpush.bf16.msra.mxu0 %v1294
        %1316 = vmatpush.bf16.msra.mxu0 %v1293
        %1317 = vmatmul.bf16.gmra.mxu0 %v1232
        %v1318 = vpop.f32.mrf.mxu0
        %v1319 = vadd.f32 %v1260, %v1318
        %v1320 = vpop.f32.mrf.mxu0
        %v1321 = vadd.f32 %v1260, %v1320
        %1322 = vmatmul.bf16.gmra.mxu0 %v1233
        %v1323 = vpop.f32.mrf.mxu0
        %v1324 = vadd.f32 %v1260, %v1323
        %v1325 = vpop.f32.mrf.mxu0
        %v1326 = vadd.f32 %v1260, %v1325
        %1327 = vmatmul.bf16.gmra.mxu0 %v1234
        %v1328 = vpop.f32.mrf.mxu0
        %v1329 = vadd.f32 %v1260, %v1328
        %v1330 = vpop.f32.mrf.mxu0
        %v1331 = vadd.f32 %v1260, %v1330
        %1332 = vmatmul.bf16.gmra.mxu0 %v1235
        %v1333 = vpop.f32.mrf.mxu0
        %v1334 = vadd.f32 %v1260, %v1333
        %v1335 = vpop.f32.mrf.mxu0
        %v1336 = vadd.f32 %v1260, %v1335
        %1337 = vmatmul.bf16.gmra.mxu0 %v1236
        %v1338 = vpop.f32.mrf.mxu0
        %v1339 = vadd.f32 %v1260, %v1338
        %v1340 = vpop.f32.mrf.mxu0
        %v1341 = vadd.f32 %v1260, %v1340
        %1342 = vmatmul.bf16.gmra.mxu0 %v1237
        %v1343 = vpop.f32.mrf.mxu0
        %v1344 = vadd.f32 %v1260, %v1343
        %v1345 = vpop.f32.mrf.mxu0
        %v1346 = vadd.f32 %v1260, %v1345
        %1347 = vmatmul.bf16.gmra.mxu0 %v1238
        %v1348 = vpop.f32.mrf.mxu0
        %v1349 = vadd.f32 %v1260, %v1348
        %v1350 = vpop.f32.mrf.mxu0
        %v1351 = vadd.f32 %v1260, %v1350
        %1352 = vmatmul.bf16.gmra.mxu0 %v1239
        %v1353 = vpop.f32.mrf.mxu0
        %v1354 = vadd.f32 %v1260, %v1353
        %v1355 = vpop.f32.mrf.mxu0
        %v1356 = vadd.f32 %v1260, %v1355
        %1357 = vmatmul.bf16.gmra.mxu0 %v1240
        %v1358 = vpop.f32.mrf.mxu0
        %v1359 = vadd.f32 %v1260, %v1358
        %v1360 = vpop.f32.mrf.mxu0
        %v1361 = vadd.f32 %v1260, %v1360
        %1362 = vmatmul.bf16.gmra.mxu0 %v1241
        %v1363 = vpop.f32.mrf.mxu0
        %v1364 = vadd.f32 %v1260, %v1363
        %v1365 = vpop.f32.mrf.mxu0
        %1366 = vdwg.mxu0
        %v1367 = vmax.f32 %v1319, 0.0
        %v1368 = vmax.f32 %v1321, 0.0
        %v1369 = vmax.f32 %v1324, 0.0
        %v1370 = vmax.f32 %v1326, 0.0
        %v1371 = vmax.f32 %v1329, 0.0
        %v1372 = vmax.f32 %v1331, 0.0
        %v1373 = vmax.f32 %v1334, 0.0
        %v1374 = vmax.f32 %v1336, 0.0
        %v1375 = vmax.f32 %v1339, 0.0
        %v1376 = vmax.f32 %v1341, 0.0
        %v1377 = vmax.f32 %v1344, 0.0
        %v1378 = vmax.f32 %v1346, 0.0
        %v1379 = vmax.f32 %v1349, 0.0
        %v1380 = vmax.f32 %v1351, 0.0
        %v1381 = vmax.f32 %v1354, 0.0
        %v1382 = vmax.f32 %v1356, 0.0
        %v1383 = vmax.f32 %v1359, 0.0
        %v1384 = vmax.f32 %v1361, 0.0
        %v1385 = vmax.f32 %v1364, 0.0
        %v1386 = vpack.c.bf16 %v1368, %v1367
        %v1387 = vpack.c.bf16 %v1370, %v1369
        %v1388 = vpack.c.bf16 %v1372, %v1371
        %v1389 = vpack.c.bf16 %v1374, %v1373
        %v1390 = vpack.c.bf16 %v1376, %v1375
        %v1391 = vpack.c.bf16 %v1378, %v1377
        %v1392 = vpack.c.bf16 %v1380, %v1379
        %v1393 = vpack.c.bf16 %v1382, %v1381
        %v1394 = vpack.c.bf16 %v1384, %v1383
        %v1395 = vpack.c.bf16 %v1385, %v1385
        %v1396 = vld [vmem:[#allocation14] sm:$0xf]
        %v1397 = vld [vmem:[#allocation14 + $0x4] sm:$0xf]
        %v1398 = vld [vmem:[#allocation14 + $0x8] sm:$0xf]
        %v1399 = vld [vmem:[#allocation14 + $0xc] sm:$0xf]
        %v1400 = vld [vmem:[#allocation14 + $0x10] sm:$0xf]
        %v1401 = vld [vmem:[#allocation14 + $0x14] sm:$0xf]
        %v1402 = vld [vmem:[#allocation14 + $0x18] sm:$0xf]
        %v1403 = vld [vmem:[#allocation14 + $0x1c] sm:$0xf]
        %v1404 = vld [vmem:[#allocation14 + $0x20] sm:$0xf]
        %v1405 = vld [vmem:[#allocation14 + $0x24] sm:$0xf]
        %v1406 = vld [vmem:[#allocation14 + $0x28] sm:$0xf]
        %v1407 = vld [vmem:[#allocation14 + $0x2c] sm:$0xf]
        %v1408 = vld [vmem:[#allocation14 + $0x30] sm:$0xf]
        %v1409 = vld [vmem:[#allocation14 + $0x34] sm:$0xf]
        %v1410 = vld [vmem:[#allocation14 + $0x38] sm:$0xf]
        %v1411 = vld [vmem:[#allocation14 + $0x3c] sm:$0xf]
        %v1412 = vld [vmem:[%s10] sm:$0x1]
        %v1413 = vunpack.c.l.bf16 %v1412
        %v1414 = vperm.slane %v1413, 0
        %v1431 = vunpack.c.l.b16 %v1396
        %v1432 = vunpack.c.l.b16 %v1397
        %v1433 = vunpack.c.l.b16 %v1398
        %v1434 = vunpack.c.l.b16 %v1399
        %v1435 = vunpack.c.l.b16 %v1400
        %v1436 = vunpack.c.l.b16 %v1401
        %v1437 = vunpack.c.l.b16 %v1402
        %v1438 = vunpack.c.l.b16 %v1403
        %v1439 = vunpack.c.l.b16 %v1404
        %v1440 = vunpack.c.l.b16 %v1405
        %v1441 = vunpack.c.l.b16 %v1406
        %v1442 = vunpack.c.l.b16 %v1407
        %v1443 = vunpack.c.l.b16 %v1408
        %v1444 = vunpack.c.l.b16 %v1409
        %v1445 = vunpack.c.l.b16 %v1410
        %v1446 = vunpack.c.l.b16 %v1411
        %v1447 = vpack.c.b16 %v1432, %v1431
        %v1448 = vpack.c.b16 %v1434, %v1433
        %v1449 = vpack.c.b16 %v1436, %v1435
        %v1450 = vpack.c.b16 %v1438, %v1437
        %v1451 = vpack.c.b16 %v1440, %v1439
        %v1452 = vpack.c.b16 %v1442, %v1441
        %v1453 = vpack.c.b16 %v1444, %v1443
        %v1454 = vpack.c.b16 %v1446, %v1445
        %1463 = vmatpush.bf16.msra.mxu0 %v1454
        %1464 = vmatpush.bf16.msra.mxu0 %v1453
        %1465 = vmatpush.bf16.msra.mxu0 %v1452
        %1466 = vmatpush.bf16.msra.mxu0 %v1451
        %1467 = vmatpush.bf16.msra.mxu0 %v1450
        %1468 = vmatpush.bf16.msra.mxu0 %v1449
        %1469 = vmatpush.bf16.msra.mxu0 %v1448
        %1470 = vmatpush.bf16.msra.mxu0 %v1447
        %1471 = vmatmul.bf16.gmra.mxu0 %v1386
        %v1472 = vpop.f32.mrf.mxu0
        %v1473 = vadd.f32 %v1414, %v1472
        %v1474 = vpop.f32.mrf.mxu0
        %v1475 = vadd.f32 %v1414, %v1474
        %1476 = vmatmul.bf16.gmra.mxu0 %v1387
        %v1477 = vpop.f32.mrf.mxu0
        %v1478 = vadd.f32 %v1414, %v1477
        %v1479 = vpop.f32.mrf.mxu0
        %v1480 = vadd.f32 %v1414, %v1479
        %1481 = vmatmul.bf16.gmra.mxu0 %v1388
        %v1482 = vpop.f32.mrf.mxu0
        %v1483 = vadd.f32 %v1414, %v1482
        %v1484 = vpop.f32.mrf.mxu0
        %v1485 = vadd.f32 %v1414, %v1484
        %1486 = vmatmul.bf16.gmra.mxu0 %v1389
        %v1487 = vpop.f32.mrf.mxu0
        %v1488 = vadd.f32 %v1414, %v1487
        %v1489 = vpop.f32.mrf.mxu0
        %v1490 = vadd.f32 %v1414, %v1489
        %1491 = vmatmul.bf16.gmra.mxu0 %v1390
        %v1492 = vpop.f32.mrf.mxu0
        %v1493 = vadd.f32 %v1414, %v1492
        %v1494 = vpop.f32.mrf.mxu0
        %v1495 = vadd.f32 %v1414, %v1494
        %1496 = vmatmul.bf16.gmra.mxu0 %v1391
        %v1497 = vpop.f32.mrf.mxu0
        %v1498 = vadd.f32 %v1414, %v1497
        %v1499 = vpop.f32.mrf.mxu0
        %v1500 = vadd.f32 %v1414, %v1499
        %1501 = vmatmul.bf16.gmra.mxu0 %v1392
        %v1502 = vpop.f32.mrf.mxu0
        %v1503 = vadd.f32 %v1414, %v1502
        %v1504 = vpop.f32.mrf.mxu0
        %v1505 = vadd.f32 %v1414, %v1504
        %1506 = vmatmul.bf16.gmra.mxu0 %v1393
        %v1507 = vpop.f32.mrf.mxu0
        %v1508 = vadd.f32 %v1414, %v1507
        %v1509 = vpop.f32.mrf.mxu0
        %v1510 = vadd.f32 %v1414, %v1509
        %1511 = vmatmul.bf16.gmra.mxu0 %v1394
        %v1512 = vpop.f32.mrf.mxu0
        %v1513 = vadd.f32 %v1414, %v1512
        %v1514 = vpop.f32.mrf.mxu0
        %v1515 = vadd.f32 %v1414, %v1514
        %1516 = vmatmul.bf16.gmra.mxu0 %v1395
        %v1517 = vpop.f32.mrf.mxu0
        %v1518 = vadd.f32 %v1414, %v1517
        %v1519 = vpop.f32.mrf.mxu0
        %1520 = vdwg.mxu0
        %v1521 = vpack.c.bf16 %v1473, %v1473
        %v1522 = vpack.c.bf16 %v1475, %v1475
        %v1523 = vpack.c.bf16 %v1478, %v1478
        %v1524 = vpack.c.bf16 %v1480, %v1480
        %v1525 = vpack.c.bf16 %v1483, %v1483
        %v1526 = vpack.c.bf16 %v1485, %v1485
        %v1527 = vpack.c.bf16 %v1488, %v1488
        %v1528 = vpack.c.bf16 %v1490, %v1490
        %v1529 = vpack.c.bf16 %v1493, %v1493
        %v1530 = vpack.c.bf16 %v1495, %v1495
        %v1531 = vpack.c.bf16 %v1498, %v1498
        %v1532 = vpack.c.bf16 %v1500, %v1500
        %v1533 = vpack.c.bf16 %v1503, %v1503
        %v1534 = vpack.c.bf16 %v1505, %v1505
        %v1535 = vpack.c.bf16 %v1508, %v1508
        %v1536 = vpack.c.bf16 %v1510, %v1510
        %v1537 = vpack.c.bf16 %v1513, %v1513
        %v1538 = vpack.c.bf16 %v1515, %v1515
        %v1539 = vpack.c.bf16 %v1518, %v1518
        %1540 = vst [vmem:[%s570] sm:$0xf] %v1521
        %1541 = vst [vmem:[%s570 + $0x4] sm:$0xf] %v1522
        %1542 = vst [vmem:[%s570 + $0x8] sm:$0xf] %v1523
        %1543 = vst [vmem:[%s570 + $0xc] sm:$0xf] %v1524
        %1544 = vst [vmem:[%s570 + $0x10] sm:$0xf] %v1525
        %1545 = vst [vmem:[%s570 + $0x14] sm:$0xf] %v1526
        %1546 = vst [vmem:[%s570 + $0x18] sm:$0xf] %v1527
        %1547 = vst [vmem:[%s570 + $0x1c] sm:$0xf] %v1528
        %1548 = vst [vmem:[%s570 + $0x20] sm:$0xf] %v1529
        %1549 = vst [vmem:[%s570 + $0x24] sm:$0xf] %v1530
        %1550 = vst [vmem:[%s570 + $0x28] sm:$0xf] %v1531
        %1551 = vst [vmem:[%s570 + $0x2c] sm:$0xf] %v1532
        %1552 = vst [vmem:[%s570 + $0x30] sm:$0xf] %v1533
        %1553 = vst [vmem:[%s570 + $0x34] sm:$0xf] %v1534
        %1554 = vst [vmem:[%s570 + $0x38] sm:$0xf] %v1535
        %1555 = vst [vmem:[%s570 + $0x3c] sm:$0xf] %v1536
        %1556 = vst [vmem:[%s570 + $0x40] sm:$0xf] %v1537
        %1557 = vst [vmem:[%s570 + $0x44] sm:$0xf] %v1538
        %1558 = vst [vmem:[%s570 + $0x48] sm:$0xf] %v1539
        %s1559 = sand.u32 %s288, 1
        %s1560 = scalar_lea.sflag [#allocation4], %s1559
        %s1561 = sand.u32 %s288, 1
        %s1562 = smul.addr %s1561, 76
        %s1563 = scalar_lea.vmem [#allocation16], %s1562
        // Predicated region
        $region97: #{tpu_custom_call.1} parent=63 // pred_check
          %p1564 = pneg %p298
        $region98: #{tpu_custom_call.1} parent=63 // pred_check_branch
          %1566 = sbr.rel (%p1564) target = $region100
        $region99: #{tpu_custom_call.1} parent=63 // pred_region
          %s1567 = smul.u32 19, %s34
          %1569 = vsyncadd %s1560, 0
          %s1570 = smul.addr %s1567, 4
          %s1571 = scalar_lea.hbm %s11, %s1570
          %s1572 = sshll.u32 %s1563, 4
          %s1573 = int_to_ptr.vmem [resolvable:$true] %s1572
          %s1574 = sshll.u32 %s1571, 4
          %s1575 = int_to_ptr.hbm [resolvable:$true] %s1574
          %1580 = dma.vmem_to_hbm [thread:$0]  %s1573, 1216, %s1575, %s1560, 64, 64, 4
        $region100: #{tpu_custom_call.1} parent=63 // pred_fallthru
          _
      $region64: #{tpu_custom_call.1} parent=5 // pred_fallthru
        _
      %p1581 = scmp.le.s32.totalorder 2, %s29
      // Predicated region
      $region101: #{tpu_custom_call.1} parent=5 // pred_check
        %p1582 = pneg %p1581
      $region102: #{tpu_custom_call.1} parent=5 // pred_check_branch
        %1584 = sbr.rel (%p1582) target = $region104
      $region103: #{tpu_custom_call.1} parent=5 // pred_region
        %s1585 = ssub.s32 %s29, 2
        // Predicated region
        $region105: #{tpu_custom_call.1} parent=103 // pred_check
          %p1586 = pneg %p304
        $region106: #{tpu_custom_call.1} parent=103 // pred_check_branch
          %1588 = sbr.rel (%p1586) target = $region108
        $region107: #{tpu_custom_call.1} parent=103 // pred_region
          %s1589 = sand.u32 %s289, 1
          %s1590 = scalar_lea.sflag [#allocation4], %s1589
          %s1591 = sand.u32 %s289, 1
          %s1592 = smul.addr %s1591, 76
          %s1593 = scalar_lea.vmem [#allocation16], %s1592
          %1595 = dma.done %s1590, 1216
        $region108: #{tpu_custom_call.1} parent=103 // pred_fallthru
          _
      $region104: #{tpu_custom_call.1} parent=5 // pred_fallthru
        _
    $region6: #{tpu_custom_call.1} parent=1 // loop_footer
      %s33 = sadd.s32 1, %s29
    $region7: #{tpu_custom_call.1} parent=1 // loop_footer_branch
      %28 = sbr.rel target = $region3
    $region8: #{tpu_custom_call.1} parent=1 // loop_exit
      _
    %1596 = vsyncpa [#allocation3], 1
    %s1597 = scalar_lea.sflag [#allocation3], 1
    %1598 = vsyncpa %s1597, 1
    %1599 = vsyncpa [#allocation6], 1
    %s1600 = scalar_lea.sflag [#allocation6], 1
    %1601 = vsyncpa %s1600, 1
    %1602 = vsyncpa [#allocation9], 1
    %1603 = vsyncpa [#allocation12], 1
    %1604 = vsyncpa [#allocation15], 1
    %1605 = vsyncpa [#allocation4], 1
    %s1606 = scalar_lea.sflag [#allocation4], 1
    %1607 = vsyncpa %s1606, 1

// kernel: tpu_custom_call.1
$region0: #{tpu_custom_call.1}
  #allocation0 [shape = 'u32[]', space=smem, size = 0x4, offset = 0x4, fixed_abs, tag = 'smem constant byte address 0x4 - core index']
  #allocation1 [shape = 'u32[72,128]{1,0:T(1,128)}', space=vmem, size = 0x9000, scoped, tag = 'internal scratch']
  %s0 = inlined_call_operand.hbm [shape: bf16[300,128], index: 0, kind: input, shape index: {}]
  %s1 = inlined_call_operand.hbm [shape: bf16[300,128], index: 1, kind: input, shape index: {}]
  %s2 = inlined_call_operand.hbm [shape: bf16[300,128], index: 2, kind: input, shape index: {}]
  %s3 = inlined_call_operand.hbm [shape: bf16[128,128], index: 3, kind: input, shape index: {}]
  %s4 = inlined_call_operand.hbm [shape: bf16[128,128], index: 4, kind: input, shape index: {}]
  %s5 = inlined_call_operand.hbm [shape: bf16[128,128], index: 5, kind: input, shape index: {}]
  %s6 = inlined_call_operand.vmem [shape: bf16[1,128], index: 6, kind: input, shape index: {}]
  %s7 = inlined_call_operand.hbm [shape: bf16[1,128,128], index: 7, kind: input, shape index: {}]
  %s8 = inlined_call_operand.vmem [shape: bf16[1,1,128], index: 8, kind: input, shape index: {}]
  %s9 = inlined_call_operand.hbm [shape: bf16[128,128], index: 9, kind: input, shape index: {}]
  %s10 = inlined_call_operand.vmem [shape: bf16[1,128], index: 10, kind: input, shape index: {}]
  %s11 = inlined_call_operand.hbm [shape: bf16[300,128], index: 11, kind: output, shape index: {}]
  %s12 = sld [smem:[#allocation0]]
  $region109: #{tpu_custom_call.1} parent=0
    _
  %s14 = ssub.s32 1, %s12
  %s15 = scalar_select 0, %s14, %s12
  $region1: #{tpu_custom_call.1} parent=0
    #allocation2 [shape = 'u8[77824]{0}', space=vmem, size = 0x13000, scoped, tag = 'input window, operand 0']
    #allocation3 [shape = 's32[2]{0}', space=sflag, size = 0x8, scoped, tag = 'scoped memory for tpu_custom_call.1']
    #allocation4 [shape = 's32[2]{0}', space=sflag, size = 0x8, scoped, tag = 'scoped memory for tpu_custom_call.1']
    #allocation5 [shape = 'u8[77824]{0}', space=vmem, size = 0x13000, scoped, tag = 'input window, operand 1']
    #allocation6 [shape = 's32[2]{0}', space=sflag, size = 0x8, scoped, tag = 'scoped memory for tpu_custom_call.1']
    #allocation7 [shape = 'u8[77824]{0}', space=vmem, size = 0x13000, scoped, tag = 'input window, operand 2']
    #allocation8 [shape = 'u8[32768]{0}', space=vmem, size = 0x8000, scoped, tag = 'input window, operand 3, single buffered']
    #allocation9 [shape = 's32[1]{0}', space=sflag, size = 0x4, scoped, tag = 'scoped memory for tpu_custom_call.1']
    #allocation10 [shape = 'u8[32768]{0}', space=vmem, size = 0x8000, scoped, tag = 'input window, operand 4, single buffered']
    #allocation11 [shape = 'u8[32768]{0}', space=vmem, size = 0x8000, scoped, tag = 'input window, operand 5, single buffered']
    #allocation12 [shape = 's32[1]{0}', space=sflag, size = 0x4, scoped, tag = 'scoped memory for tpu_custom_call.1']
    #allocation13 [shape = 'u8[32768]{0}', space=vmem, size = 0x8000, scoped, tag = 'input window, operand 7, single buffered']
    #allocation14 [shape = 'u8[32768]{0}', space=vmem, size = 0x8000, scoped, tag = 'input window, operand 9, single buffered']
    #allocation15 [shape = 's32[1]{0}', space=sflag, size = 0x4, scoped, tag = 'scoped memory for tpu_custom_call.1']
    #allocation16 [shape = 'u8[77824]{0}', space=vmem, size = 0x13000, scoped, tag = 'output window, operand 0']
    %16 = vsyncpa [#allocation3], 0
    %s17 = scalar_lea.sflag [#allocation3], 1
    %18 = vsyncpa %s17, 0
    %19 = vsyncpa [#allocation6], 0
    %s20 = scalar_lea.sflag [#allocation6], 1
    %21 = vsyncpa %s20, 0
    %22 = vsyncpa [#allocation9], 0
    %23 = vsyncpa [#allocation12], 0
    %24 = vsyncpa [#allocation15], 0
    %25 = vsyncpa [#allocation4], 0
    %s26 = scalar_lea.sflag [#allocation4], 1
    %27 = vsyncpa %s26, 0
    loop: start=0, step=1, limit=4
    $region2: #{tpu_custom_call.1} parent=1 // loop_pre_header
      _
    $region3: #{tpu_custom_call.1} parent=1 // loop_header
      %s29 = sphi 0, %s33
      %p30 = scmp.ge.s32.totalorder %s29, 4
      %s39 = sphi 0, %s41
      %s42 = sphi 0, %s39
      %s43 = sphi 0, %s42
      %s59 = sphi 0, %s43
      %s65 = sphi 0, %s67
      %s68 = sphi 0, %s65
      %s69 = sphi 0, %s68
      %s85 = sphi 0, %s69
      %s91 = sphi 0, %s93
      %s94 = sphi 0, %s91
      %s95 = sphi 0, %s94
      %s111 = sphi 0, %s95
      %s115 = sphi 0, %s115
      %s117 = sphi 0, %s115
      %s118 = sphi 0, %s117
      %s132 = sphi 0, %s118
      %s136 = sphi 0, %s136
      %s138 = sphi 0, %s136
      %s139 = sphi 0, %s138
      %s153 = sphi 0, %s139
      %s157 = sphi 0, %s157
      %s159 = sphi 0, %s157
      %s160 = sphi 0, %s159
      %s174 = sphi 0, %s160
      %s178 = sphi 0, %s178
      %s180 = sphi 0, %s178
      %s181 = sphi 0, %s180
      %s195 = sphi 0, %s181
      %s199 = sphi 0, %s199
      %s201 = sphi 0, %s199
      %s202 = sphi 0, %s201
      %s216 = sphi 0, %s202
      %s220 = sphi 0, %s220
      %s222 = sphi 0, %s220
      %s223 = sphi 0, %s222
      %s237 = sphi 0, %s223
      %s241 = sphi 0, %s241
      %s243 = sphi 0, %s241
      %s244 = sphi 0, %s243
      %s258 = sphi 0, %s244
      %s262 = sphi 0, %s262
      %s264 = sphi 0, %s262
      %s265 = sphi 0, %s264
      %s279 = sphi 0, %s265
      %s285 = sphi 0, %s287
      %s288 = sphi 0, %s285
      %s289 = sphi 0, %s288
      %s305 = sphi 0, %s289
    $region4: #{tpu_custom_call.1} parent=1 // loop_header_branch
      %32 = sbr.rel (%p30) target = $region8
    $region5: #{tpu_custom_call.1} parent=1 // loop_body
      %s34 = ssub.s32 %s29, 1
      %s35 = ssub.s32 %s29, 2
      %s36 = sadd.s32 %s29, 1
      %s37 = ssub.s32 %s29, %s36
      %p38 = scmp.eq.s32.totalorder %s37, 0
      %s40 = sadd.s32 %s39, 1
      %s41 = scalar_select %p38, %s39, %s40
      %p44 = pneg %p38
      %p45 = scmp.eq.s32.totalorder %s29, 1
      %p46 = por %p44, %p45
      %p47 = scmp.ne.s32.totalorder %s39, %s42
      %p48 = scmp.eq.s32.totalorder %s29, 0
      %p49 = por %p47, %p48
      %p50 = scmp.ne.s32.totalorder %s39, %s42
      %p51 = scmp.eq.s32.totalorder %s34, 1
      %p52 = por %p50, %p51
      %p53 = scmp.ne.s32.totalorder %s42, %s43
      %p54 = scmp.eq.s32.totalorder %s34, 0
      %p55 = por %p53, %p54
      %p56 = scmp.ne.s32.totalorder %s42, %s43
      %p57 = scmp.eq.s32.totalorder %s35, 1
      %p58 = por %p56, %p57
      %p60 = scmp.ne.s32.totalorder %s43, %s59
      %p61 = scmp.eq.s32.totalorder %s35, 0
      %p62 = por %p60, %p61
      %s63 = ssub.s32 %s29, %s36
      %p64 = scmp.eq.s32.totalorder %s63, 0
      %s66 = sadd.s32 %s65, 1
      %s67 = scalar_select %p64, %s65, %s66
      %p70 = pneg %p64
      %p71 = scmp.eq.s32.totalorder %s29, 1
      %p72 = por %p70, %p71
      %p73 = scmp.ne.s32.totalorder %s65, %s68
      %p74 = scmp.eq.s32.totalorder %s29, 0
      %p75 = por %p73, %p74
      %p76 = scmp.ne.s32.totalorder %s65, %s68
      %p77 = scmp.eq.s32.totalorder %s34, 1
      %p78 = por %p76, %p77
      %p79 = scmp.ne.s32.totalorder %s68, %s69
      %p80 = scmp.eq.s32.totalorder %s34, 0
      %p81 = por %p79, %p80
      %p82 = scmp.ne.s32.totalorder %s68, %s69
      %p83 = scmp.eq.s32.totalorder %s35, 1
      %p84 = por %p82, %p83
      %p86 = scmp.ne.s32.totalorder %s69, %s85
      %p87 = scmp.eq.s32.totalorder %s35, 0
      %p88 = por %p86, %p87
      %s89 = ssub.s32 %s29, %s36
      %p90 = scmp.eq.s32.totalorder %s89, 0
      %s92 = sadd.s32 %s91, 1
      %s93 = scalar_select %p90, %s91, %s92
      %p96 = pneg %p90
      %p97 = scmp.eq.s32.totalorder %s29, 1
      %p98 = por %p96, %p97
      %p99 = scmp.ne.s32.totalorder %s91, %s94
      %p100 = scmp.eq.s32.totalorder %s29, 0
      %p101 = por %p99, %p100
      %p102 = scmp.ne.s32.totalorder %s91, %s94
      %p103 = scmp.eq.s32.totalorder %s34, 1
      %p104 = por %p102, %p103
      %p105 = scmp.ne.s32.totalorder %s94, %s95
      %p106 = scmp.eq.s32.totalorder %s34, 0
      %p107 = por %p105, %p106
      %p108 = scmp.ne.s32.totalorder %s94, %s95
      %p109 = scmp.eq.s32.totalorder %s35, 1
      %p110 = por %p108, %p109
      %p112 = scmp.ne.s32.totalorder %s95, %s111
      %p113 = scmp.eq.s32.totalorder %s35, 0
      %p114 = por %p112, %p113
      %s116 = sadd.s32 %s115, 1
      %p119 = scmp.eq.s32.totalorder %s29, 1
      %p120 = scmp.ne.s32.totalorder %s115, %s117
      %p121 = scmp.eq.s32.totalorder %s29, 0
      %p122 = por %p120, %p121
      %p123 = scmp.ne.s32.totalorder %s115, %s117
      %p124 = scmp.eq.s32.totalorder %s34, 1
      %p125 = por %p123, %p124
      %p126 = scmp.ne.s32.totalorder %s117, %s118
      %p127 = scmp.eq.s32.totalorder %s34, 0
      %p128 = por %p126, %p127
      %p129 = scmp.ne.s32.totalorder %s117, %s118
      %p130 = scmp.eq.s32.totalorder %s35, 1
      %p131 = por %p129, %p130
      %p133 = scmp.ne.s32.totalorder %s118, %s132
      %p134 = scmp.eq.s32.totalorder %s35, 0
      %p135 = por %p133, %p134
      %s137 = sadd.s32 %s136, 1
      %p140 = scmp.eq.s32.totalorder %s29, 1
      %p141 = scmp.ne.s32.totalorder %s136, %s138
      %p142 = scmp.eq.s32.totalorder %s29, 0
      %p143 = por %p141, %p142
      %p144 = scmp.ne.s32.totalorder %s136, %s138
      %p145 = scmp.eq.s32.totalorder %s34, 1
      %p146 = por %p144, %p145
      %p147 = scmp.ne.s32.totalorder %s138, %s139
      %p148 = scmp.eq.s32.totalorder %s34, 0
      %p149 = por %p147, %p148
      %p150 = scmp.ne.s32.totalorder %s138, %s139
      %p151 = scmp.eq.s32.totalorder %s35, 1
      %p152 = por %p150, %p151
      %p154 = scmp.ne.s32.totalorder %s139, %s153
      %p155 = scmp.eq.s32.totalorder %s35, 0
      %p156 = por %p154, %p155
      %s158 = sadd.s32 %s157, 1
      %p161 = scmp.eq.s32.totalorder %s29, 1
      %p162 = scmp.ne.s32.totalorder %s157, %s159
      %p163 = scmp.eq.s32.totalorder %s29, 0
      %p164 = por %p162, %p163
      %p165 = scmp.ne.s32.totalorder %s157, %s159
      %p166 = scmp.eq.s32.totalorder %s34, 1
      %p167 = por %p165, %p166
      %p168 = scmp.ne.s32.totalorder %s159, %s160
      %p169 = scmp.eq.s32.totalorder %s34, 0
      %p170 = por %p168, %p169
      %p171 = scmp.ne.s32.totalorder %s159, %s160
      %p172 = scmp.eq.s32.totalorder %s35, 1
      %p173 = por %p171, %p172
      %p175 = scmp.ne.s32.totalorder %s160, %s174
      %p176 = scmp.eq.s32.totalorder %s35, 0
      %p177 = por %p175, %p176
      %s179 = sadd.s32 %s178, 1
      %p182 = scmp.eq.s32.totalorder %s29, 1
      %p183 = scmp.ne.s32.totalorder %s178, %s180
      %p184 = scmp.eq.s32.totalorder %s29, 0
      %p185 = por %p183, %p184
      %p186 = scmp.ne.s32.totalorder %s178, %s180
      %p187 = scmp.eq.s32.totalorder %s34, 1
      %p188 = por %p186, %p187
      %p189 = scmp.ne.s32.totalorder %s180, %s181
      %p190 = scmp.eq.s32.totalorder %s34, 0
      %p191 = por %p189, %p190
      %p192 = scmp.ne.s32.totalorder %s180, %s181
      %p193 = scmp.eq.s32.totalorder %s35, 1
      %p194 = por %p192, %p193
      %p196 = scmp.ne.s32.totalorder %s181, %s195
      %p197 = scmp.eq.s32.totalorder %s35, 0
      %p198 = por %p196, %p197
      %s200 = sadd.s32 %s199, 1
      %p203 = scmp.eq.s32.totalorder %s29, 1
      %p204 = scmp.ne.s32.totalorder %s199, %s201
      %p205 = scmp.eq.s32.totalorder %s29, 0
      %p206 = por %p204, %p205
      %p207 = scmp.ne.s32.totalorder %s199, %s201
      %p208 = scmp.eq.s32.totalorder %s34, 1
      %p209 = por %p207, %p208
      %p210 = scmp.ne.s32.totalorder %s201, %s202
      %p211 = scmp.eq.s32.totalorder %s34, 0
      %p212 = por %p210, %p211
      %p213 = scmp.ne.s32.totalorder %s201, %s202
      %p214 = scmp.eq.s32.totalorder %s35, 1
      %p215 = por %p213, %p214
      %p217 = scmp.ne.s32.totalorder %s202, %s216
      %p218 = scmp.eq.s32.totalorder %s35, 0
      %p219 = por %p217, %p218
      %s221 = sadd.s32 %s220, 1
      %p224 = scmp.eq.s32.totalorder %s29, 1
      %p225 = scmp.ne.s32.totalorder %s220, %s222
      %p226 = scmp.eq.s32.totalorder %s29, 0
      %p227 = por %p225, %p226
      %p228 = scmp.ne.s32.totalorder %s220, %s222
      %p229 = scmp.eq.s32.totalorder %s34, 1
      %p230 = por %p228, %p229
      %p231 = scmp.ne.s32.totalorder %s222, %s223
      %p232 = scmp.eq.s32.totalorder %s34, 0
      %p233 = por %p231, %p232
      %p234 = scmp.ne.s32.totalorder %s222, %s223
      %p235 = scmp.eq.s32.totalorder %s35, 1
      %p236 = por %p234, %p235
      %p238 = scmp.ne.s32.totalorder %s223, %s237
      %p239 = scmp.eq.s32.totalorder %s35, 0
      %p240 = por %p238, %p239
      %s242 = sadd.s32 %s241, 1
      %p245 = scmp.eq.s32.totalorder %s29, 1
      %p246 = scmp.ne.s32.totalorder %s241, %s243
      %p247 = scmp.eq.s32.totalorder %s29, 0
      %p248 = por %p246, %p247
      %p249 = scmp.ne.s32.totalorder %s241, %s243
      %p250 = scmp.eq.s32.totalorder %s34, 1
      %p251 = por %p249, %p250
      %p252 = scmp.ne.s32.totalorder %s243, %s244
      %p253 = scmp.eq.s32.totalorder %s34, 0
      %p254 = por %p252, %p253
      %p255 = scmp.ne.s32.totalorder %s243, %s244
      %p256 = scmp.eq.s32.totalorder %s35, 1
      %p257 = por %p255, %p256
      %p259 = scmp.ne.s32.totalorder %s244, %s258
      %p260 = scmp.eq.s32.totalorder %s35, 0
      %p261 = por %p259, %p260
      %s263 = sadd.s32 %s262, 1
      %p266 = scmp.eq.s32.totalorder %s29, 1
      %p267 = scmp.ne.s32.totalorder %s262, %s264
      %p268 = scmp.eq.s32.totalorder %s29, 0
      %p269 = por %p267, %p268
      %p270 = scmp.ne.s32.totalorder %s262, %s264
      %p271 = scmp.eq.s32.totalorder %s34, 1
      %p272 = por %p270, %p271
      %p273 = scmp.ne.s32.totalorder %s264, %s265
      %p274 = scmp.eq.s32.totalorder %s34, 0
      %p275 = por %p273, %p274
      %p276 = scmp.ne.s32.totalorder %s264, %s265
      %p277 = scmp.eq.s32.totalorder %s35, 1
      %p278 = por %p276, %p277
      %p280 = scmp.ne.s32.totalorder %s265, %s279
      %p281 = scmp.eq.s32.totalorder %s35, 0
      %p282 = por %p280, %p281
      %s283 = ssub.s32 %s29, %s36
      %p284 = scmp.eq.s32.totalorder %s283, 0
      %s286 = sadd.s32 %s285, 1
      %s287 = scalar_select %p284, %s285, %s286
      %p290 = pneg %p284
      %p291 = scmp.eq.s32.totalorder %s29, 1
      %p292 = por %p290, %p291
      %p293 = scmp.ne.s32.totalorder %s285, %s288
      %p294 = scmp.eq.s32.totalorder %s29, 0
      %p295 = por %p293, %p294
      %p296 = scmp.ne.s32.totalorder %s285, %s288
      %p297 = scmp.eq.s32.totalorder %s34, 1
      %p298 = por %p296, %p297
      %p299 = scmp.ne.s32.totalorder %s288, %s289
      %p300 = scmp.eq.s32.totalorder %s34, 0
      %p301 = por %p299, %p300
      %p302 = scmp.ne.s32.totalorder %s288, %s289
      %p303 = scmp.eq.s32.totalorder %s35, 1
      %p304 = por %p302, %p303
      %p306 = scmp.ne.s32.totalorder %s289, %s305
      %p307 = scmp.eq.s32.totalorder %s35, 0
      %p308 = por %p306, %p307
      %p309 = scmp.le.s32.totalorder 1, %s29
      %p310 = scmp.lt.s32.totalorder %s29, 3
      %p311 = pnand %p309, %p310
      %p312 = pneg %p311
      // Predicated region
      $region9: #{tpu_custom_call.1} parent=5 // pred_check
        _
      $region10: #{tpu_custom_call.1} parent=5 // pred_check_branch
        %314 = sbr.rel (%p311) target = $region12
      $region11: #{tpu_custom_call.1} parent=5 // pred_region
        %s315 = ssub.s32 %s29, 1
        // Predicated region
        $region13: #{tpu_custom_call.1} parent=11 // pred_check
          %p316 = pneg %p128
        $region14: #{tpu_custom_call.1} parent=11 // pred_check_branch
          %318 = sbr.rel (%p316) target = $region16
        $region15: #{tpu_custom_call.1} parent=11 // pred_region
          %320 = vsyncadd [#allocation9], 0
          %s321 = sshll.u32 %s3, 4
          %s322 = int_to_ptr.hbm [resolvable:$true] %s321
          %s323 = sshll.u32 [#allocation8], 4
          %s324 = int_to_ptr.vmem [resolvable:$true] %s323
          %329 = dma.hbm_to_vmem [thread:$0]  %s322, 1024, %s324, [#allocation9], 64, 64, 4
        $region16: #{tpu_custom_call.1} parent=11 // pred_fallthru
          _
        // Predicated region
        $region17: #{tpu_custom_call.1} parent=11 // pred_check
          %p330 = pneg %p149
        $region18: #{tpu_custom_call.1} parent=11 // pred_check_branch
          %332 = sbr.rel (%p330) target = $region20
        $region19: #{tpu_custom_call.1} parent=11 // pred_region
          %334 = vsyncadd [#allocation9], 0
          %s335 = sshll.u32 %s4, 4
          %s336 = int_to_ptr.hbm [resolvable:$true] %s335
          %s337 = sshll.u32 [#allocation10], 4
          %s338 = int_to_ptr.vmem [resolvable:$true] %s337
          %343 = dma.hbm_to_vmem [thread:$0]  %s336, 1024, %s338, [#allocation9], 64, 64, 4
        $region20: #{tpu_custom_call.1} parent=11 // pred_fallthru
          _
        // Predicated region
        $region21: #{tpu_custom_call.1} parent=11 // pred_check
          %p344 = pneg %p170
        $region22: #{tpu_custom_call.1} parent=11 // pred_check_branch
          %346 = sbr.rel (%p344) target = $region24
        $region23: #{tpu_custom_call.1} parent=11 // pred_region
          %348 = vsyncadd [#allocation12], 0
          %s349 = sshll.u32 %s5, 4
          %s350 = int_to_ptr.hbm [resolvable:$true] %s349
          %s351 = sshll.u32 [#allocation11], 4
          %s352 = int_to_ptr.vmem [resolvable:$true] %s351
          %357 = dma.hbm_to_vmem [thread:$0]  %s350, 1024, %s352, [#allocation12], 64, 64, 4
        $region24: #{tpu_custom_call.1} parent=11 // pred_fallthru
          _
        // Predicated region
        $region25: #{tpu_custom_call.1} parent=11 // pred_check
          %p358 = pneg %p191
        $region26: #{tpu_custom_call.1} parent=11 // pred_check_branch
          %360 = sbr.rel (%p358) target = $region28
        $region27: #{tpu_custom_call.1} parent=11 // pred_region
          _
        $region28: #{tpu_custom_call.1} parent=11 // pred_fallthru
          _
        // Predicated region
        $region29: #{tpu_custom_call.1} parent=11 // pred_check
          %p361 = pneg %p212
        $region30: #{tpu_custom_call.1} parent=11 // pred_check_branch
          %363 = sbr.rel (%p361) target = $region32
        $region31: #{tpu_custom_call.1} parent=11 // pred_region
          %365 = vsyncadd [#allocation12], 0
          %s366 = sshll.u32 %s7, 4
          %s367 = int_to_ptr.hbm [resolvable:$true] %s366
          %s368 = sshll.u32 [#allocation13], 4
          %s369 = int_to_ptr.vmem [resolvable:$true] %s368
          %374 = dma.hbm_to_vmem [thread:$0]  %s367, 1024, %s369, [#allocation12], 64, 64, 4
        $region32: #{tpu_custom_call.1} parent=11 // pred_fallthru
          _
        // Predicated region
        $region33: #{tpu_custom_call.1} parent=11 // pred_check
          %p375 = pneg %p233
        $region34: #{tpu_custom_call.1} parent=11 // pred_check_branch
          %377 = sbr.rel (%p375) target = $region36
        $region35: #{tpu_custom_call.1} parent=11 // pred_region
          _
        $region36: #{tpu_custom_call.1} parent=11 // pred_fallthru
          _
        // Predicated region
        $region37: #{tpu_custom_call.1} parent=11 // pred_check
          %p378 = pneg %p254
        $region38: #{tpu_custom_call.1} parent=11 // pred_check_branch
          %380 = sbr.rel (%p378) target = $region40
        $region39: #{tpu_custom_call.1} parent=11 // pred_region
          %382 = vsyncadd [#allocation15], 0
          %s383 = sshll.u32 %s9, 4
          %s384 = int_to_ptr.hbm [resolvable:$true] %s383
          %s385 = sshll.u32 [#allocation14], 4
          %s386 = int_to_ptr.vmem [resolvable:$true] %s385
          %391 = dma.hbm_to_vmem [thread:$0]  %s384, 1024, %s386, [#allocation15], 64, 64, 4
        $region40: #{tpu_custom_call.1} parent=11 // pred_fallthru
          _
        // Predicated region
        $region41: #{tpu_custom_call.1} parent=11 // pred_check
          %p392 = pneg %p275
        $region42: #{tpu_custom_call.1} parent=11 // pred_check_branch
          %394 = sbr.rel (%p392) target = $region44
        $region43: #{tpu_custom_call.1} parent=11 // pred_region
          _
        $region44: #{tpu_custom_call.1} parent=11 // pred_fallthru
          _
      $region12: #{tpu_custom_call.1} parent=5 // pred_fallthru
        _
      %p395 = scmp.lt.s32.totalorder %s29, 2
      // Predicated region
      $region45: #{tpu_custom_call.1} parent=5 // pred_check
        %p396 = pneg %p395
      $region46: #{tpu_custom_call.1} parent=5 // pred_check_branch
        %398 = sbr.rel (%p396) target = $region48
      $region47: #{tpu_custom_call.1} parent=5 // pred_region
        // Predicated region
        $region49: #{tpu_custom_call.1} parent=47 // pred_check
          %p399 = pneg %p49
        $region50: #{tpu_custom_call.1} parent=47 // pred_check_branch
          %401 = sbr.rel (%p399) target = $region52
        $region51: #{tpu_custom_call.1} parent=47 // pred_region
          %s402 = sand.u32 %s39, 1
          %s403 = scalar_lea.sflag [#allocation3], %s402
          %s404 = sand.u32 %s39, 1
          %s405 = smul.addr %s404, 76
          %s406 = scalar_lea.vmem [#allocation2], %s405
          %s407 = smul.u32 19, %s29
          %409 = vsyncadd %s403, 0
          %s410 = smul.addr %s407, 4
          %s411 = scalar_lea.hbm %s0, %s410
          %s412 = sshll.u32 %s411, 4
          %s413 = int_to_ptr.hbm [resolvable:$true] %s412
          %s414 = sshll.u32 %s406, 4
          %s415 = int_to_ptr.vmem [resolvable:$true] %s414
          %420 = dma.hbm_to_vmem [thread:$0]  %s413, 1216, %s415, %s403, 64, 64, 4
        $region52: #{tpu_custom_call.1} parent=47 // pred_fallthru
          _
        // Predicated region
        $region53: #{tpu_custom_call.1} parent=47 // pred_check
          %p421 = pneg %p75
        $region54: #{tpu_custom_call.1} parent=47 // pred_check_branch
          %423 = sbr.rel (%p421) target = $region56
        $region55: #{tpu_custom_call.1} parent=47 // pred_region
          %s424 = sand.u32 %s29, 1
          %s425 = scalar_lea.sflag [#allocation6], %s424
          %s426 = sand.u32 %s65, 1
          %s427 = smul.addr %s426, 76
          %s428 = scalar_lea.vmem [#allocation5], %s427
          %s429 = smul.u32 19, %s29
          %431 = vsyncadd %s425, 0
          %s432 = smul.addr %s429, 4
          %s433 = scalar_lea.hbm %s1, %s432
          %s434 = sshll.u32 %s433, 4
          %s435 = int_to_ptr.hbm [resolvable:$true] %s434
          %s436 = sshll.u32 %s428, 4
          %s437 = int_to_ptr.vmem [resolvable:$true] %s436
          %442 = dma.hbm_to_vmem [thread:$0]  %s435, 1216, %s437, %s425, 64, 64, 4
        $region56: #{tpu_custom_call.1} parent=47 // pred_fallthru
          _
        // Predicated region
        $region57: #{tpu_custom_call.1} parent=47 // pred_check
          %p443 = pneg %p101
        $region58: #{tpu_custom_call.1} parent=47 // pred_check_branch
          %445 = sbr.rel (%p443) target = $region60
        $region59: #{tpu_custom_call.1} parent=47 // pred_region
          %s446 = sand.u32 %s29, 1
          %s447 = scalar_lea.sflag [#allocation6], %s446
          %s448 = sand.u32 %s91, 1
          %s449 = smul.addr %s448, 76
          %s450 = scalar_lea.vmem [#allocation7], %s449
          %s451 = smul.u32 19, %s29
          %453 = vsyncadd %s447, 0
          %s454 = smul.addr %s451, 4
          %s455 = scalar_lea.hbm %s2, %s454
          %s456 = sshll.u32 %s455, 4
          %s457 = int_to_ptr.hbm [resolvable:$true] %s456
          %s458 = sshll.u32 %s450, 4
          %s459 = int_to_ptr.vmem [resolvable:$true] %s458
          %464 = dma.hbm_to_vmem [thread:$0]  %s457, 1216, %s459, %s447, 64, 64, 4
        $region60: #{tpu_custom_call.1} parent=47 // pred_fallthru
          _
      $region48: #{tpu_custom_call.1} parent=5 // pred_fallthru
        _
      %p465 = scmp.le.s32.totalorder 1, %s29
      %p466 = scmp.lt.s32.totalorder %s29, 3
      %p467 = pnand %p465, %p466
      %p468 = pneg %p467
      // Predicated region
      $region61: #{tpu_custom_call.1} parent=5 // pred_check
        _
      $region62: #{tpu_custom_call.1} parent=5 // pred_check_branch
        %470 = sbr.rel (%p467) target = $region64
      $region63: #{tpu_custom_call.1} parent=5 // pred_region
        %s471 = ssub.s32 %s29, 1
        %s472 = sand.u32 %s42, 1
        %s473 = scalar_lea.sflag [#allocation3], %s472
        %s474 = sand.u32 %s42, 1
        %s475 = smul.addr %s474, 76
        %s476 = scalar_lea.vmem [#allocation2], %s475
        // Predicated region
        $region65: #{tpu_custom_call.1} parent=63 // pred_check
          %p477 = pneg %p55
        $region66: #{tpu_custom_call.1} parent=63 // pred_check_branch
          %479 = sbr.rel (%p477) target = $region68
        $region67: #{tpu_custom_call.1} parent=63 // pred_region
          %481 = dma.done %s473, 1216
        $region68: #{tpu_custom_call.1} parent=63 // pred_fallthru
          _
        %s482 = sand.u32 %s34, 1
        %s483 = scalar_lea.sflag [#allocation6], %s482
        %s484 = sand.u32 %s68, 1
        %s485 = smul.addr %s484, 76
        %s486 = scalar_lea.vmem [#allocation5], %s485
        // Predicated region
        $region69: #{tpu_custom_call.1} parent=63 // pred_check
          %p487 = pneg %p81
        $region70: #{tpu_custom_call.1} parent=63 // pred_check_branch
          %489 = sbr.rel (%p487) target = $region72
        $region71: #{tpu_custom_call.1} parent=63 // pred_region
          %491 = dma.done %s483, 1216
        $region72: #{tpu_custom_call.1} parent=63 // pred_fallthru
          _
        %s492 = sand.u32 %s34, 1
        %s493 = scalar_lea.sflag [#allocation6], %s492
        %s494 = sand.u32 %s94, 1
        %s495 = smul.addr %s494, 76
        %s496 = scalar_lea.vmem [#allocation7], %s495
        // Predicated region
        $region73: #{tpu_custom_call.1} parent=63 // pred_check
          %p497 = pneg %p107
        $region74: #{tpu_custom_call.1} parent=63 // pred_check_branch
          %499 = sbr.rel (%p497) target = $region76
        $region75: #{tpu_custom_call.1} parent=63 // pred_region
          %501 = dma.done %s493, 1216
        $region76: #{tpu_custom_call.1} parent=63 // pred_fallthru
          _
        // Predicated region
        $region77: #{tpu_custom_call.1} parent=63 // pred_check
          %p502 = pneg %p128
        $region78: #{tpu_custom_call.1} parent=63 // pred_check_branch
          %504 = sbr.rel (%p502) target = $region80
        $region79: #{tpu_custom_call.1} parent=63 // pred_region
          %506 = dma.done [#allocation9], 1024
        $region80: #{tpu_custom_call.1} parent=63 // pred_fallthru
          _
        // Predicated region
        $region81: #{tpu_custom_call.1} parent=63 // pred_check
          %p507 = pneg %p149
        $region82: #{tpu_custom_call.1} parent=63 // pred_check_branch
          %509 = sbr.rel (%p507) target = $region84
        $region83: #{tpu_custom_call.1} parent=63 // pred_region
          %511 = dma.done [#allocation9], 1024
        $region84: #{tpu_custom_call.1} parent=63 // pred_fallthru
          _
        // Predicated region
        $region85: #{tpu_custom_call.1} parent=63 // pred_check
          %p512 = pneg %p170
        $region86: #{tpu_custom_call.1} parent=63 // pred_check_branch
          %514 = sbr.rel (%p512) target = $region88
        $region87: #{tpu_custom_call.1} parent=63 // pred_region
          %516 = dma.done [#allocation12], 1024
        $region88: #{tpu_custom_call.1} parent=63 // pred_fallthru
          _
        // Predicated region
        $region89: #{tpu_custom_call.1} parent=63 // pred_check
          %p517 = pneg %p212
        $region90: #{tpu_custom_call.1} parent=63 // pred_check_branch
          %519 = sbr.rel (%p517) target = $region92
        $region91: #{tpu_custom_call.1} parent=63 // pred_region
          %521 = dma.done [#allocation12], 1024
        $region92: #{tpu_custom_call.1} parent=63 // pred_fallthru
          _
        // Predicated region
        $region93: #{tpu_custom_call.1} parent=63 // pred_check
          %p522 = pneg %p254
        $region94: #{tpu_custom_call.1} parent=63 // pred_check_branch
          %524 = sbr.rel (%p522) target = $region96
        $region95: #{tpu_custom_call.1} parent=63 // pred_region
          %526 = dma.done [#allocation15], 1024
        $region96: #{tpu_custom_call.1} parent=63 // pred_fallthru
          _
        %s527 = sand.u32 %s42, 1
        %s528 = scalar_lea.sflag [#allocation3], %s527
        %s529 = sand.u32 %s42, 1
        %s530 = smul.addr %s529, 76
        %s531 = scalar_lea.vmem [#allocation2], %s530
        %p532 = pneg %p55
        %p533 = pneg %p52
        %s534 = sand.u32 %s34, 1
        %s535 = scalar_lea.sflag [#allocation6], %s534
        %s536 = sand.u32 %s68, 1
        %s537 = smul.addr %s536, 76
        %s538 = scalar_lea.vmem [#allocation5], %s537
        %p539 = pneg %p81
        %p540 = pneg %p78
        %s541 = sand.u32 %s34, 1
        %s542 = scalar_lea.sflag [#allocation6], %s541
        %s543 = sand.u32 %s94, 1
        %s544 = smul.addr %s543, 76
        %s545 = scalar_lea.vmem [#allocation7], %s544
        %p546 = pneg %p107
        %p547 = pneg %p104
        %p548 = pneg %p128
        %p549 = pneg %p125
        %p550 = pneg %p149
        %p551 = pneg %p146
        %p552 = pneg %p170
        %p553 = pneg %p167
        %p554 = pneg %p191
        %p555 = pneg %p188
        %p556 = pneg %p212
        %p557 = pneg %p209
        %p558 = pneg %p233
        %p559 = pneg %p230
        %p560 = pneg %p254
        %p561 = pneg %p251
        %p562 = pneg %p275
        %p563 = pneg %p272
        %p564 = pneg %p301
        %p565 = pneg %p298
        %s566 = sand.u32 %s288, 1
        %s567 = scalar_lea.sflag [#allocation4], %s566
        %s568 = sand.u32 %s288, 1
        %s569 = smul.addr %s568, 76
        %s570 = scalar_lea.vmem [#allocation16], %s569
        %s571 = smul.u32 19, %s34
        %s572 = smul.u32 19, %s34
        %s573 = smul.u32 19, %s34
        %s574 = smul.u32 19, %s34
        %v575 = vld [vmem:[%s476] sm:$0xf]
        %v576 = vld [vmem:[%s476 + $0x4] sm:$0xf]
        %v577 = vld [vmem:[%s476 + $0x8] sm:$0xf]
        %v578 = vld [vmem:[%s476 + $0xc] sm:$0xf]
        %v579 = vld [vmem:[%s476 + $0x10] sm:$0xf]
        %v580 = vld [vmem:[%s476 + $0x14] sm:$0xf]
        %v581 = vld [vmem:[%s476 + $0x18] sm:$0xf]
        %v582 = vld [vmem:[%s476 + $0x1c] sm:$0xf]
        %v583 = vld [vmem:[%s476 + $0x20] sm:$0xf]
        %v584 = vld [vmem:[%s476 + $0x24] sm:$0xf]
        %v585 = vld [vmem:[%s476 + $0x28] sm:$0xf]
        %v586 = vld [vmem:[%s476 + $0x2c] sm:$0xf]
        %v587 = vld [vmem:[%s476 + $0x30] sm:$0xf]
        %v588 = vld [vmem:[%s476 + $0x34] sm:$0xf]
        %v589 = vld [vmem:[%s476 + $0x38] sm:$0xf]
        %v590 = vld [vmem:[%s476 + $0x3c] sm:$0xf]
        %v591 = vld [vmem:[%s476 + $0x40] sm:$0xf]
        %v592 = vld [vmem:[%s476 + $0x44] sm:$0xf]
        %v593 = vld [vmem:[%s476 + $0x48] sm:$0xf]
        %v594 = vld [vmem:[#allocation8] sm:$0xf]
        %v595 = vld [vmem:[#allocation8 + $0x4] sm:$0xf]
        %v596 = vld [vmem:[#allocation8 + $0x8] sm:$0xf]
        %v597 = vld [vmem:[#allocation8 + $0xc] sm:$0xf]
        %v598 = vld [vmem:[#allocation8 + $0x10] sm:$0xf]
        %v599 = vld [vmem:[#allocation8 + $0x14] sm:$0xf]
        %v600 = vld [vmem:[#allocation8 + $0x18] sm:$0xf]
        %v601 = vld [vmem:[#allocation8 + $0x1c] sm:$0xf]
        %v602 = vld [vmem:[#allocation8 + $0x20] sm:$0xf]
        %v603 = vld [vmem:[#allocation8 + $0x24] sm:$0xf]
        %v604 = vld [vmem:[#allocation8 + $0x28] sm:$0xf]
        %v605 = vld [vmem:[#allocation8 + $0x2c] sm:$0xf]
        %v606 = vld [vmem:[#allocation8 + $0x30] sm:$0xf]
        %v607 = vld [vmem:[#allocation8 + $0x34] sm:$0xf]
        %v608 = vld [vmem:[#allocation8 + $0x38] sm:$0xf]
        %v609 = vld [vmem:[#allocation8 + $0x3c] sm:$0xf]
        %v610 = vld [vmem:[%s486] sm:$0xf]
        %v611 = vld [vmem:[%s486 + $0x4] sm:$0xf]
        %v612 = vld [vmem:[%s486 + $0x8] sm:$0xf]
        %v613 = vld [vmem:[%s486 + $0xc] sm:$0xf]
        %v614 = vld [vmem:[%s486 + $0x10] sm:$0xf]
        %v615 = vld [vmem:[%s486 + $0x14] sm:$0xf]
        %v616 = vld [vmem:[%s486 + $0x18] sm:$0xf]
        %v617 = vld [vmem:[%s486 + $0x1c] sm:$0xf]
        %v618 = vld [vmem:[%s486 + $0x20] sm:$0xf]
        %v619 = vld [vmem:[%s486 + $0x24] sm:$0xf]
        %v620 = vld [vmem:[%s486 + $0x28] sm:$0xf]
        %v621 = vld [vmem:[%s486 + $0x2c] sm:$0xf]
        %v622 = vld [vmem:[%s486 + $0x30] sm:$0xf]
        %v623 = vld [vmem:[%s486 + $0x34] sm:$0xf]
        %v624 = vld [vmem:[%s486 + $0x38] sm:$0xf]
        %v625 = vld [vmem:[%s486 + $0x3c] sm:$0xf]
        %v626 = vld [vmem:[%s486 + $0x40] sm:$0xf]
        %v627 = vld [vmem:[%s486 + $0x44] sm:$0xf]
        %v628 = vld [vmem:[%s486 + $0x48] sm:$0xf]
        %v629 = vld [vmem:[#allocation10] sm:$0xf]
        %v630 = vld [vmem:[#allocation10 + $0x4] sm:$0xf]
        %v631 = vld [vmem:[#allocation10 + $0x8] sm:$0xf]
        %v632 = vld [vmem:[#allocation10 + $0xc] sm:$0xf]
        %v633 = vld [vmem:[#allocation10 + $0x10] sm:$0xf]
        %v634 = vld [vmem:[#allocation10 + $0x14] sm:$0xf]
        %v635 = vld [vmem:[#allocation10 + $0x18] sm:$0xf]
        %v636 = vld [vmem:[#allocation10 + $0x1c] sm:$0xf]
        %v637 = vld [vmem:[#allocation10 + $0x20] sm:$0xf]
        %v638 = vld [vmem:[#allocation10 + $0x24] sm:$0xf]
        %v639 = vld [vmem:[#allocation10 + $0x28] sm:$0xf]
        %v640 = vld [vmem:[#allocation10 + $0x2c] sm:$0xf]
        %v641 = vld [vmem:[#allocation10 + $0x30] sm:$0xf]
        %v642 = vld [vmem:[#allocation10 + $0x34] sm:$0xf]
        %v643 = vld [vmem:[#allocation10 + $0x38] sm:$0xf]
        %v644 = vld [vmem:[#allocation10 + $0x3c] sm:$0xf]
        %v664 = vunpack.c.l.b16 %v610
        %v665 = vunpack.c.l.b16 %v611
        %v666 = vunpack.c.l.b16 %v612
        %v667 = vunpack.c.l.b16 %v613
        %v668 = vunpack.c.l.b16 %v614
        %v669 = vunpack.c.l.b16 %v615
        %v670 = vunpack.c.l.b16 %v616
        %v671 = vunpack.c.l.b16 %v617
        %v672 = vunpack.c.l.b16 %v618
        %v673 = vunpack.c.l.b16 %v619
        %v674 = vunpack.c.l.b16 %v620
        %v675 = vunpack.c.l.b16 %v621
        %v676 = vunpack.c.l.b16 %v622
        %v677 = vunpack.c.l.b16 %v623
        %v678 = vunpack.c.l.b16 %v624
        %v679 = vunpack.c.l.b16 %v625
        %v680 = vunpack.c.l.b16 %v626
        %v681 = vunpack.c.l.b16 %v627
        %v682 = vunpack.c.l.b16 %v628
        %v683 = vpack.c.b16 %v665, %v664
        %v684 = vpack.c.b16 %v667, %v666
        %v685 = vpack.c.b16 %v669, %v668
        %v686 = vpack.c.b16 %v671, %v670
        %v687 = vpack.c.b16 %v673, %v672
        %v688 = vpack.c.b16 %v675, %v674
        %v689 = vpack.c.b16 %v677, %v676
        %v690 = vpack.c.b16 %v679, %v678
        %v691 = vpack.c.b16 %v681, %v680
        %v692 = vpack.c.b16 %v682, %v682
        %v719 = vunpack.c.l.b16 %v629
        %v720 = vunpack.c.l.b16 %v630
        %v721 = vunpack.c.l.b16 %v631
        %v722 = vunpack.c.l.b16 %v632
        %v723 = vunpack.c.l.b16 %v633
        %v724 = vunpack.c.l.b16 %v634
        %v725 = vunpack.c.l.b16 %v635
        %v726 = vunpack.c.l.b16 %v636
        %v727 = vunpack.c.l.b16 %v637
        %v728 = vunpack.c.l.b16 %v638
        %v729 = vunpack.c.l.b16 %v639
        %v730 = vunpack.c.l.b16 %v640
        %v731 = vunpack.c.l.b16 %v641
        %v732 = vunpack.c.l.b16 %v642
        %v733 = vunpack.c.l.b16 %v643
        %v734 = vunpack.c.l.b16 %v644
        %v735 = vpack.c.b16 %v720, %v719
        %v736 = vpack.c.b16 %v722, %v721
        %v737 = vpack.c.b16 %v724, %v723
        %v738 = vpack.c.b16 %v726, %v725
        %v739 = vpack.c.b16 %v728, %v727
        %v740 = vpack.c.b16 %v730, %v729
        %v741 = vpack.c.b16 %v732, %v731
        %v742 = vpack.c.b16 %v734, %v733
        %751 = vmatpush.bf16.msra.mxu0 %v742
        %752 = vmatpush.bf16.msra.mxu0 %v741
        %753 = vmatpush.bf16.msra.mxu0 %v740
        %754 = vmatpush.bf16.msra.mxu0 %v739
        %755 = vmatpush.bf16.msra.mxu0 %v738
        %756 = vmatpush.bf16.msra.mxu0 %v737
        %757 = vmatpush.bf16.msra.mxu0 %v736
        %758 = vmatpush.bf16.msra.mxu0 %v735
        %759 = vmatmul.bf16.gmra.mxu0 %v683
        %v760 = vpop.f32.mrf.mxu0
        %v761 = vadd.f32 0.0, %v760
        %v762 = vpop.f32.mrf.mxu0
        %v763 = vadd.f32 0.0, %v762
        %764 = vmatmul.bf16.gmra.mxu0 %v684
        %v765 = vpop.f32.mrf.mxu0
        %v766 = vadd.f32 0.0, %v765
        %v767 = vpop.f32.mrf.mxu0
        %v768 = vadd.f32 0.0, %v767
        %769 = vmatmul.bf16.gmra.mxu0 %v685
        %v770 = vpop.f32.mrf.mxu0
        %v771 = vadd.f32 0.0, %v770
        %v772 = vpop.f32.mrf.mxu0
        %v773 = vadd.f32 0.0, %v772
        %774 = vmatmul.bf16.gmra.mxu0 %v686
        %v775 = vpop.f32.mrf.mxu0
        %v776 = vadd.f32 0.0, %v775
        %v777 = vpop.f32.mrf.mxu0
        %v778 = vadd.f32 0.0, %v777
        %779 = vmatmul.bf16.gmra.mxu0 %v687
        %v780 = vpop.f32.mrf.mxu0
        %v781 = vadd.f32 0.0, %v780
        %v782 = vpop.f32.mrf.mxu0
        %v783 = vadd.f32 0.0, %v782
        %784 = vmatmul.bf16.gmra.mxu0 %v688
        %v785 = vpop.f32.mrf.mxu0
        %v786 = vadd.f32 0.0, %v785
        %v787 = vpop.f32.mrf.mxu0
        %v788 = vadd.f32 0.0, %v787
        %789 = vmatmul.bf16.gmra.mxu0 %v689
        %v790 = vpop.f32.mrf.mxu0
        %v791 = vadd.f32 0.0, %v790
        %v792 = vpop.f32.mrf.mxu0
        %v793 = vadd.f32 0.0, %v792
        %794 = vmatmul.bf16.gmra.mxu0 %v690
        %v795 = vpop.f32.mrf.mxu0
        %v796 = vadd.f32 0.0, %v795
        %v797 = vpop.f32.mrf.mxu0
        %v798 = vadd.f32 0.0, %v797
        %799 = vmatmul.bf16.gmra.mxu0 %v691
        %v800 = vpop.f32.mrf.mxu0
        %v801 = vadd.f32 0.0, %v800
        %v802 = vpop.f32.mrf.mxu0
        %v803 = vadd.f32 0.0, %v802
        %804 = vmatmul.bf16.gmra.mxu0 %v692
        %v805 = vpop.f32.mrf.mxu0
        %v806 = vadd.f32 0.0, %v805
        %v807 = vpop.f32.mrf.mxu0
        %808 = vdwg.mxu0
        %v828 = vunpack.c.l.b16 %v575
        %v829 = vunpack.c.l.b16 %v576
        %v830 = vunpack.c.l.b16 %v577
        %v831 = vunpack.c.l.b16 %v578
        %v832 = vunpack.c.l.b16 %v579
        %v833 = vunpack.c.l.b16 %v580
        %v834 = vunpack.c.l.b16 %v581
        %v835 = vunpack.c.l.b16 %v582
        %v836 = vunpack.c.l.b16 %v583
        %v837 = vunpack.c.l.b16 %v584
        %v838 = vunpack.c.l.b16 %v585
        %v839 = vunpack.c.l.b16 %v586
        %v840 = vunpack.c.l.b16 %v587
        %v841 = vunpack.c.l.b16 %v588
        %v842 = vunpack.c.l.b16 %v589
        %v843 = vunpack.c.l.b16 %v590
        %v844 = vunpack.c.l.b16 %v591
        %v845 = vunpack.c.l.b16 %v592
        %v846 = vunpack.c.l.b16 %v593
        %v847 = vpack.c.b16 %v829, %v828
        %v848 = vpack.c.b16 %v831, %v830
        %v849 = vpack.c.b16 %v833, %v832
        %v850 = vpack.c.b16 %v835, %v834
        %v851 = vpack.c.b16 %v837, %v836
        %v852 = vpack.c.b16 %v839, %v838
        %v853 = vpack.c.b16 %v841, %v840
        %v854 = vpack.c.b16 %v843, %v842
        %v855 = vpack.c.b16 %v845, %v844
        %v856 = vpack.c.b16 %v846, %v846
        %v883 = vunpack.c.l.b16 %v594
        %v884 = vunpack.c.l.b16 %v595
        %v885 = vunpack.c.l.b16 %v596
        %v886 = vunpack.c.l.b16 %v597
        %v887 = vunpack.c.l.b16 %v598
        %v888 = vunpack.c.l.b16 %v599
        %v889 = vunpack.c.l.b16 %v600
        %v890 = vunpack.c.l.b16 %v601
        %v891 = vunpack.c.l.b16 %v602
        %v892 = vunpack.c.l.b16 %v603
        %v893 = vunpack.c.l.b16 %v604
        %v894 = vunpack.c.l.b16 %v605
        %v895 = vunpack.c.l.b16 %v606
        %v896 = vunpack.c.l.b16 %v607
        %v897 = vunpack.c.l.b16 %v608
        %v898 = vunpack.c.l.b16 %v609
        %v899 = vpack.c.b16 %v884, %v883
        %v900 = vpack.c.b16 %v886, %v885
        %v901 = vpack.c.b16 %v888, %v887
        %v902 = vpack.c.b16 %v890, %v889
        %v903 = vpack.c.b16 %v892, %v891
        %v904 = vpack.c.b16 %v894, %v893
        %v905 = vpack.c.b16 %v896, %v895
        %v906 = vpack.c.b16 %v898, %v897
        %915 = vmatpush.bf16.msra.mxu0 %v906
        %916 = vmatpush.bf16.msra.mxu0 %v905
        %917 = vmatpush.bf16.msra.mxu0 %v904
        %918 = vmatpush.bf16.msra.mxu0 %v903
        %919 = vmatpush.bf16.msra.mxu0 %v902
        %920 = vmatpush.bf16.msra.mxu0 %v901
        %921 = vmatpush.bf16.msra.mxu0 %v900
        %922 = vmatpush.bf16.msra.mxu0 %v899
        %923 = vmatmul.bf16.gmra.mxu0 %v847
        %v924 = vpop.f32.mrf.mxu0
        %v925 = vadd.f32 %v761, %v924
        %v926 = vpop.f32.mrf.mxu0
        %v927 = vadd.f32 %v763, %v926
        %928 = vmatmul.bf16.gmra.mxu0 %v848
        %v929 = vpop.f32.mrf.mxu0
        %v930 = vadd.f32 %v766, %v929
        %v931 = vpop.f32.mrf.mxu0
        %v932 = vadd.f32 %v768, %v931
        %933 = vmatmul.bf16.gmra.mxu0 %v849
        %v934 = vpop.f32.mrf.mxu0
        %v935 = vadd.f32 %v771, %v934
        %v936 = vpop.f32.mrf.mxu0
        %v937 = vadd.f32 %v773, %v936
        %938 = vmatmul.bf16.gmra.mxu0 %v850
        %v939 = vpop.f32.mrf.mxu0
        %v940 = vadd.f32 %v776, %v939
        %v941 = vpop.f32.mrf.mxu0
        %v942 = vadd.f32 %v778, %v941
        %943 = vmatmul.bf16.gmra.mxu0 %v851
        %v944 = vpop.f32.mrf.mxu0
        %v945 = vadd.f32 %v781, %v944
        %v946 = vpop.f32.mrf.mxu0
        %v947 = vadd.f32 %v783, %v946
        %948 = vmatmul.bf16.gmra.mxu0 %v852
        %v949 = vpop.f32.mrf.mxu0
        %v950 = vadd.f32 %v786, %v949
        %v951 = vpop.f32.mrf.mxu0
        %v952 = vadd.f32 %v788, %v951
        %953 = vmatmul.bf16.gmra.mxu0 %v853
        %v954 = vpop.f32.mrf.mxu0
        %v955 = vadd.f32 %v791, %v954
        %v956 = vpop.f32.mrf.mxu0
        %v957 = vadd.f32 %v793, %v956
        %958 = vmatmul.bf16.gmra.mxu0 %v854
        %v959 = vpop.f32.mrf.mxu0
        %v960 = vadd.f32 %v796, %v959
        %v961 = vpop.f32.mrf.mxu0
        %v962 = vadd.f32 %v798, %v961
        %963 = vmatmul.bf16.gmra.mxu0 %v855
        %v964 = vpop.f32.mrf.mxu0
        %v965 = vadd.f32 %v801, %v964
        %v966 = vpop.f32.mrf.mxu0
        %v967 = vadd.f32 %v803, %v966
        %968 = vmatmul.bf16.gmra.mxu0 %v856
        %v969 = vpop.f32.mrf.mxu0
        %v970 = vadd.f32 %v806, %v969
        %v971 = vpop.f32.mrf.mxu0
        %972 = vdwg.mxu0
        %v973 = vld [vmem:[%s496] sm:$0xf]
        %v974 = vld [vmem:[%s496 + $0x4] sm:$0xf]
        %v975 = vld [vmem:[%s496 + $0x8] sm:$0xf]
        %v976 = vld [vmem:[%s496 + $0xc] sm:$0xf]
        %v977 = vld [vmem:[%s496 + $0x10] sm:$0xf]
        %v978 = vld [vmem:[%s496 + $0x14] sm:$0xf]
        %v979 = vld [vmem:[%s496 + $0x18] sm:$0xf]
        %v980 = vld [vmem:[%s496 + $0x1c] sm:$0xf]
        %v981 = vld [vmem:[%s496 + $0x20] sm:$0xf]
        %v982 = vld [vmem:[%s496 + $0x24] sm:$0xf]
        %v983 = vld [vmem:[%s496 + $0x28] sm:$0xf]
        %v984 = vld [vmem:[%s496 + $0x2c] sm:$0xf]
        %v985 = vld [vmem:[%s496 + $0x30] sm:$0xf]
        %v986 = vld [vmem:[%s496 + $0x34] sm:$0xf]
        %v987 = vld [vmem:[%s496 + $0x38] sm:$0xf]
        %v988 = vld [vmem:[%s496 + $0x3c] sm:$0xf]
        %v989 = vld [vmem:[%s496 + $0x40] sm:$0xf]
        %v990 = vld [vmem:[%s496 + $0x44] sm:$0xf]
        %v991 = vld [vmem:[%s496 + $0x48] sm:$0xf]
        %v992 = vld [vmem:[#allocation11] sm:$0xf]
        %v993 = vld [vmem:[#allocation11 + $0x4] sm:$0xf]
        %v994 = vld [vmem:[#allocation11 + $0x8] sm:$0xf]
        %v995 = vld [vmem:[#allocation11 + $0xc] sm:$0xf]
        %v996 = vld [vmem:[#allocation11 + $0x10] sm:$0xf]
        %v997 = vld [vmem:[#allocation11 + $0x14] sm:$0xf]
        %v998 = vld [vmem:[#allocation11 + $0x18] sm:$0xf]
        %v999 = vld [vmem:[#allocation11 + $0x1c] sm:$0xf]
        %v1000 = vld [vmem:[#allocation11 + $0x20] sm:$0xf]
        %v1001 = vld [vmem:[#allocation11 + $0x24] sm:$0xf]
        %v1002 = vld [vmem:[#allocation11 + $0x28] sm:$0xf]
        %v1003 = vld [vmem:[#allocation11 + $0x2c] sm:$0xf]
        %v1004 = vld [vmem:[#allocation11 + $0x30] sm:$0xf]
        %v1005 = vld [vmem:[#allocation11 + $0x34] sm:$0xf]
        %v1006 = vld [vmem:[#allocation11 + $0x38] sm:$0xf]
        %v1007 = vld [vmem:[#allocation11 + $0x3c] sm:$0xf]
        %v1027 = vunpack.c.l.b16 %v973
        %v1028 = vunpack.c.l.b16 %v974
        %v1029 = vunpack.c.l.b16 %v975
        %v1030 = vunpack.c.l.b16 %v976
        %v1031 = vunpack.c.l.b16 %v977
        %v1032 = vunpack.c.l.b16 %v978
        %v1033 = vunpack.c.l.b16 %v979
        %v1034 = vunpack.c.l.b16 %v980
        %v1035 = vunpack.c.l.b16 %v981
        %v1036 = vunpack.c.l.b16 %v982
        %v1037 = vunpack.c.l.b16 %v983
        %v1038 = vunpack.c.l.b16 %v984
        %v1039 = vunpack.c.l.b16 %v985
        %v1040 = vunpack.c.l.b16 %v986
        %v1041 = vunpack.c.l.b16 %v987
        %v1042 = vunpack.c.l.b16 %v988
        %v1043 = vunpack.c.l.b16 %v989
        %v1044 = vunpack.c.l.b16 %v990
        %v1045 = vunpack.c.l.b16 %v991
        %v1046 = vpack.c.b16 %v1028, %v1027
        %v1047 = vpack.c.b16 %v1030, %v1029
        %v1048 = vpack.c.b16 %v1032, %v1031
        %v1049 = vpack.c.b16 %v1034, %v1033
        %v1050 = vpack.c.b16 %v1036, %v1035
        %v1051 = vpack.c.b16 %v1038, %v1037
        %v1052 = vpack.c.b16 %v1040, %v1039
        %v1053 = vpack.c.b16 %v1042, %v1041
        %v1054 = vpack.c.b16 %v1044, %v1043
        %v1055 = vpack.c.b16 %v1045, %v1045
        %v1082 = vunpack.c.l.b16 %v992
        %v1083 = vunpack.c.l.b16 %v993
        %v1084 = vunpack.c.l.b16 %v994
        %v1085 = vunpack.c.l.b16 %v995
        %v1086 = vunpack.c.l.b16 %v996
        %v1087 = vunpack.c.l.b16 %v997
        %v1088 = vunpack.c.l.b16 %v998
        %v1089 = vunpack.c.l.b16 %v999
        %v1090 = vunpack.c.l.b16 %v1000
        %v1091 = vunpack.c.l.b16 %v1001
        %v1092 = vunpack.c.l.b16 %v1002
        %v1093 = vunpack.c.l.b16 %v1003
        %v1094 = vunpack.c.l.b16 %v1004
        %v1095 = vunpack.c.l.b16 %v1005
        %v1096 = vunpack.c.l.b16 %v1006
        %v1097 = vunpack.c.l.b16 %v1007
        %v1098 = vpack.c.b16 %v1083, %v1082
        %v1099 = vpack.c.b16 %v1085, %v1084
        %v1100 = vpack.c.b16 %v1087, %v1086
        %v1101 = vpack.c.b16 %v1089, %v1088
        %v1102 = vpack.c.b16 %v1091, %v1090
        %v1103 = vpack.c.b16 %v1093, %v1092
        %v1104 = vpack.c.b16 %v1095, %v1094
        %v1105 = vpack.c.b16 %v1097, %v1096
        %1114 = vmatpush.bf16.msra.mxu0 %v1105
        %1115 = vmatpush.bf16.msra.mxu0 %v1104
        %1116 = vmatpush.bf16.msra.mxu0 %v1103
        %1117 = vmatpush.bf16.msra.mxu0 %v1102
        %1118 = vmatpush.bf16.msra.mxu0 %v1101
        %1119 = vmatpush.bf16.msra.mxu0 %v1100
        %1120 = vmatpush.bf16.msra.mxu0 %v1099
        %1121 = vmatpush.bf16.msra.mxu0 %v1098
        %1122 = vmatmul.bf16.gmra.mxu0 %v1046
        %v1123 = vpop.f32.mrf.mxu0
        %v1124 = vadd.f32 0.0, %v1123
        %v1125 = vpop.f32.mrf.mxu0
        %v1126 = vadd.f32 0.0, %v1125
        %1127 = vmatmul.bf16.gmra.mxu0 %v1047
        %v1128 = vpop.f32.mrf.mxu0
        %v1129 = vadd.f32 0.0, %v1128
        %v1130 = vpop.f32.mrf.mxu0
        %v1131 = vadd.f32 0.0, %v1130
        %1132 = vmatmul.bf16.gmra.mxu0 %v1048
        %v1133 = vpop.f32.mrf.mxu0
        %v1134 = vadd.f32 0.0, %v1133
        %v1135 = vpop.f32.mrf.mxu0
        %v1136 = vadd.f32 0.0, %v1135
        %1137 = vmatmul.bf16.gmra.mxu0 %v1049
        %v1138 = vpop.f32.mrf.mxu0
        %v1139 = vadd.f32 0.0, %v1138
        %v1140 = vpop.f32.mrf.mxu0
        %v1141 = vadd.f32 0.0, %v1140
        %1142 = vmatmul.bf16.gmra.mxu0 %v1050
        %v1143 = vpop.f32.mrf.mxu0
        %v1144 = vadd.f32 0.0, %v1143
        %v1145 = vpop.f32.mrf.mxu0
        %v1146 = vadd.f32 0.0, %v1145
        %1147 = vmatmul.bf16.gmra.mxu0 %v1051
        %v1148 = vpop.f32.mrf.mxu0
        %v1149 = vadd.f32 0.0, %v1148
        %v1150 = vpop.f32.mrf.mxu0
        %v1151 = vadd.f32 0.0, %v1150
        %1152 = vmatmul.bf16.gmra.mxu0 %v1052
        %v1153 = vpop.f32.mrf.mxu0
        %v1154 = vadd.f32 0.0, %v1153
        %v1155 = vpop.f32.mrf.mxu0
        %v1156 = vadd.f32 0.0, %v1155
        %1157 = vmatmul.bf16.gmra.mxu0 %v1053
        %v1158 = vpop.f32.mrf.mxu0
        %v1159 = vadd.f32 0.0, %v1158
        %v1160 = vpop.f32.mrf.mxu0
        %v1161 = vadd.f32 0.0, %v1160
        %1162 = vmatmul.bf16.gmra.mxu0 %v1054
        %v1163 = vpop.f32.mrf.mxu0
        %v1164 = vadd.f32 0.0, %v1163
        %v1165 = vpop.f32.mrf.mxu0
        %v1166 = vadd.f32 0.0, %v1165
        %1167 = vmatmul.bf16.gmra.mxu0 %v1055
        %v1168 = vpop.f32.mrf.mxu0
        %v1169 = vadd.f32 0.0, %v1168
        %v1170 = vpop.f32.mrf.mxu0
        %1171 = vdwg.mxu0
        %v1172 = vadd.f32 %v925, %v1124
        %v1173 = vadd.f32 %v927, %v1126
        %v1174 = vadd.f32 %v930, %v1129
        %v1175 = vadd.f32 %v932, %v1131
        %v1176 = vadd.f32 %v935, %v1134
        %v1177 = vadd.f32 %v937, %v1136
        %v1178 = vadd.f32 %v940, %v1139
        %v1179 = vadd.f32 %v942, %v1141
        %v1180 = vadd.f32 %v945, %v1144
        %v1181 = vadd.f32 %v947, %v1146
        %v1182 = vadd.f32 %v950, %v1149
        %v1183 = vadd.f32 %v952, %v1151
        %v1184 = vadd.f32 %v955, %v1154
        %v1185 = vadd.f32 %v957, %v1156
        %v1186 = vadd.f32 %v960, %v1159
        %v1187 = vadd.f32 %v962, %v1161
        %v1188 = vadd.f32 %v965, %v1164
        %v1189 = vadd.f32 %v967, %v1166
        %v1190 = vadd.f32 %v970, %v1169
        %v1191 = vld [vmem:[%s6] sm:$0x1]
        %v1192 = vunpack.c.l.bf16 %v1191
        %v1193 = vperm.slane %v1192, 0
        %v1194 = vadd.f32 %v1172, %v1193
        %v1195 = vadd.f32 %v1173, %v1193
        %v1196 = vadd.f32 %v1174, %v1193
        %v1197 = vadd.f32 %v1175, %v1193
        %v1198 = vadd.f32 %v1176, %v1193
        %v1199 = vadd.f32 %v1177, %v1193
        %v1200 = vadd.f32 %v1178, %v1193
        %v1201 = vadd.f32 %v1179, %v1193
        %v1202 = vadd.f32 %v1180, %v1193
        %v1203 = vadd.f32 %v1181, %v1193
        %v1204 = vadd.f32 %v1182, %v1193
        %v1205 = vadd.f32 %v1183, %v1193
        %v1206 = vadd.f32 %v1184, %v1193
        %v1207 = vadd.f32 %v1185, %v1193
        %v1208 = vadd.f32 %v1186, %v1193
        %v1209 = vadd.f32 %v1187, %v1193
        %v1210 = vadd.f32 %v1188, %v1193
        %v1211 = vadd.f32 %v1189, %v1193
        %v1212 = vadd.f32 %v1190, %v1193
        %v1213 = vmax.f32 %v1194, 0.0
        %v1214 = vmax.f32 %v1195, 0.0
        %v1215 = vmax.f32 %v1196, 0.0
        %v1216 = vmax.f32 %v1197, 0.0
        %v1217 = vmax.f32 %v1198, 0.0
        %v1218 = vmax.f32 %v1199, 0.0
        %v1219 = vmax.f32 %v1200, 0.0
        %v1220 = vmax.f32 %v1201, 0.0
        %v1221 = vmax.f32 %v1202, 0.0
        %v1222 = vmax.f32 %v1203, 0.0
        %v1223 = vmax.f32 %v1204, 0.0
        %v1224 = vmax.f32 %v1205, 0.0
        %v1225 = vmax.f32 %v1206, 0.0
        %v1226 = vmax.f32 %v1207, 0.0
        %v1227 = vmax.f32 %v1208, 0.0
        %v1228 = vmax.f32 %v1209, 0.0
        %v1229 = vmax.f32 %v1210, 0.0
        %v1230 = vmax.f32 %v1211, 0.0
        %v1231 = vmax.f32 %v1212, 0.0
        %v1232 = vpack.c.bf16 %v1214, %v1213
        %v1233 = vpack.c.bf16 %v1216, %v1215
        %v1234 = vpack.c.bf16 %v1218, %v1217
        %v1235 = vpack.c.bf16 %v1220, %v1219
        %v1236 = vpack.c.bf16 %v1222, %v1221
        %v1237 = vpack.c.bf16 %v1224, %v1223
        %v1238 = vpack.c.bf16 %v1226, %v1225
        %v1239 = vpack.c.bf16 %v1228, %v1227
        %v1240 = vpack.c.bf16 %v1230, %v1229
        %v1241 = vpack.c.bf16 %v1231, %v1231
        %v1242 = vld [vmem:[#allocation13] sm:$0xf]
        %v1243 = vld [vmem:[#allocation13 + $0x4] sm:$0xf]
        %v1244 = vld [vmem:[#allocation13 + $0x8] sm:$0xf]
        %v1245 = vld [vmem:[#allocation13 + $0xc] sm:$0xf]
        %v1246 = vld [vmem:[#allocation13 + $0x10] sm:$0xf]
        %v1247 = vld [vmem:[#allocation13 + $0x14] sm:$0xf]
        %v1248 = vld [vmem:[#allocation13 + $0x18] sm:$0xf]
        %v1249 = vld [vmem:[#allocation13 + $0x1c] sm:$0xf]
        %v1250 = vld [vmem:[#allocation13 + $0x20] sm:$0xf]
        %v1251 = vld [vmem:[#allocation13 + $0x24] sm:$0xf]
        %v1252 = vld [vmem:[#allocation13 + $0x28] sm:$0xf]
        %v1253 = vld [vmem:[#allocation13 + $0x2c] sm:$0xf]
        %v1254 = vld [vmem:[#allocation13 + $0x30] sm:$0xf]
        %v1255 = vld [vmem:[#allocation13 + $0x34] sm:$0xf]
        %v1256 = vld [vmem:[#allocation13 + $0x38] sm:$0xf]
        %v1257 = vld [vmem:[#allocation13 + $0x3c] sm:$0xf]
        %v1258 = vld [vmem:[%s8] sm:$0x1]
        %v1259 = vunpack.c.l.bf16 %v1258
        %v1260 = vperm.slane %v1259, 0
        %v1277 = vunpack.c.l.b16 %v1242
        %v1278 = vunpack.c.l.b16 %v1243
        %v1279 = vunpack.c.l.b16 %v1244
        %v1280 = vunpack.c.l.b16 %v1245
        %v1281 = vunpack.c.l.b16 %v1246
        %v1282 = vunpack.c.l.b16 %v1247
        %v1283 = vunpack.c.l.b16 %v1248
        %v1284 = vunpack.c.l.b16 %v1249
        %v1285 = vunpack.c.l.b16 %v1250
        %v1286 = vunpack.c.l.b16 %v1251
        %v1287 = vunpack.c.l.b16 %v1252
        %v1288 = vunpack.c.l.b16 %v1253
        %v1289 = vunpack.c.l.b16 %v1254
        %v1290 = vunpack.c.l.b16 %v1255
        %v1291 = vunpack.c.l.b16 %v1256
        %v1292 = vunpack.c.l.b16 %v1257
        %v1293 = vpack.c.b16 %v1278, %v1277
        %v1294 = vpack.c.b16 %v1280, %v1279
        %v1295 = vpack.c.b16 %v1282, %v1281
        %v1296 = vpack.c.b16 %v1284, %v1283
        %v1297 = vpack.c.b16 %v1286, %v1285
        %v1298 = vpack.c.b16 %v1288, %v1287
        %v1299 = vpack.c.b16 %v1290, %v1289
        %v1300 = vpack.c.b16 %v1292, %v1291
        %1309 = vmatpush.bf16.msra.mxu0 %v1300
        %1310 = vmatpush.bf16.msra.mxu0 %v1299
        %1311 = vmatpush.bf16.msra.mxu0 %v1298
        %1312 = vmatpush.bf16.msra.mxu0 %v1297
        %1313 = vmatpush.bf16.msra.mxu0 %v1296
        %1314 = vmatpush.bf16.msra.mxu0 %v1295
        %1315 = vmatpush.bf16.msra.mxu0 %v1294
        %1316 = vmatpush.bf16.msra.mxu0 %v1293
        %1317 = vmatmul.bf16.gmra.mxu0 %v1232
        %v1318 = vpop.f32.mrf.mxu0
        %v1319 = vadd.f32 %v1260, %v1318
        %v1320 = vpop.f32.mrf.mxu0
        %v1321 = vadd.f32 %v1260, %v1320
        %1322 = vmatmul.bf16.gmra.mxu0 %v1233
        %v1323 = vpop.f32.mrf.mxu0
        %v1324 = vadd.f32 %v1260, %v1323
        %v1325 = vpop.f32.mrf.mxu0
        %v1326 = vadd.f32 %v1260, %v1325
        %1327 = vmatmul.bf16.gmra.mxu0 %v1234
        %v1328 = vpop.f32.mrf.mxu0
        %v1329 = vadd.f32 %v1260, %v1328
        %v1330 = vpop.f32.mrf.mxu0
        %v1331 = vadd.f32 %v1260, %v1330
        %1332 = vmatmul.bf16.gmra.mxu0 %v1235
        %v1333 = vpop.f32.mrf.mxu0
        %v1334 = vadd.f32 %v1260, %v1333
        %v1335 = vpop.f32.mrf.mxu0
        %v1336 = vadd.f32 %v1260, %v1335
        %1337 = vmatmul.bf16.gmra.mxu0 %v1236
        %v1338 = vpop.f32.mrf.mxu0
        %v1339 = vadd.f32 %v1260, %v1338
        %v1340 = vpop.f32.mrf.mxu0
        %v1341 = vadd.f32 %v1260, %v1340
        %1342 = vmatmul.bf16.gmra.mxu0 %v1237
        %v1343 = vpop.f32.mrf.mxu0
        %v1344 = vadd.f32 %v1260, %v1343
        %v1345 = vpop.f32.mrf.mxu0
        %v1346 = vadd.f32 %v1260, %v1345
        %1347 = vmatmul.bf16.gmra.mxu0 %v1238
        %v1348 = vpop.f32.mrf.mxu0
        %v1349 = vadd.f32 %v1260, %v1348
        %v1350 = vpop.f32.mrf.mxu0
        %v1351 = vadd.f32 %v1260, %v1350
        %1352 = vmatmul.bf16.gmra.mxu0 %v1239
        %v1353 = vpop.f32.mrf.mxu0
        %v1354 = vadd.f32 %v1260, %v1353
        %v1355 = vpop.f32.mrf.mxu0
        %v1356 = vadd.f32 %v1260, %v1355
        %1357 = vmatmul.bf16.gmra.mxu0 %v1240
        %v1358 = vpop.f32.mrf.mxu0
        %v1359 = vadd.f32 %v1260, %v1358
        %v1360 = vpop.f32.mrf.mxu0
        %v1361 = vadd.f32 %v1260, %v1360
        %1362 = vmatmul.bf16.gmra.mxu0 %v1241
        %v1363 = vpop.f32.mrf.mxu0
        %v1364 = vadd.f32 %v1260, %v1363
        %v1365 = vpop.f32.mrf.mxu0
        %1366 = vdwg.mxu0
        %v1367 = vmax.f32 %v1319, 0.0
        %v1368 = vmax.f32 %v1321, 0.0
        %v1369 = vmax.f32 %v1324, 0.0
        %v1370 = vmax.f32 %v1326, 0.0
        %v1371 = vmax.f32 %v1329, 0.0
        %v1372 = vmax.f32 %v1331, 0.0
        %v1373 = vmax.f32 %v1334, 0.0
        %v1374 = vmax.f32 %v1336, 0.0
        %v1375 = vmax.f32 %v1339, 0.0
        %v1376 = vmax.f32 %v1341, 0.0
        %v1377 = vmax.f32 %v1344, 0.0
        %v1378 = vmax.f32 %v1346, 0.0
        %v1379 = vmax.f32 %v1349, 0.0
        %v1380 = vmax.f32 %v1351, 0.0
        %v1381 = vmax.f32 %v1354, 0.0
        %v1382 = vmax.f32 %v1356, 0.0
        %v1383 = vmax.f32 %v1359, 0.0
        %v1384 = vmax.f32 %v1361, 0.0
        %v1385 = vmax.f32 %v1364, 0.0
        %v1386 = vpack.c.bf16 %v1368, %v1367
        %v1387 = vpack.c.bf16 %v1370, %v1369
        %v1388 = vpack.c.bf16 %v1372, %v1371
        %v1389 = vpack.c.bf16 %v1374, %v1373
        %v1390 = vpack.c.bf16 %v1376, %v1375
        %v1391 = vpack.c.bf16 %v1378, %v1377
        %v1392 = vpack.c.bf16 %v1380, %v1379
        %v1393 = vpack.c.bf16 %v1382, %v1381
        %v1394 = vpack.c.bf16 %v1384, %v1383
        %v1395 = vpack.c.bf16 %v1385, %v1385
        %v1396 = vld [vmem:[#allocation14] sm:$0xf]
        %v1397 = vld [vmem:[#allocation14 + $0x4] sm:$0xf]
        %v1398 = vld [vmem:[#allocation14 + $0x8] sm:$0xf]
        %v1399 = vld [vmem:[#allocation14 + $0xc] sm:$0xf]
        %v1400 = vld [vmem:[#allocation14 + $0x10] sm:$0xf]
        %v1401 = vld [vmem:[#allocation14 + $0x14] sm:$0xf]
        %v1402 = vld [vmem:[#allocation14 + $0x18] sm:$0xf]
        %v1403 = vld [vmem:[#allocation14 + $0x1c] sm:$0xf]
        %v1404 = vld [vmem:[#allocation14 + $0x20] sm:$0xf]
        %v1405 = vld [vmem:[#allocation14 + $0x24] sm:$0xf]
        %v1406 = vld [vmem:[#allocation14 + $0x28] sm:$0xf]
        %v1407 = vld [vmem:[#allocation14 + $0x2c] sm:$0xf]
        %v1408 = vld [vmem:[#allocation14 + $0x30] sm:$0xf]
        %v1409 = vld [vmem:[#allocation14 + $0x34] sm:$0xf]
        %v1410 = vld [vmem:[#allocation14 + $0x38] sm:$0xf]
        %v1411 = vld [vmem:[#allocation14 + $0x3c] sm:$0xf]
        %v1412 = vld [vmem:[%s10] sm:$0x1]
        %v1413 = vunpack.c.l.bf16 %v1412
        %v1414 = vperm.slane %v1413, 0
        %v1431 = vunpack.c.l.b16 %v1396
        %v1432 = vunpack.c.l.b16 %v1397
        %v1433 = vunpack.c.l.b16 %v1398
        %v1434 = vunpack.c.l.b16 %v1399
        %v1435 = vunpack.c.l.b16 %v1400
        %v1436 = vunpack.c.l.b16 %v1401
        %v1437 = vunpack.c.l.b16 %v1402
        %v1438 = vunpack.c.l.b16 %v1403
        %v1439 = vunpack.c.l.b16 %v1404
        %v1440 = vunpack.c.l.b16 %v1405
        %v1441 = vunpack.c.l.b16 %v1406
        %v1442 = vunpack.c.l.b16 %v1407
        %v1443 = vunpack.c.l.b16 %v1408
        %v1444 = vunpack.c.l.b16 %v1409
        %v1445 = vunpack.c.l.b16 %v1410
        %v1446 = vunpack.c.l.b16 %v1411
        %v1447 = vpack.c.b16 %v1432, %v1431
        %v1448 = vpack.c.b16 %v1434, %v1433
        %v1449 = vpack.c.b16 %v1436, %v1435
        %v1450 = vpack.c.b16 %v1438, %v1437
        %v1451 = vpack.c.b16 %v1440, %v1439
        %v1452 = vpack.c.b16 %v1442, %v1441
        %v1453 = vpack.c.b16 %v1444, %v1443
        %v1454 = vpack.c.b16 %v1446, %v1445
        %1463 = vmatpush.bf16.msra.mxu0 %v1454
        %1464 = vmatpush.bf16.msra.mxu0 %v1453
        %1465 = vmatpush.bf16.msra.mxu0 %v1452
        %1466 = vmatpush.bf16.msra.mxu0 %v1451
        %1467 = vmatpush.bf16.msra.mxu0 %v1450
        %1468 = vmatpush.bf16.msra.mxu0 %v1449
        %1469 = vmatpush.bf16.msra.mxu0 %v1448
        %1470 = vmatpush.bf16.msra.mxu0 %v1447
        %1471 = vmatmul.bf16.gmra.mxu0 %v1386
        %v1472 = vpop.f32.mrf.mxu0
        %v1473 = vadd.f32 %v1414, %v1472
        %v1474 = vpop.f32.mrf.mxu0
        %v1475 = vadd.f32 %v1414, %v1474
        %1476 = vmatmul.bf16.gmra.mxu0 %v1387
        %v1477 = vpop.f32.mrf.mxu0
        %v1478 = vadd.f32 %v1414, %v1477
        %v1479 = vpop.f32.mrf.mxu0
        %v1480 = vadd.f32 %v1414, %v1479
        %1481 = vmatmul.bf16.gmra.mxu0 %v1388
        %v1482 = vpop.f32.mrf.mxu0
        %v1483 = vadd.f32 %v1414, %v1482
        %v1484 = vpop.f32.mrf.mxu0
        %v1485 = vadd.f32 %v1414, %v1484
        %1486 = vmatmul.bf16.gmra.mxu0 %v1389
        %v1487 = vpop.f32.mrf.mxu0
        %v1488 = vadd.f32 %v1414, %v1487
        %v1489 = vpop.f32.mrf.mxu0
        %v1490 = vadd.f32 %v1414, %v1489
        %1491 = vmatmul.bf16.gmra.mxu0 %v1390
        %v1492 = vpop.f32.mrf.mxu0
        %v1493 = vadd.f32 %v1414, %v1492
        %v1494 = vpop.f32.mrf.mxu0
        %v1495 = vadd.f32 %v1414, %v1494
        %1496 = vmatmul.bf16.gmra.mxu0 %v1391
        %v1497 = vpop.f32.mrf.mxu0
        %v1498 = vadd.f32 %v1414, %v1497
        %v1499 = vpop.f32.mrf.mxu0
        %v1500 = vadd.f32 %v1414, %v1499
        %1501 = vmatmul.bf16.gmra.mxu0 %v1392
        %v1502 = vpop.f32.mrf.mxu0
        %v1503 = vadd.f32 %v1414, %v1502
        %v1504 = vpop.f32.mrf.mxu0
        %v1505 = vadd.f32 %v1414, %v1504
        %1506 = vmatmul.bf16.gmra.mxu0 %v1393
        %v1507 = vpop.f32.mrf.mxu0
        %v1508 = vadd.f32 %v1414, %v1507
        %v1509 = vpop.f32.mrf.mxu0
        %v1510 = vadd.f32 %v1414, %v1509
        %1511 = vmatmul.bf16.gmra.mxu0 %v1394
        %v1512 = vpop.f32.mrf.mxu0
        %v1513 = vadd.f32 %v1414, %v1512
        %v1514 = vpop.f32.mrf.mxu0
        %v1515 = vadd.f32 %v1414, %v1514
        %1516 = vmatmul.bf16.gmra.mxu0 %v1395
        %v1517 = vpop.f32.mrf.mxu0
        %v1518 = vadd.f32 %v1414, %v1517
        %v1519 = vpop.f32.mrf.mxu0
        %1520 = vdwg.mxu0
        %v1521 = vpack.c.bf16 %v1473, %v1473
        %v1522 = vpack.c.bf16 %v1475, %v1475
        %v1523 = vpack.c.bf16 %v1478, %v1478
        %v1524 = vpack.c.bf16 %v1480, %v1480
        %v1525 = vpack.c.bf16 %v1483, %v1483
        %v1526 = vpack.c.bf16 %v1485, %v1485
        %v1527 = vpack.c.bf16 %v1488, %v1488
        %v1528 = vpack.c.bf16 %v1490, %v1490
        %v1529 = vpack.c.bf16 %v1493, %v1493
        %v1530 = vpack.c.bf16 %v1495, %v1495
        %v1531 = vpack.c.bf16 %v1498, %v1498
        %v1532 = vpack.c.bf16 %v1500, %v1500
        %v1533 = vpack.c.bf16 %v1503, %v1503
        %v1534 = vpack.c.bf16 %v1505, %v1505
        %v1535 = vpack.c.bf16 %v1508, %v1508
        %v1536 = vpack.c.bf16 %v1510, %v1510
        %v1537 = vpack.c.bf16 %v1513, %v1513
        %v1538 = vpack.c.bf16 %v1515, %v1515
        %v1539 = vpack.c.bf16 %v1518, %v1518
        %1540 = vst [vmem:[%s570] sm:$0xf] %v1521
        %1541 = vst [vmem:[%s570 + $0x4] sm:$0xf] %v1522
        %1542 = vst [vmem:[%s570 + $0x8] sm:$0xf] %v1523
        %1543 = vst [vmem:[%s570 + $0xc] sm:$0xf] %v1524
        %1544 = vst [vmem:[%s570 + $0x10] sm:$0xf] %v1525
        %1545 = vst [vmem:[%s570 + $0x14] sm:$0xf] %v1526
        %1546 = vst [vmem:[%s570 + $0x18] sm:$0xf] %v1527
        %1547 = vst [vmem:[%s570 + $0x1c] sm:$0xf] %v1528
        %1548 = vst [vmem:[%s570 + $0x20] sm:$0xf] %v1529
        %1549 = vst [vmem:[%s570 + $0x24] sm:$0xf] %v1530
        %1550 = vst [vmem:[%s570 + $0x28] sm:$0xf] %v1531
        %1551 = vst [vmem:[%s570 + $0x2c] sm:$0xf] %v1532
        %1552 = vst [vmem:[%s570 + $0x30] sm:$0xf] %v1533
        %1553 = vst [vmem:[%s570 + $0x34] sm:$0xf] %v1534
        %1554 = vst [vmem:[%s570 + $0x38] sm:$0xf] %v1535
        %1555 = vst [vmem:[%s570 + $0x3c] sm:$0xf] %v1536
        %1556 = vst [vmem:[%s570 + $0x40] sm:$0xf] %v1537
        %1557 = vst [vmem:[%s570 + $0x44] sm:$0xf] %v1538
        %1558 = vst [vmem:[%s570 + $0x48] sm:$0xf] %v1539
        %s1559 = sand.u32 %s288, 1
        %s1560 = scalar_lea.sflag [#allocation4], %s1559
        %s1561 = sand.u32 %s288, 1
        %s1562 = smul.addr %s1561, 76
        %s1563 = scalar_lea.vmem [#allocation16], %s1562
        // Predicated region
        $region97: #{tpu_custom_call.1} parent=63 // pred_check
          %p1564 = pneg %p298
        $region98: #{tpu_custom_call.1} parent=63 // pred_check_branch
          %1566 = sbr.rel (%p1564) target = $region100
        $region99: #{tpu_custom_call.1} parent=63 // pred_region
          %s1567 = smul.u32 19, %s34
          %1569 = vsyncadd %s1560, 0
          %s1570 = smul.addr %s1567, 4
          %s1571 = scalar_lea.hbm %s11, %s1570
          %s1572 = sshll.u32 %s1563, 4
          %s1573 = int_to_ptr.vmem [resolvable:$true] %s1572
          %s1574 = sshll.u32 %s1571, 4
          %s1575 = int_to_ptr.hbm [resolvable:$true] %s1574
          %1580 = dma.vmem_to_hbm [thread:$0]  %s1573, 1216, %s1575, %s1560, 64, 64, 4
        $region100: #{tpu_custom_call.1} parent=63 // pred_fallthru
          _
      $region64: #{tpu_custom_call.1} parent=5 // pred_fallthru
        _
      %p1581 = scmp.le.s32.totalorder 2, %s29
      // Predicated region
      $region101: #{tpu_custom_call.1} parent=5 // pred_check
        %p1582 = pneg %p1581
      $region102: #{tpu_custom_call.1} parent=5 // pred_check_branch
        %1584 = sbr.rel (%p1582) target = $region104
      $region103: #{tpu_custom_call.1} parent=5 // pred_region
        %s1585 = ssub.s32 %s29, 2
        // Predicated region
        $region105: #{tpu_custom_call.1} parent=103 // pred_check
          %p1586 = pneg %p304
        $region106: #{tpu_custom_call.1} parent=103 // pred_check_branch
          %1588 = sbr.rel (%p1586) target = $region108
        $region107: #{tpu_custom_call.1} parent=103 // pred_region
          %s1589 = sand.u32 %s289, 1
          %s1590 = scalar_lea.sflag [#allocation4], %s1589
          %s1591 = sand.u32 %s289, 1
          %s1592 = smul.addr %s1591, 76
          %s1593 = scalar_lea.vmem [#allocation16], %s1592
          %1595 = dma.done %s1590, 1216
        $region108: #{tpu_custom_call.1} parent=103 // pred_fallthru
          _
      $region104: #{tpu_custom_call.1} parent=5 // pred_fallthru
        _
    $region6: #{tpu_custom_call.1} parent=1 // loop_footer
      %s33 = sadd.s32 1, %s29
    $region7: #{tpu_custom_call.1} parent=1 // loop_footer_branch
      %28 = sbr.rel target = $region3
    $region8: #{tpu_custom_call.1} parent=1 // loop_exit
      _
    %1596 = vsyncpa [#allocation3], 1
    %s1597 = scalar_lea.sflag [#allocation3], 1
    %1598 = vsyncpa %s1597, 1
    %1599 = vsyncpa [#allocation6], 1
    %s1600 = scalar_lea.sflag [#allocation6], 1
    %1601 = vsyncpa %s1600, 1
    %1602 = vsyncpa [#allocation9], 1
    %1603 = vsyncpa [#allocation12], 1
    %1604 = vsyncpa [#allocation15], 1
    %1605 = vsyncpa [#allocation4], 1
    %s1606 = scalar_lea.sflag [#allocation4], 1
    %1607 = vsyncpa %s1606, 1

</llo_original>
